<compile_context>
chip_gen: v7x
topology: tpu7x:2x2x1
jax: 0.10.0
libtpu: 0.0.40
codegen_flags: <defaults>
</compile_context>

<pallas_src>
import functools

import jax
import jax.numpy as jnp
from jax.experimental import pallas as pl
from jax.experimental.pallas import tpu as pltpu

# --- small, module-consistent config (scaled down from n_embd=384/block_size=256) ---
BATCH = 2
SEQ = 64          # T  (<= block_size in the original module)
N_EMBD = 128      # C
NUM_HEADS = 4
HEAD_SIZE = N_EMBD // NUM_HEADS   # 32 ; num_heads * head_size == n_embd (required by proj)


def mha_kernel(x_ref, wqkv_ref, wproj_ref, bproj_ref, o_ref, *, num_heads, head_size):
    H = num_heads
    x = x_ref[0]                                   # (T, C) bf16
    T, C = x.shape

    # ---- fused, head-major Q/K/V projection (batched over 3H on the MXU) -------
    # (3H, T, C) @ (3H, C, hs) -> (3H, T, hs), f32 accumulation.
    xb = jnp.broadcast_to(x[None, :, :], (3 * H, T, C))
    qkv = jnp.einsum("htc,hcd->htd", xb, wqkv_ref[...],
                     preferred_element_type=jnp.float32)       # (3H, T, hs) f32
    qkv_bf = qkv.astype(jnp.bfloat16)
    q = qkv_bf[0 * H:1 * H]                        # (H, T, hs) — leading-dim slices,
    k = qkv_bf[1 * H:2 * H]                        # no lane-level relayout
    v = qkv_bf[2 * H:3 * H]

    # ---- batched causal attention over heads ------------------------------------
    # NOTE: the PyTorch Head scales by C**-0.5 with C = n_embd (not head_size).
    scale = jnp.float32(C) ** jnp.float32(-0.5)
    s = jnp.einsum("hqd,hkd->hqk", q, k,
                   preferred_element_type=jnp.float32) * scale  # (H, T, T) f32

    row = jax.lax.broadcasted_iota(jnp.int32, (T, T), 0)
    col = jax.lax.broadcasted_iota(jnp.int32, (T, T), 1)
    causal = row >= col
    # Large finite negative (exp -> exactly 0); diagonal guarantees >=1 live entry/row.
    s = jnp.where(causal, s, jnp.float32(-1e30))

    m = jnp.max(s, axis=-1, keepdims=True)
    p = jnp.exp(s - m)
    l = jnp.sum(p, axis=-1, keepdims=True)
    p = p * pl.reciprocal(l, approx=True)

    heads = jnp.einsum("hqk,hkd->hqd", p.astype(jnp.bfloat16), v,
                       preferred_element_type=jnp.float32)      # (H, T, hs) f32
    heads_bf = heads.astype(jnp.bfloat16)

    # ---- output projection without concat: out = sum_h head_h @ Wproj[h] + b ---
    out = jnp.broadcast_to(bproj_ref[...].astype(jnp.float32), (T, C))
    for h in range(H):
        out = out + jnp.dot(heads_bf[h], wproj_ref[h],
                            preferred_element_type=jnp.float32)  # (T, C), lane-dense
    o_ref[0] = out.astype(o_ref.dtype)


def multi_head_attention(x, wqkv3, wproj3, bproj, *, num_heads, head_size):
    B, T, C = x.shape
    H, hs = num_heads, head_size
    assert wqkv3.shape == (3 * H, C, hs)
    assert wproj3.shape == (H, hs, C)
    kernel = functools.partial(mha_kernel, num_heads=H, head_size=hs)
    return pl.pallas_call(
        kernel,
        out_shape=jax.ShapeDtypeStruct((B, T, C), jnp.float32),
        grid_spec=pltpu.PrefetchScalarGridSpec(
            num_scalar_prefetch=0,
            grid=(B,),
            in_specs=[
                pl.BlockSpec((1, T, C), lambda b: (b, 0, 0)),        # x (bf16)
                pl.BlockSpec((3 * H, C, hs), lambda b: (0, 0, 0)),   # W_qkv head-major (bf16)
                pl.BlockSpec((H, hs, C), lambda b: (0, 0, 0)),       # W_proj head-major (bf16)
                pl.BlockSpec((1, C), lambda b: (0, 0)),              # b_proj (f32)
            ],
            out_specs=pl.BlockSpec((1, T, C), lambda b: (b, 0, 0)),
        ),
        compiler_params=pltpu.CompilerParams(
            dimension_semantics=("parallel",)),
    )(x.astype(jnp.bfloat16), wqkv3.astype(jnp.bfloat16),
      wproj3.astype(jnp.bfloat16), bproj.astype(jnp.float32))


def reference(x, wqkv3, wproj3, bproj, *, num_heads, head_size):
    """Pure-JAX f32 reference mirroring the PyTorch forward (dropout = identity)."""
    B, T, C = x.shape
    H = num_heads
    xf = x.astype(jnp.float32)
    qkv = jnp.einsum("btc,hcd->bhtd", xf, wqkv3.astype(jnp.float32))   # (B, 3H, T, hs)
    q, k, v = qkv[:, :H], qkv[:, H:2 * H], qkv[:, 2 * H:]
    scale = C ** -0.5
    tril = jnp.tril(jnp.ones((T, T), dtype=bool))
    s = jnp.einsum("bhqd,bhkd->bhqk", q, k) * scale
    s = jnp.where(tril, s, -jnp.inf)
    p = jax.nn.softmax(s, axis=-1)
    heads = jnp.einsum("bhqk,bhkd->bhqd", p, v)                        # (B, H, T, hs)
    out = jnp.einsum("bhtd,hdc->btc", heads, wproj3.astype(jnp.float32)) + bproj
    return out


def init_params(key, n_embd, num_heads, head_size):
    """nn.Linear-style init U(-1/sqrt(fan_in), 1/sqrt(fan_in)); fan_in = n_embd."""
    kq, kk, kv, kp, kb = jax.random.split(key, 5)
    bound = 1.0 / jnp.sqrt(jnp.float32(n_embd))
    # Per-head q/k/v weights in (in, out) = (C, hs) orientation, stacked head-major:
    # rows [0:H) = query heads, [H:2H) = key heads, [2H:3H) = value heads.
    wq = jax.random.uniform(kq, (num_heads, n_embd, head_size), jnp.float32, -bound, bound)
    wk = jax.random.uniform(kk, (num_heads, n_embd, head_size), jnp.float32, -bound, bound)
    wv = jax.random.uniform(kv, (num_heads, n_embd, head_size), jnp.float32, -bound, bound)
    wqkv3 = jnp.concatenate([wq, wk, wv], axis=0)                      # (3H, C, hs)
    # Output projection in (in, out) = (C, C) orientation; wproj3[h] holds the rows
    # that multiply head h, so sum_h head_h @ wproj3[h] == concat(heads) @ wproj.
    wproj = jax.random.uniform(kp, (n_embd, n_embd), jnp.float32, -bound, bound)
    wproj3 = wproj.reshape(num_heads, head_size, n_embd)
    bproj = jax.random.uniform(kb, (1, n_embd), jnp.float32, -bound, bound)
    return wqkv3, wproj3, bproj


if __name__ == "__main__":
    key = jax.random.PRNGKey(0)
    kx, kw = jax.random.split(key)

    x = jax.random.normal(kx, (BATCH, SEQ, N_EMBD), dtype=jnp.float32)
    wqkv3, wproj3, bproj = init_params(kw, N_EMBD, NUM_HEADS, HEAD_SIZE)

    out = multi_head_attention(x, wqkv3, wproj3, bproj,
                               num_heads=NUM_HEADS, head_size=HEAD_SIZE)
    out = jax.block_until_ready(out)

    ref = reference(x, wqkv3, wproj3, bproj, num_heads=NUM_HEADS, head_size=HEAD_SIZE)
    assert out.shape == (BATCH, SEQ, N_EMBD)
    # Tolerance relaxed vs the pure-f32 run because matmul operands are bf16 (f32 accum).
    assert jnp.allclose(out, ref, atol=2e-2, rtol=2e-2), "mismatch vs pure-JAX reference"

    print("KERNEL_OK")
</pallas_src>

<mosaic_0001>
module attributes {stable_mosaic.version = 11 : i64} {
  func.func @mha_kernel(%arg0: i32, %arg1: memref<1x64x128xbf16, #tpu.memory_space<vmem>>, %arg2: memref<12x128x32xbf16, #tpu.memory_space<vmem>>, %arg3: memref<4x32x128xbf16, #tpu.memory_space<vmem>>, %arg4: memref<1x128xf32, #tpu.memory_space<vmem>>, %arg5: memref<1x64x128xf32, #tpu.memory_space<vmem>>) attributes {dimension_semantics = [#tpu.dimension_semantics<parallel>], iteration_bounds = array<i64: 2>, scalar_prefetch = 0 : i64, scratch_operands = 0 : i64, tpu.core_type = #tpu.core_type<tc>, window_params = [{transform_indices = @transform_0, window_bounds = array<i64: 1, 64, 128>}, {pipeline_mode = #tpu.pipeline_mode<synchronous>, transform_indices = @transform_1, window_bounds = array<i64: 12, 128, 32>}, {pipeline_mode = #tpu.pipeline_mode<synchronous>, transform_indices = @transform_2, window_bounds = array<i64: 4, 32, 128>}, {pipeline_mode = #tpu.pipeline_mode<synchronous>, transform_indices = @transform_3, window_bounds = array<i64: 1, 128>}, {transform_indices = @transform_4, window_bounds = array<i64: 1, 64, 128>}]} {
    %c0 = arith.constant 0 : index
    %c0_0 = arith.constant 0 : index
    %c0_1 = arith.constant 0 : index
    %0 = vector.load %arg1[%c0, %c0_0, %c0_1] : memref<1x64x128xbf16, #tpu.memory_space<vmem>>, vector<1x64x128xbf16>
    %1 = vector.shape_cast %0 : vector<1x64x128xbf16> to vector<64x128xbf16>
    %2 = vector.shape_cast %1 : vector<64x128xbf16> to vector<1x64x128xbf16>
    %3 = vector.shape_cast %2 : vector<1x64x128xbf16> to vector<1x64x128xbf16>
    %4 = vector.broadcast %3 : vector<1x64x128xbf16> to vector<12x64x128xbf16>
    %c0_2 = arith.constant 0 : index
    %c0_3 = arith.constant 0 : index
    %c0_4 = arith.constant 0 : index
    %5 = vector.load %arg2[%c0_2, %c0_3, %c0_4] : memref<12x128x32xbf16, #tpu.memory_space<vmem>>, vector<12x128x32xbf16>
    "tpu.trace_start"() <{level = 10 : i32, message = "htc,hcd->htd"}> : () -> ()
    %cst = arith.constant dense<0.000000e+00> : vector<12x64x32xf32>
    %6 = tpu.matmul %4, %5, %cst {dimension_numbers = #tpu.dot_dimension_numbers<[2], [1], [1], [2], [0, 0, 0, 1, 1, 2], [0], [0]>} : vector<12x64x128xbf16>, vector<12x128x32xbf16>, vector<12x64x32xf32> -> vector<12x64x32xf32>
    "tpu.trace_stop"() : () -> ()
    %7 = arith.truncf %6 : vector<12x64x32xf32> to vector<12x64x32xbf16>
    %8 = vector.extract_strided_slice %7 {offsets = [0, 0, 0], sizes = [4, 64, 32], strides = [1, 1, 1]} : vector<12x64x32xbf16> to vector<4x64x32xbf16>
    %9 = vector.extract_strided_slice %7 {offsets = [4, 0, 0], sizes = [4, 64, 32], strides = [1, 1, 1]} : vector<12x64x32xbf16> to vector<4x64x32xbf16>
    %10 = vector.extract_strided_slice %7 {offsets = [8, 0, 0], sizes = [4, 64, 32], strides = [1, 1, 1]} : vector<12x64x32xbf16> to vector<4x64x32xbf16>
    %cst_5 = arith.constant 1.280000e+02 : f32
    %cst_6 = arith.constant -5.000000e-01 : f32
    %11 = math.powf %cst_5, %cst_6 : f32
    "tpu.trace_start"() <{level = 10 : i32, message = "hqd,hkd->hqk"}> : () -> ()
    %cst_7 = arith.constant dense<0.000000e+00> : vector<4x64x64xf32>
    %12 = tpu.matmul %8, %9, %cst_7 {dimension_numbers = #tpu.dot_dimension_numbers<[2], [2], [1], [1], [0, 0, 0, 1, 1, 1], [0], [0]>} : vector<4x64x32xbf16>, vector<4x64x32xbf16>, vector<4x64x64xf32> -> vector<4x64x64xf32>
    "tpu.trace_stop"() : () -> ()
    %13 = vector.broadcast %11 : f32 to vector<4x64x64xf32>
    %14 = arith.mulf %12, %13 : vector<4x64x64xf32>
    %15 = tpu.iota {dimensions = array<i32: 0>} : vector<64x64xi32>
    %16 = tpu.iota {dimensions = array<i32: 1>} : vector<64x64xi32>
    %17 = arith.cmpi sge, %15, %16 : vector<64x64xi32>
    %cst_8 = arith.constant -1.000000e+30 : f32
    %18 = vector.shape_cast %17 : vector<64x64xi1> to vector<1x64x64xi1>
    %19 = vector.broadcast %18 : vector<1x64x64xi1> to vector<4x64x64xi1>
    %20 = vector.broadcast %cst_8 : f32 to vector<4x64x64xf32>
    %21 = arith.select %19, %14, %20 : vector<4x64x64xi1>, vector<4x64x64xf32>
    %cst_9 = arith.constant dense<0xFF800000> : vector<4x64xf32>
    %22 = vector.multi_reduction <maximumf>, %21, %cst_9 [2] : vector<4x64x64xf32> to vector<4x64xf32>
    %23 = vector.shape_cast %22 : vector<4x64xf32> to vector<4x64x1xf32>
    %24 = vector.broadcast %23 : vector<4x64x1xf32> to vector<4x64x64xf32>
    %25 = arith.subf %21, %24 : vector<4x64x64xf32>
    %26 = math.exp %25 : vector<4x64x64xf32>
    %cst_10 = arith.constant dense<0.000000e+00> : vector<4x64xf32>
    %27 = vector.multi_reduction <add>, %26, %cst_10 [2] : vector<4x64x64xf32> to vector<4x64xf32>
    %28 = vector.shape_cast %27 : vector<4x64xf32> to vector<4x64x1xf32>
    %29 = tpu.reciprocal %28 {approx = true} : vector<4x64x1xf32> -> vector<4x64x1xf32>
    %30 = vector.broadcast %29 : vector<4x64x1xf32> to vector<4x64x64xf32>
    %31 = arith.mulf %26, %30 : vector<4x64x64xf32>
    %32 = arith.truncf %31 : vector<4x64x64xf32> to vector<4x64x64xbf16>
    "tpu.trace_start"() <{level = 10 : i32, message = "hqk,hkd->hqd"}> : () -> ()
    %cst_11 = arith.constant dense<0.000000e+00> : vector<4x64x32xf32>
    %33 = tpu.matmul %32, %10, %cst_11 {dimension_numbers = #tpu.dot_dimension_numbers<[2], [1], [1], [2], [0, 0, 0, 1, 1, 2], [0], [0]>} : vector<4x64x64xbf16>, vector<4x64x32xbf16>, vector<4x64x32xf32> -> vector<4x64x32xf32>
    "tpu.trace_stop"() : () -> ()
    %34 = arith.truncf %33 : vector<4x64x32xf32> to vector<4x64x32xbf16>
    %c0_12 = arith.constant 0 : index
    %c0_13 = arith.constant 0 : index
    %35 = vector.load %arg4[%c0_12, %c0_13] : memref<1x128xf32, #tpu.memory_space<vmem>>, vector<1x128xf32>
    %36 = vector.shape_cast %35 : vector<1x128xf32> to vector<1x128xf32>
    %37 = vector.broadcast %36 : vector<1x128xf32> to vector<64x128xf32>
    %38 = vector.extract_strided_slice %34 {offsets = [0, 0, 0], sizes = [1, 64, 32], strides = [1, 1, 1]} : vector<4x64x32xbf16> to vector<1x64x32xbf16>
    %39 = vector.shape_cast %38 : vector<1x64x32xbf16> to vector<64x32xbf16>
    %c0_14 = arith.constant 0 : index
    %c0_15 = arith.constant 0 : index
    %c0_16 = arith.constant 0 : index
    %40 = vector.load %arg3[%c0_14, %c0_15, %c0_16] : memref<4x32x128xbf16, #tpu.memory_space<vmem>>, vector<1x32x128xbf16>
    %41 = vector.shape_cast %40 : vector<1x32x128xbf16> to vector<32x128xbf16>
    %cst_17 = arith.constant dense<0.000000e+00> : vector<64x128xf32>
    %42 = tpu.matmul %39, %41, %cst_17 {dimension_numbers = #tpu.dot_dimension_numbers<[1], [0], [0], [1], [0, 0, 1, 1], [], []>} : vector<64x32xbf16>, vector<32x128xbf16>, vector<64x128xf32> -> vector<64x128xf32>
    %43 = arith.addf %37, %42 : vector<64x128xf32>
    %44 = vector.extract_strided_slice %34 {offsets = [1, 0, 0], sizes = [1, 64, 32], strides = [1, 1, 1]} : vector<4x64x32xbf16> to vector<1x64x32xbf16>
    %45 = vector.shape_cast %44 : vector<1x64x32xbf16> to vector<64x32xbf16>
    %c1 = arith.constant 1 : index
    %c0_18 = arith.constant 0 : index
    %c0_19 = arith.constant 0 : index
    %46 = vector.load %arg3[%c1, %c0_18, %c0_19] : memref<4x32x128xbf16, #tpu.memory_space<vmem>>, vector<1x32x128xbf16>
    %47 = vector.shape_cast %46 : vector<1x32x128xbf16> to vector<32x128xbf16>
    %cst_20 = arith.constant dense<0.000000e+00> : vector<64x128xf32>
    %48 = tpu.matmul %45, %47, %cst_20 {dimension_numbers = #tpu.dot_dimension_numbers<[1], [0], [0], [1], [0, 0, 1, 1], [], []>} : vector<64x32xbf16>, vector<32x128xbf16>, vector<64x128xf32> -> vector<64x128xf32>
    %49 = arith.addf %43, %48 : vector<64x128xf32>
    %50 = vector.extract_strided_slice %34 {offsets = [2, 0, 0], sizes = [1, 64, 32], strides = [1, 1, 1]} : vector<4x64x32xbf16> to vector<1x64x32xbf16>
    %51 = vector.shape_cast %50 : vector<1x64x32xbf16> to vector<64x32xbf16>
    %c2 = arith.constant 2 : index
    %c0_21 = arith.constant 0 : index
    %c0_22 = arith.constant 0 : index
    %52 = vector.load %arg3[%c2, %c0_21, %c0_22] : memref<4x32x128xbf16, #tpu.memory_space<vmem>>, vector<1x32x128xbf16>
    %53 = vector.shape_cast %52 : vector<1x32x128xbf16> to vector<32x128xbf16>
    %cst_23 = arith.constant dense<0.000000e+00> : vector<64x128xf32>
    %54 = tpu.matmul %51, %53, %cst_23 {dimension_numbers = #tpu.dot_dimension_numbers<[1], [0], [0], [1], [0, 0, 1, 1], [], []>} : vector<64x32xbf16>, vector<32x128xbf16>, vector<64x128xf32> -> vector<64x128xf32>
    %55 = arith.addf %49, %54 : vector<64x128xf32>
    %56 = vector.extract_strided_slice %34 {offsets = [3, 0, 0], sizes = [1, 64, 32], strides = [1, 1, 1]} : vector<4x64x32xbf16> to vector<1x64x32xbf16>
    %57 = vector.shape_cast %56 : vector<1x64x32xbf16> to vector<64x32xbf16>
    %c3 = arith.constant 3 : index
    %c0_24 = arith.constant 0 : index
    %c0_25 = arith.constant 0 : index
    %58 = vector.load %arg3[%c3, %c0_24, %c0_25] : memref<4x32x128xbf16, #tpu.memory_space<vmem>>, vector<1x32x128xbf16>
    %59 = vector.shape_cast %58 : vector<1x32x128xbf16> to vector<32x128xbf16>
    %cst_26 = arith.constant dense<0.000000e+00> : vector<64x128xf32>
    %60 = tpu.matmul %57, %59, %cst_26 {dimension_numbers = #tpu.dot_dimension_numbers<[1], [0], [0], [1], [0, 0, 1, 1], [], []>} : vector<64x32xbf16>, vector<32x128xbf16>, vector<64x128xf32> -> vector<64x128xf32>
    %61 = arith.addf %55, %60 : vector<64x128xf32>
    %c0_27 = arith.constant 0 : index
    %c0_28 = arith.constant 0 : index
    %c0_29 = arith.constant 0 : index
    %62 = vector.load %arg5[%c0_27, %c0_28, %c0_29] : memref<1x64x128xf32, #tpu.memory_space<vmem>>, vector<1x64x128xf32>
    %63 = vector.shape_cast %62 : vector<1x64x128xf32> to vector<64x128xf32>
    %64 = vector.shape_cast %61 : vector<64x128xf32> to vector<1x64x128xf32>
    tpu.vector_store %arg5[%c0_27, %c0_28, %c0_29], %64 {strides = array<i32>} : memref<1x64x128xf32, #tpu.memory_space<vmem>>, vector<1x64x128xf32>,
    return
  }
  func.func @transform_0(%arg0: i32) -> (i32, i32, i32) {
    %c0_i32 = arith.constant 0 : i32
    %c0_i32_0 = arith.constant 0 : i32
    %c0_i32_1 = arith.constant 0 : i32
    return %arg0, %c0_i32, %c0_i32_0 : i32, i32, i32
  }
  func.func @transform_1(%arg0: i32) -> (i32, i32, i32) {
    %c0_i32 = arith.constant 0 : i32
    %c0_i32_0 = arith.constant 0 : i32
    %c0_i32_1 = arith.constant 0 : i32
    %c0_i32_2 = arith.constant 0 : i32
    return %c0_i32, %c0_i32_0, %c0_i32_1 : i32, i32, i32
  }
  func.func @transform_2(%arg0: i32) -> (i32, i32, i32) {
    %c0_i32 = arith.constant 0 : i32
    %c0_i32_0 = arith.constant 0 : i32
    %c0_i32_1 = arith.constant 0 : i32
    %c0_i32_2 = arith.constant 0 : i32
    return %c0_i32, %c0_i32_0, %c0_i32_1 : i32, i32, i32
  }
  func.func @transform_3(%arg0: i32) -> (i32, i32) {
    %c0_i32 = arith.constant 0 : i32
    %c0_i32_0 = arith.constant 0 : i32
    %c0_i32_1 = arith.constant 0 : i32
    return %c0_i32, %c0_i32_0 : i32, i32
  }
  func.func @transform_4(%arg0: i32) -> (i32, i32, i32) {
    %c0_i32 = arith.constant 0 : i32
    %c0_i32_0 = arith.constant 0 : i32
    %c0_i32_1 = arith.constant 0 : i32
    return %arg0, %c0_i32, %c0_i32_0 : i32, i32, i32
  }
}

</mosaic_0001>

<llo_original>
// kernel: tpu_custom_call.1
$region0: #{tpu_custom_call.1}
  #allocation0 [shape = 'u32[]', space=smem, size = 0x4, offset = 0x4, fixed_abs, tag = 'smem constant byte address 0x4 - core index']
  #allocation1 [shape = 'u32[144,128]{1,0:T(1,128)}', space=vmem, size = 0x12000, scoped, tag = 'internal scratch']
  %s0 = inlined_call_operand.vmem [shape: bf16[2,64,128], index: 0, kind: input, shape index: {}]
  %s1 = inlined_call_operand.vmem [shape: bf16[12,128,32], index: 1, kind: input, shape index: {}]
  %s2 = inlined_call_operand.vmem [shape: bf16[4,32,128], index: 2, kind: input, shape index: {}]
  %s3 = inlined_call_operand.vmem [shape: f32[1,128], index: 3, kind: input, shape index: {}]
  %s4 = inlined_call_operand.hbm [shape: f32[2,64,128], index: 4, kind: output, shape index: {}]
  %s5 = sld [smem:[#allocation0]]
  $region49: #{tpu_custom_call.1} parent=0
    _
  %s7 = ssub.s32 1, %s5
  %s8 = scalar_select 0, %s7, %s5
  $region1: #{tpu_custom_call.1} parent=0
    #allocation2 [shape = 'u8[65536]{0}', space=vmem, size = 0x10000, scoped, tag = 'output window, operand 0']
    #allocation3 [shape = 's32[2]{0}', space=sflag, size = 0x8, scoped, tag = 'scoped memory for tpu_custom_call.1']
    %9 = vsyncpa [#allocation3], 0
    %s10 = scalar_lea.sflag [#allocation3], 1
    %11 = vsyncpa %s10, 0
    loop: start=0, step=1, limit=4
    $region2: #{tpu_custom_call.1} parent=1 // loop_pre_header
      _
    $region3: #{tpu_custom_call.1} parent=1 // loop_header
      %s13 = sphi 0, %s17
      %p14 = scmp.ge.s32.totalorder %s13, 4
      %s23 = sphi 0, %s25
      %s26 = sphi 0, %s23
      %s27 = sphi 0, %s26
      %s43 = sphi 0, %s27
      %s47 = sphi 0, %s47
      %s49 = sphi 0, %s47
      %s50 = sphi 0, %s49
      %s64 = sphi 0, %s50
      %s68 = sphi 0, %s68
      %s70 = sphi 0, %s68
      %s71 = sphi 0, %s70
      %s85 = sphi 0, %s71
      %s89 = sphi 0, %s89
      %s91 = sphi 0, %s89
      %s92 = sphi 0, %s91
      %s106 = sphi 0, %s92
      %s112 = sphi 0, %s114
      %s115 = sphi 0, %s112
      %s116 = sphi 0, %s115
      %s132 = sphi 0, %s116
    $region4: #{tpu_custom_call.1} parent=1 // loop_header_branch
      %16 = sbr.rel (%p14) target = $region8
    $region5: #{tpu_custom_call.1} parent=1 // loop_body
      %s18 = ssub.s32 %s13, 1
      %s19 = ssub.s32 %s13, 2
      %s20 = sadd.s32 %s13, 1
      %s21 = ssub.s32 %s13, %s20
      %p22 = scmp.eq.s32.totalorder %s21, 0
      %s24 = sadd.s32 %s23, 1
      %s25 = scalar_select %p22, %s23, %s24
      %p28 = pneg %p22
      %p29 = scmp.eq.s32.totalorder %s13, 1
      %p30 = por %p28, %p29
      %p31 = scmp.ne.s32.totalorder %s23, %s26
      %p32 = scmp.eq.s32.totalorder %s13, 0
      %p33 = por %p31, %p32
      %p34 = scmp.ne.s32.totalorder %s23, %s26
      %p35 = scmp.eq.s32.totalorder %s18, 1
      %p36 = por %p34, %p35
      %p37 = scmp.ne.s32.totalorder %s26, %s27
      %p38 = scmp.eq.s32.totalorder %s18, 0
      %p39 = por %p37, %p38
      %p40 = scmp.ne.s32.totalorder %s26, %s27
      %p41 = scmp.eq.s32.totalorder %s19, 1
      %p42 = por %p40, %p41
      %p44 = scmp.ne.s32.totalorder %s27, %s43
      %p45 = scmp.eq.s32.totalorder %s19, 0
      %p46 = por %p44, %p45
      %s48 = sadd.s32 %s47, 1
      %p51 = scmp.eq.s32.totalorder %s13, 1
      %p52 = scmp.ne.s32.totalorder %s47, %s49
      %p53 = scmp.eq.s32.totalorder %s13, 0
      %p54 = por %p52, %p53
      %p55 = scmp.ne.s32.totalorder %s47, %s49
      %p56 = scmp.eq.s32.totalorder %s18, 1
      %p57 = por %p55, %p56
      %p58 = scmp.ne.s32.totalorder %s49, %s50
      %p59 = scmp.eq.s32.totalorder %s18, 0
      %p60 = por %p58, %p59
      %p61 = scmp.ne.s32.totalorder %s49, %s50
      %p62 = scmp.eq.s32.totalorder %s19, 1
      %p63 = por %p61, %p62
      %p65 = scmp.ne.s32.totalorder %s50, %s64
      %p66 = scmp.eq.s32.totalorder %s19, 0
      %p67 = por %p65, %p66
      %s69 = sadd.s32 %s68, 1
      %p72 = scmp.eq.s32.totalorder %s13, 1
      %p73 = scmp.ne.s32.totalorder %s68, %s70
      %p74 = scmp.eq.s32.totalorder %s13, 0
      %p75 = por %p73, %p74
      %p76 = scmp.ne.s32.totalorder %s68, %s70
      %p77 = scmp.eq.s32.totalorder %s18, 1
      %p78 = por %p76, %p77
      %p79 = scmp.ne.s32.totalorder %s70, %s71
      %p80 = scmp.eq.s32.totalorder %s18, 0
      %p81 = por %p79, %p80
      %p82 = scmp.ne.s32.totalorder %s70, %s71
      %p83 = scmp.eq.s32.totalorder %s19, 1
      %p84 = por %p82, %p83
      %p86 = scmp.ne.s32.totalorder %s71, %s85
      %p87 = scmp.eq.s32.totalorder %s19, 0
      %p88 = por %p86, %p87
      %s90 = sadd.s32 %s89, 1
      %p93 = scmp.eq.s32.totalorder %s13, 1
      %p94 = scmp.ne.s32.totalorder %s89, %s91
      %p95 = scmp.eq.s32.totalorder %s13, 0
      %p96 = por %p94, %p95
      %p97 = scmp.ne.s32.totalorder %s89, %s91
      %p98 = scmp.eq.s32.totalorder %s18, 1
      %p99 = por %p97, %p98
      %p100 = scmp.ne.s32.totalorder %s91, %s92
      %p101 = scmp.eq.s32.totalorder %s18, 0
      %p102 = por %p100, %p101
      %p103 = scmp.ne.s32.totalorder %s91, %s92
      %p104 = scmp.eq.s32.totalorder %s19, 1
      %p105 = por %p103, %p104
      %p107 = scmp.ne.s32.totalorder %s92, %s106
      %p108 = scmp.eq.s32.totalorder %s19, 0
      %p109 = por %p107, %p108
      %s110 = ssub.s32 %s13, %s20
      %p111 = scmp.eq.s32.totalorder %s110, 0
      %s113 = sadd.s32 %s112, 1
      %s114 = scalar_select %p111, %s112, %s113
      %p117 = pneg %p111
      %p118 = scmp.eq.s32.totalorder %s13, 1
      %p119 = por %p117, %p118
      %p120 = scmp.ne.s32.totalorder %s112, %s115
      %p121 = scmp.eq.s32.totalorder %s13, 0
      %p122 = por %p120, %p121
      %p123 = scmp.ne.s32.totalorder %s112, %s115
      %p124 = scmp.eq.s32.totalorder %s18, 1
      %p125 = por %p123, %p124
      %p126 = scmp.ne.s32.totalorder %s115, %s116
      %p127 = scmp.eq.s32.totalorder %s18, 0
      %p128 = por %p126, %p127
      %p129 = scmp.ne.s32.totalorder %s115, %s116
      %p130 = scmp.eq.s32.totalorder %s19, 1
      %p131 = por %p129, %p130
      %p133 = scmp.ne.s32.totalorder %s116, %s132
      %p134 = scmp.eq.s32.totalorder %s19, 0
      %p135 = por %p133, %p134
      %p136 = scmp.le.s32.totalorder 1, %s13
      %p137 = scmp.lt.s32.totalorder %s13, 3
      %p138 = pnand %p136, %p137
      %p139 = pneg %p138
      // Predicated region
      $region9: #{tpu_custom_call.1} parent=5 // pred_check
        _
      $region10: #{tpu_custom_call.1} parent=5 // pred_check_branch
        %141 = sbr.rel (%p138) target = $region12
      $region11: #{tpu_custom_call.1} parent=5 // pred_region
        %s142 = ssub.s32 %s13, 1
        // Predicated region
        $region13: #{tpu_custom_call.1} parent=11 // pred_check
          %p143 = pneg %p60
        $region14: #{tpu_custom_call.1} parent=11 // pred_check_branch
          %145 = sbr.rel (%p143) target = $region16
        $region15: #{tpu_custom_call.1} parent=11 // pred_region
          _
        $region16: #{tpu_custom_call.1} parent=11 // pred_fallthru
          _
        // Predicated region
        $region17: #{tpu_custom_call.1} parent=11 // pred_check
          %p146 = pneg %p81
        $region18: #{tpu_custom_call.1} parent=11 // pred_check_branch
          %148 = sbr.rel (%p146) target = $region20
        $region19: #{tpu_custom_call.1} parent=11 // pred_region
          _
        $region20: #{tpu_custom_call.1} parent=11 // pred_fallthru
          _
        // Predicated region
        $region21: #{tpu_custom_call.1} parent=11 // pred_check
          %p149 = pneg %p102
        $region22: #{tpu_custom_call.1} parent=11 // pred_check_branch
          %151 = sbr.rel (%p149) target = $region24
        $region23: #{tpu_custom_call.1} parent=11 // pred_region
          _
        $region24: #{tpu_custom_call.1} parent=11 // pred_fallthru
          _
      $region12: #{tpu_custom_call.1} parent=5 // pred_fallthru
        _
      %p152 = scmp.lt.s32.totalorder %s13, 2
      // Predicated region
      $region25: #{tpu_custom_call.1} parent=5 // pred_check
        %p153 = pneg %p152
      $region26: #{tpu_custom_call.1} parent=5 // pred_check_branch
        %155 = sbr.rel (%p153) target = $region28
      $region27: #{tpu_custom_call.1} parent=5 // pred_region
        // Predicated region
        $region29: #{tpu_custom_call.1} parent=27 // pred_check
          %p156 = pneg %p33
        $region30: #{tpu_custom_call.1} parent=27 // pred_check_branch
          %158 = sbr.rel (%p156) target = $region32
        $region31: #{tpu_custom_call.1} parent=27 // pred_region
          %p159 = scmp.lt.s32.totalorder %s13, 1
          %s160 = scalar_select %p159, %s13, 1
          %s161 = smul.addr %s160, 8
          %s162 = smul.addr %s161, 4
          %s163 = scalar_lea.vmem %s0, %s162
        $region32: #{tpu_custom_call.1} parent=27 // pred_fallthru
          _
      $region28: #{tpu_custom_call.1} parent=5 // pred_fallthru
        _
      %p164 = scmp.le.s32.totalorder 1, %s13
      %p165 = scmp.lt.s32.totalorder %s13, 3
      %p166 = pnand %p164, %p165
      %p167 = pneg %p166
      // Predicated region
      $region33: #{tpu_custom_call.1} parent=5 // pred_check
        _
      $region34: #{tpu_custom_call.1} parent=5 // pred_check_branch
        %169 = sbr.rel (%p166) target = $region36
      $region35: #{tpu_custom_call.1} parent=5 // pred_region
        %s170 = ssub.s32 %s13, 1
        %p171 = scmp.lt.s32.totalorder %s18, 1
        %s172 = scalar_select %p171, %s18, 1
        %s173 = smul.addr %s172, 8
        %s174 = smul.addr %s173, 4
        %s175 = scalar_lea.vmem %s0, %s174
        %p176 = pneg %p39
        %p177 = pneg %p36
        %p178 = pneg %p60
        %p179 = pneg %p57
        %p180 = pneg %p81
        %p181 = pneg %p78
        %p182 = pneg %p102
        %p183 = pneg %p99
        %p184 = pneg %p128
        %p185 = pneg %p125
        %s186 = sand.u32 %s115, 1
        %s187 = scalar_lea.sflag [#allocation3], %s186
        %s188 = sand.u32 %s115, 1
        %s189 = smul.addr %s188, 64
        %s190 = scalar_lea.vmem [#allocation2], %s189
        %p191 = scmp.lt.s32.totalorder %s18, 1
        %s192 = scalar_select %p191, %s18, 1
        %s193 = smul.addr %s192, 8
        %s194 = smul.addr %s193, 4
        %s195 = scalar_lea.vmem %s0, %s194
        %v197 = vld [vmem:[%s195] sm:$0xf]
        %v198 = vld [vmem:[%s195 + $0x4] sm:$0xf]
        %v199 = vld [vmem:[%s195 + $0x8] sm:$0xf]
        %v200 = vld [vmem:[%s195 + $0xc] sm:$0xf]
        %v201 = vld [vmem:[%s195 + $0x10] sm:$0xf]
        %v202 = vld [vmem:[%s195 + $0x14] sm:$0xf]
        %v203 = vld [vmem:[%s195 + $0x18] sm:$0xf]
        %v204 = vld [vmem:[%s195 + $0x1c] sm:$0xf]
        %v205 = vld [vmem:[%s1] sm:$0xf]
        %v206 = vld [vmem:[%s1 + $0x4] sm:$0xf]
        %v207 = vld [vmem:[%s1 + $0x8] sm:$0xf]
        %v208 = vld [vmem:[%s1 + $0xc] sm:$0xf]
        %v209 = vld [vmem:[%s1 + $0x10] sm:$0xf]
        %v210 = vld [vmem:[%s1 + $0x14] sm:$0xf]
        %v211 = vld [vmem:[%s1 + $0x18] sm:$0xf]
        %v212 = vld [vmem:[%s1 + $0x1c] sm:$0xf]
        %v213 = vld [vmem:[%s1 + $0x20] sm:$0xf]
        %v214 = vld [vmem:[%s1 + $0x24] sm:$0xf]
        %v215 = vld [vmem:[%s1 + $0x28] sm:$0xf]
        %v216 = vld [vmem:[%s1 + $0x2c] sm:$0xf]
        %v217 = vld [vmem:[%s1 + $0x30] sm:$0xf]
        %v218 = vld [vmem:[%s1 + $0x34] sm:$0xf]
        %v219 = vld [vmem:[%s1 + $0x38] sm:$0xf]
        %v220 = vld [vmem:[%s1 + $0x3c] sm:$0xf]
        %v221 = vld [vmem:[%s1 + $0x40] sm:$0xf]
        %v222 = vld [vmem:[%s1 + $0x44] sm:$0xf]
        %v223 = vld [vmem:[%s1 + $0x48] sm:$0xf]
        %v224 = vld [vmem:[%s1 + $0x4c] sm:$0xf]
        %v225 = vld [vmem:[%s1 + $0x50] sm:$0xf]
        %v226 = vld [vmem:[%s1 + $0x54] sm:$0xf]
        %v227 = vld [vmem:[%s1 + $0x58] sm:$0xf]
        %v228 = vld [vmem:[%s1 + $0x5c] sm:$0xf]
        %v229 = vld [vmem:[%s1 + $0x60] sm:$0xf]
        %v230 = vld [vmem:[%s1 + $0x64] sm:$0xf]
        %v231 = vld [vmem:[%s1 + $0x68] sm:$0xf]
        %v232 = vld [vmem:[%s1 + $0x6c] sm:$0xf]
        %v233 = vld [vmem:[%s1 + $0x70] sm:$0xf]
        %v234 = vld [vmem:[%s1 + $0x74] sm:$0xf]
        %v235 = vld [vmem:[%s1 + $0x78] sm:$0xf]
        %v236 = vld [vmem:[%s1 + $0x7c] sm:$0xf]
        %v237 = vld [vmem:[%s1 + $0x80] sm:$0xf]
        %v238 = vld [vmem:[%s1 + $0x84] sm:$0xf]
        %v239 = vld [vmem:[%s1 + $0x88] sm:$0xf]
        %v240 = vld [vmem:[%s1 + $0x8c] sm:$0xf]
        %v241 = vld [vmem:[%s1 + $0x90] sm:$0xf]
        %v242 = vld [vmem:[%s1 + $0x94] sm:$0xf]
        %v243 = vld [vmem:[%s1 + $0x98] sm:$0xf]
        %v244 = vld [vmem:[%s1 + $0x9c] sm:$0xf]
        %v245 = vld [vmem:[%s1 + $0xa0] sm:$0xf]
        %v246 = vld [vmem:[%s1 + $0xa4] sm:$0xf]
        %v247 = vld [vmem:[%s1 + $0xa8] sm:$0xf]
        %v248 = vld [vmem:[%s1 + $0xac] sm:$0xf]
        %v249 = vld [vmem:[%s1 + $0xb0] sm:$0xf]
        %v250 = vld [vmem:[%s1 + $0xb4] sm:$0xf]
        %v251 = vld [vmem:[%s1 + $0xb8] sm:$0xf]
        %v252 = vld [vmem:[%s1 + $0xbc] sm:$0xf]
        %v253 = vld [vmem:[%s1 + $0xc0] sm:$0xf]
        %v254 = vld [vmem:[%s1 + $0xc4] sm:$0xf]
        %v255 = vld [vmem:[%s1 + $0xc8] sm:$0xf]
        %v256 = vld [vmem:[%s1 + $0xcc] sm:$0xf]
        %v257 = vld [vmem:[%s1 + $0xd0] sm:$0xf]
        %v258 = vld [vmem:[%s1 + $0xd4] sm:$0xf]
        %v259 = vld [vmem:[%s1 + $0xd8] sm:$0xf]
        %v260 = vld [vmem:[%s1 + $0xdc] sm:$0xf]
        %v261 = vld [vmem:[%s1 + $0xe0] sm:$0xf]
        %v262 = vld [vmem:[%s1 + $0xe4] sm:$0xf]
        %v263 = vld [vmem:[%s1 + $0xe8] sm:$0xf]
        %v264 = vld [vmem:[%s1 + $0xec] sm:$0xf]
        %v265 = vld [vmem:[%s1 + $0xf0] sm:$0xf]
        %v266 = vld [vmem:[%s1 + $0xf4] sm:$0xf]
        %v267 = vld [vmem:[%s1 + $0xf8] sm:$0xf]
        %v268 = vld [vmem:[%s1 + $0xfc] sm:$0xf]
        %v269 = vld [vmem:[%s1 + $0x100] sm:$0xf]
        %v270 = vld [vmem:[%s1 + $0x104] sm:$0xf]
        %v271 = vld [vmem:[%s1 + $0x108] sm:$0xf]
        %v272 = vld [vmem:[%s1 + $0x10c] sm:$0xf]
        %v273 = vld [vmem:[%s1 + $0x110] sm:$0xf]
        %v274 = vld [vmem:[%s1 + $0x114] sm:$0xf]
        %v275 = vld [vmem:[%s1 + $0x118] sm:$0xf]
        %v276 = vld [vmem:[%s1 + $0x11c] sm:$0xf]
        %v277 = vld [vmem:[%s1 + $0x120] sm:$0xf]
        %v278 = vld [vmem:[%s1 + $0x124] sm:$0xf]
        %v279 = vld [vmem:[%s1 + $0x128] sm:$0xf]
        %v280 = vld [vmem:[%s1 + $0x12c] sm:$0xf]
        %v281 = vld [vmem:[%s1 + $0x130] sm:$0xf]
        %v282 = vld [vmem:[%s1 + $0x134] sm:$0xf]
        %v283 = vld [vmem:[%s1 + $0x138] sm:$0xf]
        %v284 = vld [vmem:[%s1 + $0x13c] sm:$0xf]
        %v285 = vld [vmem:[%s1 + $0x140] sm:$0xf]
        %v286 = vld [vmem:[%s1 + $0x144] sm:$0xf]
        %v287 = vld [vmem:[%s1 + $0x148] sm:$0xf]
        %v288 = vld [vmem:[%s1 + $0x14c] sm:$0xf]
        %v289 = vld [vmem:[%s1 + $0x150] sm:$0xf]
        %v290 = vld [vmem:[%s1 + $0x154] sm:$0xf]
        %v291 = vld [vmem:[%s1 + $0x158] sm:$0xf]
        %v292 = vld [vmem:[%s1 + $0x15c] sm:$0xf]
        %v293 = vld [vmem:[%s1 + $0x160] sm:$0xf]
        %v294 = vld [vmem:[%s1 + $0x164] sm:$0xf]
        %v295 = vld [vmem:[%s1 + $0x168] sm:$0xf]
        %v296 = vld [vmem:[%s1 + $0x16c] sm:$0xf]
        %v297 = vld [vmem:[%s1 + $0x170] sm:$0xf]
        %v298 = vld [vmem:[%s1 + $0x174] sm:$0xf]
        %v299 = vld [vmem:[%s1 + $0x178] sm:$0xf]
        %v300 = vld [vmem:[%s1 + $0x17c] sm:$0xf]
        %v301 = vld [vmem:[%s1 + $0x180] sm:$0xf]
        %v302 = vld [vmem:[%s1 + $0x184] sm:$0xf]
        %v303 = vld [vmem:[%s1 + $0x188] sm:$0xf]
        %v304 = vld [vmem:[%s1 + $0x18c] sm:$0xf]
        %v305 = vld [vmem:[%s1 + $0x190] sm:$0xf]
        %v306 = vld [vmem:[%s1 + $0x194] sm:$0xf]
        %v307 = vld [vmem:[%s1 + $0x198] sm:$0xf]
        %v308 = vld [vmem:[%s1 + $0x19c] sm:$0xf]
        %v309 = vld [vmem:[%s1 + $0x1a0] sm:$0xf]
        %v310 = vld [vmem:[%s1 + $0x1a4] sm:$0xf]
        %v311 = vld [vmem:[%s1 + $0x1a8] sm:$0xf]
        %v312 = vld [vmem:[%s1 + $0x1ac] sm:$0xf]
        %v313 = vld [vmem:[%s1 + $0x1b0] sm:$0xf]
        %v314 = vld [vmem:[%s1 + $0x1b4] sm:$0xf]
        %v315 = vld [vmem:[%s1 + $0x1b8] sm:$0xf]
        %v316 = vld [vmem:[%s1 + $0x1bc] sm:$0xf]
        %v317 = vld [vmem:[%s1 + $0x1c0] sm:$0xf]
        %v318 = vld [vmem:[%s1 + $0x1c4] sm:$0xf]
        %v319 = vld [vmem:[%s1 + $0x1c8] sm:$0xf]
        %v320 = vld [vmem:[%s1 + $0x1cc] sm:$0xf]
        %v321 = vld [vmem:[%s1 + $0x1d0] sm:$0xf]
        %v322 = vld [vmem:[%s1 + $0x1d4] sm:$0xf]
        %v323 = vld [vmem:[%s1 + $0x1d8] sm:$0xf]
        %v324 = vld [vmem:[%s1 + $0x1dc] sm:$0xf]
        %v325 = vld [vmem:[%s1 + $0x1e0] sm:$0xf]
        %v326 = vld [vmem:[%s1 + $0x1e4] sm:$0xf]
        %v327 = vld [vmem:[%s1 + $0x1e8] sm:$0xf]
        %v328 = vld [vmem:[%s1 + $0x1ec] sm:$0xf]
        %v329 = vld [vmem:[%s1 + $0x1f0] sm:$0xf]
        %v330 = vld [vmem:[%s1 + $0x1f4] sm:$0xf]
        %v331 = vld [vmem:[%s1 + $0x1f8] sm:$0xf]
        %v332 = vld [vmem:[%s1 + $0x1fc] sm:$0xf]
        %v333 = vld [vmem:[%s1 + $0x200] sm:$0xf]
        %v334 = vld [vmem:[%s1 + $0x204] sm:$0xf]
        %v335 = vld [vmem:[%s1 + $0x208] sm:$0xf]
        %v336 = vld [vmem:[%s1 + $0x20c] sm:$0xf]
        %v337 = vld [vmem:[%s1 + $0x210] sm:$0xf]
        %v338 = vld [vmem:[%s1 + $0x214] sm:$0xf]
        %v339 = vld [vmem:[%s1 + $0x218] sm:$0xf]
        %v340 = vld [vmem:[%s1 + $0x21c] sm:$0xf]
        %v341 = vld [vmem:[%s1 + $0x220] sm:$0xf]
        %v342 = vld [vmem:[%s1 + $0x224] sm:$0xf]
        %v343 = vld [vmem:[%s1 + $0x228] sm:$0xf]
        %v344 = vld [vmem:[%s1 + $0x22c] sm:$0xf]
        %v345 = vld [vmem:[%s1 + $0x230] sm:$0xf]
        %v346 = vld [vmem:[%s1 + $0x234] sm:$0xf]
        %v347 = vld [vmem:[%s1 + $0x238] sm:$0xf]
        %v348 = vld [vmem:[%s1 + $0x23c] sm:$0xf]
        %v349 = vld [vmem:[%s1 + $0x240] sm:$0xf]
        %v350 = vld [vmem:[%s1 + $0x244] sm:$0xf]
        %v351 = vld [vmem:[%s1 + $0x248] sm:$0xf]
        %v352 = vld [vmem:[%s1 + $0x24c] sm:$0xf]
        %v353 = vld [vmem:[%s1 + $0x250] sm:$0xf]
        %v354 = vld [vmem:[%s1 + $0x254] sm:$0xf]
        %v355 = vld [vmem:[%s1 + $0x258] sm:$0xf]
        %v356 = vld [vmem:[%s1 + $0x25c] sm:$0xf]
        %v357 = vld [vmem:[%s1 + $0x260] sm:$0xf]
        %v358 = vld [vmem:[%s1 + $0x264] sm:$0xf]
        %v359 = vld [vmem:[%s1 + $0x268] sm:$0xf]
        %v360 = vld [vmem:[%s1 + $0x26c] sm:$0xf]
        %v361 = vld [vmem:[%s1 + $0x270] sm:$0xf]
        %v362 = vld [vmem:[%s1 + $0x274] sm:$0xf]
        %v363 = vld [vmem:[%s1 + $0x278] sm:$0xf]
        %v364 = vld [vmem:[%s1 + $0x27c] sm:$0xf]
        %v365 = vld [vmem:[%s1 + $0x280] sm:$0xf]
        %v366 = vld [vmem:[%s1 + $0x284] sm:$0xf]
        %v367 = vld [vmem:[%s1 + $0x288] sm:$0xf]
        %v368 = vld [vmem:[%s1 + $0x28c] sm:$0xf]
        %v369 = vld [vmem:[%s1 + $0x290] sm:$0xf]
        %v370 = vld [vmem:[%s1 + $0x294] sm:$0xf]
        %v371 = vld [vmem:[%s1 + $0x298] sm:$0xf]
        %v372 = vld [vmem:[%s1 + $0x29c] sm:$0xf]
        %v373 = vld [vmem:[%s1 + $0x2a0] sm:$0xf]
        %v374 = vld [vmem:[%s1 + $0x2a4] sm:$0xf]
        %v375 = vld [vmem:[%s1 + $0x2a8] sm:$0xf]
        %v376 = vld [vmem:[%s1 + $0x2ac] sm:$0xf]
        %v377 = vld [vmem:[%s1 + $0x2b0] sm:$0xf]
        %v378 = vld [vmem:[%s1 + $0x2b4] sm:$0xf]
        %v379 = vld [vmem:[%s1 + $0x2b8] sm:$0xf]
        %v380 = vld [vmem:[%s1 + $0x2bc] sm:$0xf]
        %v381 = vld [vmem:[%s1 + $0x2c0] sm:$0xf]
        %v382 = vld [vmem:[%s1 + $0x2c4] sm:$0xf]
        %v383 = vld [vmem:[%s1 + $0x2c8] sm:$0xf]
        %v384 = vld [vmem:[%s1 + $0x2cc] sm:$0xf]
        %v385 = vld [vmem:[%s1 + $0x2d0] sm:$0xf]
        %v386 = vld [vmem:[%s1 + $0x2d4] sm:$0xf]
        %v387 = vld [vmem:[%s1 + $0x2d8] sm:$0xf]
        %v388 = vld [vmem:[%s1 + $0x2dc] sm:$0xf]
        %v389 = vld [vmem:[%s1 + $0x2e0] sm:$0xf]
        %v390 = vld [vmem:[%s1 + $0x2e4] sm:$0xf]
        %v391 = vld [vmem:[%s1 + $0x2e8] sm:$0xf]
        %v392 = vld [vmem:[%s1 + $0x2ec] sm:$0xf]
        %v393 = vld [vmem:[%s1 + $0x2f0] sm:$0xf]
        %v394 = vld [vmem:[%s1 + $0x2f4] sm:$0xf]
        %v395 = vld [vmem:[%s1 + $0x2f8] sm:$0xf]
        %v396 = vld [vmem:[%s1 + $0x2fc] sm:$0xf]
        %v405 = vunpack.c.l.b16 %v197
        %v406 = vunpack.c.l.b16 %v198
        %v407 = vunpack.c.l.b16 %v199
        %v408 = vunpack.c.l.b16 %v200
        %v409 = vunpack.c.l.b16 %v201
        %v410 = vunpack.c.l.b16 %v202
        %v411 = vunpack.c.l.b16 %v203
        %v412 = vunpack.c.l.b16 %v204
        %v413 = vpack.c.b16 %v406, %v405
        %v414 = vpack.c.b16 %v408, %v407
        %v415 = vpack.c.b16 %v410, %v409
        %v416 = vpack.c.b16 %v412, %v411
        %v437 = vunpack.c.l.b16 %v205
        %v438 = vunpack.c.l.b16 %v206
        %v439 = vunpack.c.l.b16 %v207
        %v440 = vunpack.c.l.b16 %v208
        %v441 = vunpack.c.l.b16 %v209
        %v442 = vunpack.c.l.b16 %v210
        %v443 = vunpack.c.l.b16 %v211
        %v444 = vunpack.c.l.b16 %v212
        %v445 = vunpack.c.l.b16 %v213
        %v446 = vunpack.c.l.b16 %v214
        %v447 = vunpack.c.l.b16 %v215
        %v448 = vunpack.c.l.b16 %v216
        %v449 = vunpack.c.l.b16 %v217
        %v450 = vunpack.c.l.b16 %v218
        %v451 = vunpack.c.l.b16 %v219
        %v452 = vunpack.c.l.b16 %v220
        %v453 = vpack.c.b16 %v438, %v437
        %v454 = vpack.c.b16 %v440, %v439
        %v455 = vpack.c.b16 %v442, %v441
        %v456 = vpack.c.b16 %v444, %v443
        %v457 = vpack.c.b16 %v446, %v445
        %v458 = vpack.c.b16 %v448, %v447
        %v459 = vpack.c.b16 %v450, %v449
        %v460 = vpack.c.b16 %v452, %v451
        %469 = vmatprep.subr.bf16.mxu0 0
        %470 = vmatpush1.bf16.msra.mxu0 %v453
        %471 = vmatprep.subr.bf16.mxu0 0
        %472 = vmatpush1.bf16.msra.mxu0 %v454
        %473 = vmatprep.subr.bf16.mxu0 0
        %474 = vmatpush1.bf16.msra.mxu0 %v455
        %475 = vmatprep.subr.bf16.mxu0 0
        %476 = vmatpush1.bf16.msra.mxu0 %v456
        %477 = vmatprep.subr.bf16.mxu0 0
        %478 = vmatpush1.bf16.msra.mxu0 %v457
        %479 = vmatprep.subr.bf16.mxu0 0
        %480 = vmatpush1.bf16.msra.mxu0 %v458
        %481 = vmatprep.subr.bf16.mxu0 0
        %482 = vmatpush1.bf16.msra.mxu0 %v459
        %483 = vmatprep.subr.bf16.mxu0 0
        %484 = vmatpush1.bf16.msra.mxu0 %v460
        %485 = vmatprep.subr.bf16.mxu0 0
        %486 = vmatpush1.bf16.msra.mxu0 0
        %487 = vmatprep.subr.bf16.mxu0 0
        %488 = vmatpush1.bf16.msra.mxu0 0
        %489 = vmatprep.subr.bf16.mxu0 0
        %490 = vmatpush1.bf16.msra.mxu0 0
        %491 = vmatprep.subr.bf16.mxu0 0
        %492 = vmatpush1.bf16.msra.mxu0 0
        %493 = vmatprep.subr.bf16.mxu0 0
        %494 = vmatpush1.bf16.msra.mxu0 0
        %495 = vmatprep.subr.bf16.mxu0 0
        %496 = vmatpush1.bf16.msra.mxu0 0
        %497 = vmatprep.subr.bf16.mxu0 0
        %498 = vmatpush1.bf16.msra.mxu0 0
        %499 = vmatprep.subr.bf16.mxu0 0
        %500 = vmatpush1.bf16.msra.mxu0 0
        %501 = vmatprep.mubr.bf16.mxu0 0
        %502 = vmatmul.mubr.bf16.gmra.mrb[0].mxu0 %v413
        %v503 = vpop.f32.mrb[0].mxu0
        %v504 = vadd.f32 0.0, %v503
        %v505 = vpop.f32.mrb[0].mxu0
        %v506 = vpop.f32.mrb[0].mxu0
        %v507 = vadd.f32 0.0, %v506
        %v508 = vpop.f32.mrb[0].mxu0
        %509 = vmatprep.mubr.bf16.mxu0 0
        %510 = vmatmul.mubr.bf16.gmra.mrb[0].mxu0 %v414
        %v511 = vpop.f32.mrb[0].mxu0
        %v512 = vadd.f32 0.0, %v511
        %v513 = vpop.f32.mrb[0].mxu0
        %v514 = vpop.f32.mrb[0].mxu0
        %v515 = vadd.f32 0.0, %v514
        %v516 = vpop.f32.mrb[0].mxu0
        %517 = vmatprep.mubr.bf16.mxu0 0
        %518 = vmatmul.mubr.bf16.gmra.mrb[0].mxu0 %v415
        %v519 = vpop.f32.mrb[0].mxu0
        %v520 = vadd.f32 0.0, %v519
        %v521 = vpop.f32.mrb[0].mxu0
        %v522 = vpop.f32.mrb[0].mxu0
        %v523 = vadd.f32 0.0, %v522
        %v524 = vpop.f32.mrb[0].mxu0
        %525 = vmatprep.mubr.bf16.mxu0 0
        %526 = vmatmul.mubr.bf16.gmra.mrb[0].mxu0 %v416
        %v527 = vpop.f32.mrb[0].mxu0
        %v528 = vadd.f32 0.0, %v527
        %v529 = vpop.f32.mrb[0].mxu0
        %v530 = vpop.f32.mrb[0].mxu0
        %v531 = vadd.f32 0.0, %v530
        %v532 = vpop.f32.mrb[0].mxu0
        %533 = vdwg.mxu0
        %v550 = vunpack.c.l.b16 %v221
        %v551 = vunpack.c.l.b16 %v222
        %v552 = vunpack.c.l.b16 %v223
        %v553 = vunpack.c.l.b16 %v224
        %v554 = vunpack.c.l.b16 %v225
        %v555 = vunpack.c.l.b16 %v226
        %v556 = vunpack.c.l.b16 %v227
        %v557 = vunpack.c.l.b16 %v228
        %v558 = vunpack.c.l.b16 %v229
        %v559 = vunpack.c.l.b16 %v230
        %v560 = vunpack.c.l.b16 %v231
        %v561 = vunpack.c.l.b16 %v232
        %v562 = vunpack.c.l.b16 %v233
        %v563 = vunpack.c.l.b16 %v234
        %v564 = vunpack.c.l.b16 %v235
        %v565 = vunpack.c.l.b16 %v236
        %v566 = vpack.c.b16 %v551, %v550
        %v567 = vpack.c.b16 %v553, %v552
        %v568 = vpack.c.b16 %v555, %v554
        %v569 = vpack.c.b16 %v557, %v556
        %v570 = vpack.c.b16 %v559, %v558
        %v571 = vpack.c.b16 %v561, %v560
        %v572 = vpack.c.b16 %v563, %v562
        %v573 = vpack.c.b16 %v565, %v564
        %582 = vmatprep.subr.bf16.mxu0 0
        %583 = vmatpush1.bf16.msra.mxu0 %v566
        %584 = vmatprep.subr.bf16.mxu0 0
        %585 = vmatpush1.bf16.msra.mxu0 %v567
        %586 = vmatprep.subr.bf16.mxu0 0
        %587 = vmatpush1.bf16.msra.mxu0 %v568
        %588 = vmatprep.subr.bf16.mxu0 0
        %589 = vmatpush1.bf16.msra.mxu0 %v569
        %590 = vmatprep.subr.bf16.mxu0 0
        %591 = vmatpush1.bf16.msra.mxu0 %v570
        %592 = vmatprep.subr.bf16.mxu0 0
        %593 = vmatpush1.bf16.msra.mxu0 %v571
        %594 = vmatprep.subr.bf16.mxu0 0
        %595 = vmatpush1.bf16.msra.mxu0 %v572
        %596 = vmatprep.subr.bf16.mxu0 0
        %597 = vmatpush1.bf16.msra.mxu0 %v573
        %598 = vmatprep.subr.bf16.mxu0 0
        %599 = vmatpush1.bf16.msra.mxu0 0
        %600 = vmatprep.subr.bf16.mxu0 0
        %601 = vmatpush1.bf16.msra.mxu0 0
        %602 = vmatprep.subr.bf16.mxu0 0
        %603 = vmatpush1.bf16.msra.mxu0 0
        %604 = vmatprep.subr.bf16.mxu0 0
        %605 = vmatpush1.bf16.msra.mxu0 0
        %606 = vmatprep.subr.bf16.mxu0 0
        %607 = vmatpush1.bf16.msra.mxu0 0
        %608 = vmatprep.subr.bf16.mxu0 0
        %609 = vmatpush1.bf16.msra.mxu0 0
        %610 = vmatprep.subr.bf16.mxu0 0
        %611 = vmatpush1.bf16.msra.mxu0 0
        %612 = vmatprep.subr.bf16.mxu0 0
        %613 = vmatpush1.bf16.msra.mxu0 0
        %614 = vmatprep.mubr.bf16.mxu0 0
        %615 = vmatmul.mubr.bf16.gmra.mrb[0].mxu0 %v413
        %v616 = vpop.f32.mrb[0].mxu0
        %v617 = vadd.f32 0.0, %v616
        %v618 = vpop.f32.mrb[0].mxu0
        %v619 = vpop.f32.mrb[0].mxu0
        %v620 = vadd.f32 0.0, %v619
        %v621 = vpop.f32.mrb[0].mxu0
        %622 = vmatprep.mubr.bf16.mxu0 0
        %623 = vmatmul.mubr.bf16.gmra.mrb[0].mxu0 %v414
        %v624 = vpop.f32.mrb[0].mxu0
        %v625 = vadd.f32 0.0, %v624
        %v626 = vpop.f32.mrb[0].mxu0
        %v627 = vpop.f32.mrb[0].mxu0
        %v628 = vadd.f32 0.0, %v627
        %v629 = vpop.f32.mrb[0].mxu0
        %630 = vmatprep.mubr.bf16.mxu0 0
        %631 = vmatmul.mubr.bf16.gmra.mrb[0].mxu0 %v415
        %v632 = vpop.f32.mrb[0].mxu0
        %v633 = vadd.f32 0.0, %v632
        %v634 = vpop.f32.mrb[0].mxu0
        %v635 = vpop.f32.mrb[0].mxu0
        %v636 = vadd.f32 0.0, %v635
        %v637 = vpop.f32.mrb[0].mxu0
        %638 = vmatprep.mubr.bf16.mxu0 0
        %639 = vmatmul.mubr.bf16.gmra.mrb[0].mxu0 %v416
        %v640 = vpop.f32.mrb[0].mxu0
        %v641 = vadd.f32 0.0, %v640
        %v642 = vpop.f32.mrb[0].mxu0
        %v643 = vpop.f32.mrb[0].mxu0
        %v644 = vadd.f32 0.0, %v643
        %v645 = vpop.f32.mrb[0].mxu0
        %646 = vdwg.mxu0
        %v663 = vunpack.c.l.b16 %v237
        %v664 = vunpack.c.l.b16 %v238
        %v665 = vunpack.c.l.b16 %v239
        %v666 = vunpack.c.l.b16 %v240
        %v667 = vunpack.c.l.b16 %v241
        %v668 = vunpack.c.l.b16 %v242
        %v669 = vunpack.c.l.b16 %v243
        %v670 = vunpack.c.l.b16 %v244
        %v671 = vunpack.c.l.b16 %v245
        %v672 = vunpack.c.l.b16 %v246
        %v673 = vunpack.c.l.b16 %v247
        %v674 = vunpack.c.l.b16 %v248
        %v675 = vunpack.c.l.b16 %v249
        %v676 = vunpack.c.l.b16 %v250
        %v677 = vunpack.c.l.b16 %v251
        %v678 = vunpack.c.l.b16 %v252
        %v679 = vpack.c.b16 %v664, %v663
        %v680 = vpack.c.b16 %v666, %v665
        %v681 = vpack.c.b16 %v668, %v667
        %v682 = vpack.c.b16 %v670, %v669
        %v683 = vpack.c.b16 %v672, %v671
        %v684 = vpack.c.b16 %v674, %v673
        %v685 = vpack.c.b16 %v676, %v675
        %v686 = vpack.c.b16 %v678, %v677
        %695 = vmatprep.subr.bf16.mxu0 0
        %696 = vmatpush1.bf16.msra.mxu0 %v679
        %697 = vmatprep.subr.bf16.mxu0 0
        %698 = vmatpush1.bf16.msra.mxu0 %v680
        %699 = vmatprep.subr.bf16.mxu0 0
        %700 = vmatpush1.bf16.msra.mxu0 %v681
        %701 = vmatprep.subr.bf16.mxu0 0
        %702 = vmatpush1.bf16.msra.mxu0 %v682
        %703 = vmatprep.subr.bf16.mxu0 0
        %704 = vmatpush1.bf16.msra.mxu0 %v683
        %705 = vmatprep.subr.bf16.mxu0 0
        %706 = vmatpush1.bf16.msra.mxu0 %v684
        %707 = vmatprep.subr.bf16.mxu0 0
        %708 = vmatpush1.bf16.msra.mxu0 %v685
        %709 = vmatprep.subr.bf16.mxu0 0
        %710 = vmatpush1.bf16.msra.mxu0 %v686
        %711 = vmatprep.subr.bf16.mxu0 0
        %712 = vmatpush1.bf16.msra.mxu0 0
        %713 = vmatprep.subr.bf16.mxu0 0
        %714 = vmatpush1.bf16.msra.mxu0 0
        %715 = vmatprep.subr.bf16.mxu0 0
        %716 = vmatpush1.bf16.msra.mxu0 0
        %717 = vmatprep.subr.bf16.mxu0 0
        %718 = vmatpush1.bf16.msra.mxu0 0
        %719 = vmatprep.subr.bf16.mxu0 0
        %720 = vmatpush1.bf16.msra.mxu0 0
        %721 = vmatprep.subr.bf16.mxu0 0
        %722 = vmatpush1.bf16.msra.mxu0 0
        %723 = vmatprep.subr.bf16.mxu0 0
        %724 = vmatpush1.bf16.msra.mxu0 0
        %725 = vmatprep.subr.bf16.mxu0 0
        %726 = vmatpush1.bf16.msra.mxu0 0
        %727 = vmatprep.mubr.bf16.mxu0 0
        %728 = vmatmul.mubr.bf16.gmra.mrb[0].mxu0 %v413
        %v729 = vpop.f32.mrb[0].mxu0
        %v730 = vadd.f32 0.0, %v729
        %v731 = vpop.f32.mrb[0].mxu0
        %v732 = vpop.f32.mrb[0].mxu0
        %v733 = vadd.f32 0.0, %v732
        %v734 = vpop.f32.mrb[0].mxu0
        %735 = vmatprep.mubr.bf16.mxu0 0
        %736 = vmatmul.mubr.bf16.gmra.mrb[0].mxu0 %v414
        %v737 = vpop.f32.mrb[0].mxu0
        %v738 = vadd.f32 0.0, %v737
        %v739 = vpop.f32.mrb[0].mxu0
        %v740 = vpop.f32.mrb[0].mxu0
        %v741 = vadd.f32 0.0, %v740
        %v742 = vpop.f32.mrb[0].mxu0
        %743 = vmatprep.mubr.bf16.mxu0 0
        %744 = vmatmul.mubr.bf16.gmra.mrb[0].mxu0 %v415
        %v745 = vpop.f32.mrb[0].mxu0
        %v746 = vadd.f32 0.0, %v745
        %v747 = vpop.f32.mrb[0].mxu0
        %v748 = vpop.f32.mrb[0].mxu0
        %v749 = vadd.f32 0.0, %v748
        %v750 = vpop.f32.mrb[0].mxu0
        %751 = vmatprep.mubr.bf16.mxu0 0
        %752 = vmatmul.mubr.bf16.gmra.mrb[0].mxu0 %v416
        %v753 = vpop.f32.mrb[0].mxu0
        %v754 = vadd.f32 0.0, %v753
        %v755 = vpop.f32.mrb[0].mxu0
        %v756 = vpop.f32.mrb[0].mxu0
        %v757 = vadd.f32 0.0, %v756
        %v758 = vpop.f32.mrb[0].mxu0
        %759 = vdwg.mxu0
        %v776 = vunpack.c.l.b16 %v253
        %v777 = vunpack.c.l.b16 %v254
        %v778 = vunpack.c.l.b16 %v255
        %v779 = vunpack.c.l.b16 %v256
        %v780 = vunpack.c.l.b16 %v257
        %v781 = vunpack.c.l.b16 %v258
        %v782 = vunpack.c.l.b16 %v259
        %v783 = vunpack.c.l.b16 %v260
        %v784 = vunpack.c.l.b16 %v261
        %v785 = vunpack.c.l.b16 %v262
        %v786 = vunpack.c.l.b16 %v263
        %v787 = vunpack.c.l.b16 %v264
        %v788 = vunpack.c.l.b16 %v265
        %v789 = vunpack.c.l.b16 %v266
        %v790 = vunpack.c.l.b16 %v267
        %v791 = vunpack.c.l.b16 %v268
        %v792 = vpack.c.b16 %v777, %v776
        %v793 = vpack.c.b16 %v779, %v778
        %v794 = vpack.c.b16 %v781, %v780
        %v795 = vpack.c.b16 %v783, %v782
        %v796 = vpack.c.b16 %v785, %v784
        %v797 = vpack.c.b16 %v787, %v786
        %v798 = vpack.c.b16 %v789, %v788
        %v799 = vpack.c.b16 %v791, %v790
        %808 = vmatprep.subr.bf16.mxu0 0
        %809 = vmatpush1.bf16.msra.mxu0 %v792
        %810 = vmatprep.subr.bf16.mxu0 0
        %811 = vmatpush1.bf16.msra.mxu0 %v793
        %812 = vmatprep.subr.bf16.mxu0 0
        %813 = vmatpush1.bf16.msra.mxu0 %v794
        %814 = vmatprep.subr.bf16.mxu0 0
        %815 = vmatpush1.bf16.msra.mxu0 %v795
        %816 = vmatprep.subr.bf16.mxu0 0
        %817 = vmatpush1.bf16.msra.mxu0 %v796
        %818 = vmatprep.subr.bf16.mxu0 0
        %819 = vmatpush1.bf16.msra.mxu0 %v797
        %820 = vmatprep.subr.bf16.mxu0 0
        %821 = vmatpush1.bf16.msra.mxu0 %v798
        %822 = vmatprep.subr.bf16.mxu0 0
        %823 = vmatpush1.bf16.msra.mxu0 %v799
        %824 = vmatprep.subr.bf16.mxu0 0
        %825 = vmatpush1.bf16.msra.mxu0 0
        %826 = vmatprep.subr.bf16.mxu0 0
        %827 = vmatpush1.bf16.msra.mxu0 0
        %828 = vmatprep.subr.bf16.mxu0 0
        %829 = vmatpush1.bf16.msra.mxu0 0
        %830 = vmatprep.subr.bf16.mxu0 0
        %831 = vmatpush1.bf16.msra.mxu0 0
        %832 = vmatprep.subr.bf16.mxu0 0
        %833 = vmatpush1.bf16.msra.mxu0 0
        %834 = vmatprep.subr.bf16.mxu0 0
        %835 = vmatpush1.bf16.msra.mxu0 0
        %836 = vmatprep.subr.bf16.mxu0 0
        %837 = vmatpush1.bf16.msra.mxu0 0
        %838 = vmatprep.subr.bf16.mxu0 0
        %839 = vmatpush1.bf16.msra.mxu0 0
        %840 = vmatprep.mubr.bf16.mxu0 0
        %841 = vmatmul.mubr.bf16.gmra.mrb[0].mxu0 %v413
        %v842 = vpop.f32.mrb[0].mxu0
        %v843 = vadd.f32 0.0, %v842
        %v844 = vpop.f32.mrb[0].mxu0
        %v845 = vpop.f32.mrb[0].mxu0
        %v846 = vadd.f32 0.0, %v845
        %v847 = vpop.f32.mrb[0].mxu0
        %848 = vmatprep.mubr.bf16.mxu0 0
        %849 = vmatmul.mubr.bf16.gmra.mrb[0].mxu0 %v414
        %v850 = vpop.f32.mrb[0].mxu0
        %v851 = vadd.f32 0.0, %v850
        %v852 = vpop.f32.mrb[0].mxu0
        %v853 = vpop.f32.mrb[0].mxu0
        %v854 = vadd.f32 0.0, %v853
        %v855 = vpop.f32.mrb[0].mxu0
        %856 = vmatprep.mubr.bf16.mxu0 0
        %857 = vmatmul.mubr.bf16.gmra.mrb[0].mxu0 %v415
        %v858 = vpop.f32.mrb[0].mxu0
        %v859 = vadd.f32 0.0, %v858
        %v860 = vpop.f32.mrb[0].mxu0
        %v861 = vpop.f32.mrb[0].mxu0
        %v862 = vadd.f32 0.0, %v861
        %v863 = vpop.f32.mrb[0].mxu0
        %864 = vmatprep.mubr.bf16.mxu0 0
        %865 = vmatmul.mubr.bf16.gmra.mrb[0].mxu0 %v416
        %v866 = vpop.f32.mrb[0].mxu0
        %v867 = vadd.f32 0.0, %v866
        %v868 = vpop.f32.mrb[0].mxu0
        %v869 = vpop.f32.mrb[0].mxu0
        %v870 = vadd.f32 0.0, %v869
        %v871 = vpop.f32.mrb[0].mxu0
        %872 = vdwg.mxu0
        %v889 = vunpack.c.l.b16 %v269
        %v890 = vunpack.c.l.b16 %v270
        %v891 = vunpack.c.l.b16 %v271
        %v892 = vunpack.c.l.b16 %v272
        %v893 = vunpack.c.l.b16 %v273
        %v894 = vunpack.c.l.b16 %v274
        %v895 = vunpack.c.l.b16 %v275
        %v896 = vunpack.c.l.b16 %v276
        %v897 = vunpack.c.l.b16 %v277
        %v898 = vunpack.c.l.b16 %v278
        %v899 = vunpack.c.l.b16 %v279
        %v900 = vunpack.c.l.b16 %v280
        %v901 = vunpack.c.l.b16 %v281
        %v902 = vunpack.c.l.b16 %v282
        %v903 = vunpack.c.l.b16 %v283
        %v904 = vunpack.c.l.b16 %v284
        %v905 = vpack.c.b16 %v890, %v889
        %v906 = vpack.c.b16 %v892, %v891
        %v907 = vpack.c.b16 %v894, %v893
        %v908 = vpack.c.b16 %v896, %v895
        %v909 = vpack.c.b16 %v898, %v897
        %v910 = vpack.c.b16 %v900, %v899
        %v911 = vpack.c.b16 %v902, %v901
        %v912 = vpack.c.b16 %v904, %v903
        %921 = vmatprep.subr.bf16.mxu0 0
        %922 = vmatpush1.bf16.msra.mxu0 %v905
        %923 = vmatprep.subr.bf16.mxu0 0
        %924 = vmatpush1.bf16.msra.mxu0 %v906
        %925 = vmatprep.subr.bf16.mxu0 0
        %926 = vmatpush1.bf16.msra.mxu0 %v907
        %927 = vmatprep.subr.bf16.mxu0 0
        %928 = vmatpush1.bf16.msra.mxu0 %v908
        %929 = vmatprep.subr.bf16.mxu0 0
        %930 = vmatpush1.bf16.msra.mxu0 %v909
        %931 = vmatprep.subr.bf16.mxu0 0
        %932 = vmatpush1.bf16.msra.mxu0 %v910
        %933 = vmatprep.subr.bf16.mxu0 0
        %934 = vmatpush1.bf16.msra.mxu0 %v911
        %935 = vmatprep.subr.bf16.mxu0 0
        %936 = vmatpush1.bf16.msra.mxu0 %v912
        %937 = vmatprep.subr.bf16.mxu0 0
        %938 = vmatpush1.bf16.msra.mxu0 0
        %939 = vmatprep.subr.bf16.mxu0 0
        %940 = vmatpush1.bf16.msra.mxu0 0
        %941 = vmatprep.subr.bf16.mxu0 0
        %942 = vmatpush1.bf16.msra.mxu0 0
        %943 = vmatprep.subr.bf16.mxu0 0
        %944 = vmatpush1.bf16.msra.mxu0 0
        %945 = vmatprep.subr.bf16.mxu0 0
        %946 = vmatpush1.bf16.msra.mxu0 0
        %947 = vmatprep.subr.bf16.mxu0 0
        %948 = vmatpush1.bf16.msra.mxu0 0
        %949 = vmatprep.subr.bf16.mxu0 0
        %950 = vmatpush1.bf16.msra.mxu0 0
        %951 = vmatprep.subr.bf16.mxu0 0
        %952 = vmatpush1.bf16.msra.mxu0 0
        %953 = vmatprep.mubr.bf16.mxu0 0
        %954 = vmatmul.mubr.bf16.gmra.mrb[0].mxu0 %v413
        %v955 = vpop.f32.mrb[0].mxu0
        %v956 = vadd.f32 0.0, %v955
        %v957 = vpop.f32.mrb[0].mxu0
        %v958 = vpop.f32.mrb[0].mxu0
        %v959 = vadd.f32 0.0, %v958
        %v960 = vpop.f32.mrb[0].mxu0
        %961 = vmatprep.mubr.bf16.mxu0 0
        %962 = vmatmul.mubr.bf16.gmra.mrb[0].mxu0 %v414
        %v963 = vpop.f32.mrb[0].mxu0
        %v964 = vadd.f32 0.0, %v963
        %v965 = vpop.f32.mrb[0].mxu0
        %v966 = vpop.f32.mrb[0].mxu0
        %v967 = vadd.f32 0.0, %v966
        %v968 = vpop.f32.mrb[0].mxu0
        %969 = vmatprep.mubr.bf16.mxu0 0
        %970 = vmatmul.mubr.bf16.gmra.mrb[0].mxu0 %v415
        %v971 = vpop.f32.mrb[0].mxu0
        %v972 = vadd.f32 0.0, %v971
        %v973 = vpop.f32.mrb[0].mxu0
        %v974 = vpop.f32.mrb[0].mxu0
        %v975 = vadd.f32 0.0, %v974
        %v976 = vpop.f32.mrb[0].mxu0
        %977 = vmatprep.mubr.bf16.mxu0 0
        %978 = vmatmul.mubr.bf16.gmra.mrb[0].mxu0 %v416
        %v979 = vpop.f32.mrb[0].mxu0
        %v980 = vadd.f32 0.0, %v979
        %v981 = vpop.f32.mrb[0].mxu0
        %v982 = vpop.f32.mrb[0].mxu0
        %v983 = vadd.f32 0.0, %v982
        %v984 = vpop.f32.mrb[0].mxu0
        %985 = vdwg.mxu0
        %v1002 = vunpack.c.l.b16 %v285
        %v1003 = vunpack.c.l.b16 %v286
        %v1004 = vunpack.c.l.b16 %v287
        %v1005 = vunpack.c.l.b16 %v288
        %v1006 = vunpack.c.l.b16 %v289
        %v1007 = vunpack.c.l.b16 %v290
        %v1008 = vunpack.c.l.b16 %v291
        %v1009 = vunpack.c.l.b16 %v292
        %v1010 = vunpack.c.l.b16 %v293
        %v1011 = vunpack.c.l.b16 %v294
        %v1012 = vunpack.c.l.b16 %v295
        %v1013 = vunpack.c.l.b16 %v296
        %v1014 = vunpack.c.l.b16 %v297
        %v1015 = vunpack.c.l.b16 %v298
        %v1016 = vunpack.c.l.b16 %v299
        %v1017 = vunpack.c.l.b16 %v300
        %v1018 = vpack.c.b16 %v1003, %v1002
        %v1019 = vpack.c.b16 %v1005, %v1004
        %v1020 = vpack.c.b16 %v1007, %v1006
        %v1021 = vpack.c.b16 %v1009, %v1008
        %v1022 = vpack.c.b16 %v1011, %v1010
        %v1023 = vpack.c.b16 %v1013, %v1012
        %v1024 = vpack.c.b16 %v1015, %v1014
        %v1025 = vpack.c.b16 %v1017, %v1016
        %1034 = vmatprep.subr.bf16.mxu0 0
        %1035 = vmatpush1.bf16.msra.mxu0 %v1018
        %1036 = vmatprep.subr.bf16.mxu0 0
        %1037 = vmatpush1.bf16.msra.mxu0 %v1019
        %1038 = vmatprep.subr.bf16.mxu0 0
        %1039 = vmatpush1.bf16.msra.mxu0 %v1020
        %1040 = vmatprep.subr.bf16.mxu0 0
        %1041 = vmatpush1.bf16.msra.mxu0 %v1021
        %1042 = vmatprep.subr.bf16.mxu0 0
        %1043 = vmatpush1.bf16.msra.mxu0 %v1022
        %1044 = vmatprep.subr.bf16.mxu0 0
        %1045 = vmatpush1.bf16.msra.mxu0 %v1023
        %1046 = vmatprep.subr.bf16.mxu0 0
        %1047 = vmatpush1.bf16.msra.mxu0 %v1024
        %1048 = vmatprep.subr.bf16.mxu0 0
        %1049 = vmatpush1.bf16.msra.mxu0 %v1025
        %1050 = vmatprep.subr.bf16.mxu0 0
        %1051 = vmatpush1.bf16.msra.mxu0 0
        %1052 = vmatprep.subr.bf16.mxu0 0
        %1053 = vmatpush1.bf16.msra.mxu0 0
        %1054 = vmatprep.subr.bf16.mxu0 0
        %1055 = vmatpush1.bf16.msra.mxu0 0
        %1056 = vmatprep.subr.bf16.mxu0 0
        %1057 = vmatpush1.bf16.msra.mxu0 0
        %1058 = vmatprep.subr.bf16.mxu0 0
        %1059 = vmatpush1.bf16.msra.mxu0 0
        %1060 = vmatprep.subr.bf16.mxu0 0
        %1061 = vmatpush1.bf16.msra.mxu0 0
        %1062 = vmatprep.subr.bf16.mxu0 0
        %1063 = vmatpush1.bf16.msra.mxu0 0
        %1064 = vmatprep.subr.bf16.mxu0 0
        %1065 = vmatpush1.bf16.msra.mxu0 0
        %1066 = vmatprep.mubr.bf16.mxu0 0
        %1067 = vmatmul.mubr.bf16.gmra.mrb[0].mxu0 %v413
        %v1068 = vpop.f32.mrb[0].mxu0
        %v1069 = vadd.f32 0.0, %v1068
        %v1070 = vpop.f32.mrb[0].mxu0
        %v1071 = vpop.f32.mrb[0].mxu0
        %v1072 = vadd.f32 0.0, %v1071
        %v1073 = vpop.f32.mrb[0].mxu0
        %1074 = vmatprep.mubr.bf16.mxu0 0
        %1075 = vmatmul.mubr.bf16.gmra.mrb[0].mxu0 %v414
        %v1076 = vpop.f32.mrb[0].mxu0
        %v1077 = vadd.f32 0.0, %v1076
        %v1078 = vpop.f32.mrb[0].mxu0
        %v1079 = vpop.f32.mrb[0].mxu0
        %v1080 = vadd.f32 0.0, %v1079
        %v1081 = vpop.f32.mrb[0].mxu0
        %1082 = vmatprep.mubr.bf16.mxu0 0
        %1083 = vmatmul.mubr.bf16.gmra.mrb[0].mxu0 %v415
        %v1084 = vpop.f32.mrb[0].mxu0
        %v1085 = vadd.f32 0.0, %v1084
        %v1086 = vpop.f32.mrb[0].mxu0
        %v1087 = vpop.f32.mrb[0].mxu0
        %v1088 = vadd.f32 0.0, %v1087
        %v1089 = vpop.f32.mrb[0].mxu0
        %1090 = vmatprep.mubr.bf16.mxu0 0
        %1091 = vmatmul.mubr.bf16.gmra.mrb[0].mxu0 %v416
        %v1092 = vpop.f32.mrb[0].mxu0
        %v1093 = vadd.f32 0.0, %v1092
        %v1094 = vpop.f32.mrb[0].mxu0
        %v1095 = vpop.f32.mrb[0].mxu0
        %v1096 = vadd.f32 0.0, %v1095
        %v1097 = vpop.f32.mrb[0].mxu0
        %1098 = vdwg.mxu0
        %v1115 = vunpack.c.l.b16 %v301
        %v1116 = vunpack.c.l.b16 %v302
        %v1117 = vunpack.c.l.b16 %v303
        %v1118 = vunpack.c.l.b16 %v304
        %v1119 = vunpack.c.l.b16 %v305
        %v1120 = vunpack.c.l.b16 %v306
        %v1121 = vunpack.c.l.b16 %v307
        %v1122 = vunpack.c.l.b16 %v308
        %v1123 = vunpack.c.l.b16 %v309
        %v1124 = vunpack.c.l.b16 %v310
        %v1125 = vunpack.c.l.b16 %v311
        %v1126 = vunpack.c.l.b16 %v312
        %v1127 = vunpack.c.l.b16 %v313
        %v1128 = vunpack.c.l.b16 %v314
        %v1129 = vunpack.c.l.b16 %v315
        %v1130 = vunpack.c.l.b16 %v316
        %v1131 = vpack.c.b16 %v1116, %v1115
        %v1132 = vpack.c.b16 %v1118, %v1117
        %v1133 = vpack.c.b16 %v1120, %v1119
        %v1134 = vpack.c.b16 %v1122, %v1121
        %v1135 = vpack.c.b16 %v1124, %v1123
        %v1136 = vpack.c.b16 %v1126, %v1125
        %v1137 = vpack.c.b16 %v1128, %v1127
        %v1138 = vpack.c.b16 %v1130, %v1129
        %1147 = vmatprep.subr.bf16.mxu0 0
        %1148 = vmatpush1.bf16.msra.mxu0 %v1131
        %1149 = vmatprep.subr.bf16.mxu0 0
        %1150 = vmatpush1.bf16.msra.mxu0 %v1132
        %1151 = vmatprep.subr.bf16.mxu0 0
        %1152 = vmatpush1.bf16.msra.mxu0 %v1133
        %1153 = vmatprep.subr.bf16.mxu0 0
        %1154 = vmatpush1.bf16.msra.mxu0 %v1134
        %1155 = vmatprep.subr.bf16.mxu0 0
        %1156 = vmatpush1.bf16.msra.mxu0 %v1135
        %1157 = vmatprep.subr.bf16.mxu0 0
        %1158 = vmatpush1.bf16.msra.mxu0 %v1136
        %1159 = vmatprep.subr.bf16.mxu0 0
        %1160 = vmatpush1.bf16.msra.mxu0 %v1137
        %1161 = vmatprep.subr.bf16.mxu0 0
        %1162 = vmatpush1.bf16.msra.mxu0 %v1138
        %1163 = vmatprep.subr.bf16.mxu0 0
        %1164 = vmatpush1.bf16.msra.mxu0 0
        %1165 = vmatprep.subr.bf16.mxu0 0
        %1166 = vmatpush1.bf16.msra.mxu0 0
        %1167 = vmatprep.subr.bf16.mxu0 0
        %1168 = vmatpush1.bf16.msra.mxu0 0
        %1169 = vmatprep.subr.bf16.mxu0 0
        %1170 = vmatpush1.bf16.msra.mxu0 0
        %1171 = vmatprep.subr.bf16.mxu0 0
        %1172 = vmatpush1.bf16.msra.mxu0 0
        %1173 = vmatprep.subr.bf16.mxu0 0
        %1174 = vmatpush1.bf16.msra.mxu0 0
        %1175 = vmatprep.subr.bf16.mxu0 0
        %1176 = vmatpush1.bf16.msra.mxu0 0
        %1177 = vmatprep.subr.bf16.mxu0 0
        %1178 = vmatpush1.bf16.msra.mxu0 0
        %1179 = vmatprep.mubr.bf16.mxu0 0
        %1180 = vmatmul.mubr.bf16.gmra.mrb[0].mxu0 %v413
        %v1181 = vpop.f32.mrb[0].mxu0
        %v1182 = vadd.f32 0.0, %v1181
        %v1183 = vpop.f32.mrb[0].mxu0
        %v1184 = vpop.f32.mrb[0].mxu0
        %v1185 = vadd.f32 0.0, %v1184
        %v1186 = vpop.f32.mrb[0].mxu0
        %1187 = vmatprep.mubr.bf16.mxu0 0
        %1188 = vmatmul.mubr.bf16.gmra.mrb[0].mxu0 %v414
        %v1189 = vpop.f32.mrb[0].mxu0
        %v1190 = vadd.f32 0.0, %v1189
        %v1191 = vpop.f32.mrb[0].mxu0
        %v1192 = vpop.f32.mrb[0].mxu0
        %v1193 = vadd.f32 0.0, %v1192
        %v1194 = vpop.f32.mrb[0].mxu0
        %1195 = vmatprep.mubr.bf16.mxu0 0
        %1196 = vmatmul.mubr.bf16.gmra.mrb[0].mxu0 %v415
        %v1197 = vpop.f32.mrb[0].mxu0
        %v1198 = vadd.f32 0.0, %v1197
        %v1199 = vpop.f32.mrb[0].mxu0
        %v1200 = vpop.f32.mrb[0].mxu0
        %v1201 = vadd.f32 0.0, %v1200
        %v1202 = vpop.f32.mrb[0].mxu0
        %1203 = vmatprep.mubr.bf16.mxu0 0
        %1204 = vmatmul.mubr.bf16.gmra.mrb[0].mxu0 %v416
        %v1205 = vpop.f32.mrb[0].mxu0
        %v1206 = vadd.f32 0.0, %v1205
        %v1207 = vpop.f32.mrb[0].mxu0
        %v1208 = vpop.f32.mrb[0].mxu0
        %v1209 = vadd.f32 0.0, %v1208
        %v1210 = vpop.f32.mrb[0].mxu0
        %1211 = vdwg.mxu0
        %v1228 = vunpack.c.l.b16 %v317
        %v1229 = vunpack.c.l.b16 %v318
        %v1230 = vunpack.c.l.b16 %v319
        %v1231 = vunpack.c.l.b16 %v320
        %v1232 = vunpack.c.l.b16 %v321
        %v1233 = vunpack.c.l.b16 %v322
        %v1234 = vunpack.c.l.b16 %v323
        %v1235 = vunpack.c.l.b16 %v324
        %v1236 = vunpack.c.l.b16 %v325
        %v1237 = vunpack.c.l.b16 %v326
        %v1238 = vunpack.c.l.b16 %v327
        %v1239 = vunpack.c.l.b16 %v328
        %v1240 = vunpack.c.l.b16 %v329
        %v1241 = vunpack.c.l.b16 %v330
        %v1242 = vunpack.c.l.b16 %v331
        %v1243 = vunpack.c.l.b16 %v332
        %v1244 = vpack.c.b16 %v1229, %v1228
        %v1245 = vpack.c.b16 %v1231, %v1230
        %v1246 = vpack.c.b16 %v1233, %v1232
        %v1247 = vpack.c.b16 %v1235, %v1234
        %v1248 = vpack.c.b16 %v1237, %v1236
        %v1249 = vpack.c.b16 %v1239, %v1238
        %v1250 = vpack.c.b16 %v1241, %v1240
        %v1251 = vpack.c.b16 %v1243, %v1242
        %1260 = vmatprep.subr.bf16.mxu0 0
        %1261 = vmatpush1.bf16.msra.mxu0 %v1244
        %1262 = vmatprep.subr.bf16.mxu0 0
        %1263 = vmatpush1.bf16.msra.mxu0 %v1245
        %1264 = vmatprep.subr.bf16.mxu0 0
        %1265 = vmatpush1.bf16.msra.mxu0 %v1246
        %1266 = vmatprep.subr.bf16.mxu0 0
        %1267 = vmatpush1.bf16.msra.mxu0 %v1247
        %1268 = vmatprep.subr.bf16.mxu0 0
        %1269 = vmatpush1.bf16.msra.mxu0 %v1248
        %1270 = vmatprep.subr.bf16.mxu0 0
        %1271 = vmatpush1.bf16.msra.mxu0 %v1249
        %1272 = vmatprep.subr.bf16.mxu0 0
        %1273 = vmatpush1.bf16.msra.mxu0 %v1250
        %1274 = vmatprep.subr.bf16.mxu0 0
        %1275 = vmatpush1.bf16.msra.mxu0 %v1251
        %1276 = vmatprep.subr.bf16.mxu0 0
        %1277 = vmatpush1.bf16.msra.mxu0 0
        %1278 = vmatprep.subr.bf16.mxu0 0
        %1279 = vmatpush1.bf16.msra.mxu0 0
        %1280 = vmatprep.subr.bf16.mxu0 0
        %1281 = vmatpush1.bf16.msra.mxu0 0
        %1282 = vmatprep.subr.bf16.mxu0 0
        %1283 = vmatpush1.bf16.msra.mxu0 0
        %1284 = vmatprep.subr.bf16.mxu0 0
        %1285 = vmatpush1.bf16.msra.mxu0 0
        %1286 = vmatprep.subr.bf16.mxu0 0
        %1287 = vmatpush1.bf16.msra.mxu0 0
        %1288 = vmatprep.subr.bf16.mxu0 0
        %1289 = vmatpush1.bf16.msra.mxu0 0
        %1290 = vmatprep.subr.bf16.mxu0 0
        %1291 = vmatpush1.bf16.msra.mxu0 0
        %1292 = vmatprep.mubr.bf16.mxu0 0
        %1293 = vmatmul.mubr.bf16.gmra.mrb[0].mxu0 %v413
        %v1294 = vpop.f32.mrb[0].mxu0
        %v1295 = vadd.f32 0.0, %v1294
        %v1296 = vpop.f32.mrb[0].mxu0
        %v1297 = vpop.f32.mrb[0].mxu0
        %v1298 = vadd.f32 0.0, %v1297
        %v1299 = vpop.f32.mrb[0].mxu0
        %1300 = vmatprep.mubr.bf16.mxu0 0
        %1301 = vmatmul.mubr.bf16.gmra.mrb[0].mxu0 %v414
        %v1302 = vpop.f32.mrb[0].mxu0
        %v1303 = vadd.f32 0.0, %v1302
        %v1304 = vpop.f32.mrb[0].mxu0
        %v1305 = vpop.f32.mrb[0].mxu0
        %v1306 = vadd.f32 0.0, %v1305
        %v1307 = vpop.f32.mrb[0].mxu0
        %1308 = vmatprep.mubr.bf16.mxu0 0
        %1309 = vmatmul.mubr.bf16.gmra.mrb[0].mxu0 %v415
        %v1310 = vpop.f32.mrb[0].mxu0
        %v1311 = vadd.f32 0.0, %v1310
        %v1312 = vpop.f32.mrb[0].mxu0
        %v1313 = vpop.f32.mrb[0].mxu0
        %v1314 = vadd.f32 0.0, %v1313
        %v1315 = vpop.f32.mrb[0].mxu0
        %1316 = vmatprep.mubr.bf16.mxu0 0
        %1317 = vmatmul.mubr.bf16.gmra.mrb[0].mxu0 %v416
        %v1318 = vpop.f32.mrb[0].mxu0
        %v1319 = vadd.f32 0.0, %v1318
        %v1320 = vpop.f32.mrb[0].mxu0
        %v1321 = vpop.f32.mrb[0].mxu0
        %v1322 = vadd.f32 0.0, %v1321
        %v1323 = vpop.f32.mrb[0].mxu0
        %1324 = vdwg.mxu0
        %v1341 = vunpack.c.l.b16 %v333
        %v1342 = vunpack.c.l.b16 %v334
        %v1343 = vunpack.c.l.b16 %v335
        %v1344 = vunpack.c.l.b16 %v336
        %v1345 = vunpack.c.l.b16 %v337
        %v1346 = vunpack.c.l.b16 %v338
        %v1347 = vunpack.c.l.b16 %v339
        %v1348 = vunpack.c.l.b16 %v340
        %v1349 = vunpack.c.l.b16 %v341
        %v1350 = vunpack.c.l.b16 %v342
        %v1351 = vunpack.c.l.b16 %v343
        %v1352 = vunpack.c.l.b16 %v344
        %v1353 = vunpack.c.l.b16 %v345
        %v1354 = vunpack.c.l.b16 %v346
        %v1355 = vunpack.c.l.b16 %v347
        %v1356 = vunpack.c.l.b16 %v348
        %v1357 = vpack.c.b16 %v1342, %v1341
        %v1358 = vpack.c.b16 %v1344, %v1343
        %v1359 = vpack.c.b16 %v1346, %v1345
        %v1360 = vpack.c.b16 %v1348, %v1347
        %v1361 = vpack.c.b16 %v1350, %v1349
        %v1362 = vpack.c.b16 %v1352, %v1351
        %v1363 = vpack.c.b16 %v1354, %v1353
        %v1364 = vpack.c.b16 %v1356, %v1355
        %1373 = vmatprep.subr.bf16.mxu0 0
        %1374 = vmatpush1.bf16.msra.mxu0 %v1357
        %1375 = vmatprep.subr.bf16.mxu0 0
        %1376 = vmatpush1.bf16.msra.mxu0 %v1358
        %1377 = vmatprep.subr.bf16.mxu0 0
        %1378 = vmatpush1.bf16.msra.mxu0 %v1359
        %1379 = vmatprep.subr.bf16.mxu0 0
        %1380 = vmatpush1.bf16.msra.mxu0 %v1360
        %1381 = vmatprep.subr.bf16.mxu0 0
        %1382 = vmatpush1.bf16.msra.mxu0 %v1361
        %1383 = vmatprep.subr.bf16.mxu0 0
        %1384 = vmatpush1.bf16.msra.mxu0 %v1362
        %1385 = vmatprep.subr.bf16.mxu0 0
        %1386 = vmatpush1.bf16.msra.mxu0 %v1363
        %1387 = vmatprep.subr.bf16.mxu0 0
        %1388 = vmatpush1.bf16.msra.mxu0 %v1364
        %1389 = vmatprep.subr.bf16.mxu0 0
        %1390 = vmatpush1.bf16.msra.mxu0 0
        %1391 = vmatprep.subr.bf16.mxu0 0
        %1392 = vmatpush1.bf16.msra.mxu0 0
        %1393 = vmatprep.subr.bf16.mxu0 0
        %1394 = vmatpush1.bf16.msra.mxu0 0
        %1395 = vmatprep.subr.bf16.mxu0 0
        %1396 = vmatpush1.bf16.msra.mxu0 0
        %1397 = vmatprep.subr.bf16.mxu0 0
        %1398 = vmatpush1.bf16.msra.mxu0 0
        %1399 = vmatprep.subr.bf16.mxu0 0
        %1400 = vmatpush1.bf16.msra.mxu0 0
        %1401 = vmatprep.subr.bf16.mxu0 0
        %1402 = vmatpush1.bf16.msra.mxu0 0
        %1403 = vmatprep.subr.bf16.mxu0 0
        %1404 = vmatpush1.bf16.msra.mxu0 0
        %1405 = vmatprep.mubr.bf16.mxu0 0
        %1406 = vmatmul.mubr.bf16.gmra.mrb[0].mxu0 %v413
        %v1407 = vpop.f32.mrb[0].mxu0
        %v1408 = vadd.f32 0.0, %v1407
        %v1409 = vpop.f32.mrb[0].mxu0
        %v1410 = vpop.f32.mrb[0].mxu0
        %v1411 = vadd.f32 0.0, %v1410
        %v1412 = vpop.f32.mrb[0].mxu0
        %1413 = vmatprep.mubr.bf16.mxu0 0
        %1414 = vmatmul.mubr.bf16.gmra.mrb[0].mxu0 %v414
        %v1415 = vpop.f32.mrb[0].mxu0
        %v1416 = vadd.f32 0.0, %v1415
        %v1417 = vpop.f32.mrb[0].mxu0
        %v1418 = vpop.f32.mrb[0].mxu0
        %v1419 = vadd.f32 0.0, %v1418
        %v1420 = vpop.f32.mrb[0].mxu0
        %1421 = vmatprep.mubr.bf16.mxu0 0
        %1422 = vmatmul.mubr.bf16.gmra.mrb[0].mxu0 %v415
        %v1423 = vpop.f32.mrb[0].mxu0
        %v1424 = vadd.f32 0.0, %v1423
        %v1425 = vpop.f32.mrb[0].mxu0
        %v1426 = vpop.f32.mrb[0].mxu0
        %v1427 = vadd.f32 0.0, %v1426
        %v1428 = vpop.f32.mrb[0].mxu0
        %1429 = vmatprep.mubr.bf16.mxu0 0
        %1430 = vmatmul.mubr.bf16.gmra.mrb[0].mxu0 %v416
        %v1431 = vpop.f32.mrb[0].mxu0
        %v1432 = vadd.f32 0.0, %v1431
        %v1433 = vpop.f32.mrb[0].mxu0
        %v1434 = vpop.f32.mrb[0].mxu0
        %v1435 = vadd.f32 0.0, %v1434
        %v1436 = vpop.f32.mrb[0].mxu0
        %1437 = vdwg.mxu0
        %v1454 = vunpack.c.l.b16 %v349
        %v1455 = vunpack.c.l.b16 %v350
        %v1456 = vunpack.c.l.b16 %v351
        %v1457 = vunpack.c.l.b16 %v352
        %v1458 = vunpack.c.l.b16 %v353
        %v1459 = vunpack.c.l.b16 %v354
        %v1460 = vunpack.c.l.b16 %v355
        %v1461 = vunpack.c.l.b16 %v356
        %v1462 = vunpack.c.l.b16 %v357
        %v1463 = vunpack.c.l.b16 %v358
        %v1464 = vunpack.c.l.b16 %v359
        %v1465 = vunpack.c.l.b16 %v360
        %v1466 = vunpack.c.l.b16 %v361
        %v1467 = vunpack.c.l.b16 %v362
        %v1468 = vunpack.c.l.b16 %v363
        %v1469 = vunpack.c.l.b16 %v364
        %v1470 = vpack.c.b16 %v1455, %v1454
        %v1471 = vpack.c.b16 %v1457, %v1456
        %v1472 = vpack.c.b16 %v1459, %v1458
        %v1473 = vpack.c.b16 %v1461, %v1460
        %v1474 = vpack.c.b16 %v1463, %v1462
        %v1475 = vpack.c.b16 %v1465, %v1464
        %v1476 = vpack.c.b16 %v1467, %v1466
        %v1477 = vpack.c.b16 %v1469, %v1468
        %1486 = vmatprep.subr.bf16.mxu0 0
        %1487 = vmatpush1.bf16.msra.mxu0 %v1470
        %1488 = vmatprep.subr.bf16.mxu0 0
        %1489 = vmatpush1.bf16.msra.mxu0 %v1471
        %1490 = vmatprep.subr.bf16.mxu0 0
        %1491 = vmatpush1.bf16.msra.mxu0 %v1472
        %1492 = vmatprep.subr.bf16.mxu0 0
        %1493 = vmatpush1.bf16.msra.mxu0 %v1473
        %1494 = vmatprep.subr.bf16.mxu0 0
        %1495 = vmatpush1.bf16.msra.mxu0 %v1474
        %1496 = vmatprep.subr.bf16.mxu0 0
        %1497 = vmatpush1.bf16.msra.mxu0 %v1475
        %1498 = vmatprep.subr.bf16.mxu0 0
        %1499 = vmatpush1.bf16.msra.mxu0 %v1476
        %1500 = vmatprep.subr.bf16.mxu0 0
        %1501 = vmatpush1.bf16.msra.mxu0 %v1477
        %1502 = vmatprep.subr.bf16.mxu0 0
        %1503 = vmatpush1.bf16.msra.mxu0 0
        %1504 = vmatprep.subr.bf16.mxu0 0
        %1505 = vmatpush1.bf16.msra.mxu0 0
        %1506 = vmatprep.subr.bf16.mxu0 0
        %1507 = vmatpush1.bf16.msra.mxu0 0
        %1508 = vmatprep.subr.bf16.mxu0 0
        %1509 = vmatpush1.bf16.msra.mxu0 0
        %1510 = vmatprep.subr.bf16.mxu0 0
        %1511 = vmatpush1.bf16.msra.mxu0 0
        %1512 = vmatprep.subr.bf16.mxu0 0
        %1513 = vmatpush1.bf16.msra.mxu0 0
        %1514 = vmatprep.subr.bf16.mxu0 0
        %1515 = vmatpush1.bf16.msra.mxu0 0
        %1516 = vmatprep.subr.bf16.mxu0 0
        %1517 = vmatpush1.bf16.msra.mxu0 0
        %1518 = vmatprep.mubr.bf16.mxu0 0
        %1519 = vmatmul.mubr.bf16.gmra.mrb[0].mxu0 %v413
        %v1520 = vpop.f32.mrb[0].mxu0
        %v1521 = vadd.f32 0.0, %v1520
        %v1522 = vpop.f32.mrb[0].mxu0
        %v1523 = vpop.f32.mrb[0].mxu0
        %v1524 = vadd.f32 0.0, %v1523
        %v1525 = vpop.f32.mrb[0].mxu0
        %1526 = vmatprep.mubr.bf16.mxu0 0
        %1527 = vmatmul.mubr.bf16.gmra.mrb[0].mxu0 %v414
        %v1528 = vpop.f32.mrb[0].mxu0
        %v1529 = vadd.f32 0.0, %v1528
        %v1530 = vpop.f32.mrb[0].mxu0
        %v1531 = vpop.f32.mrb[0].mxu0
        %v1532 = vadd.f32 0.0, %v1531
        %v1533 = vpop.f32.mrb[0].mxu0
        %1534 = vmatprep.mubr.bf16.mxu0 0
        %1535 = vmatmul.mubr.bf16.gmra.mrb[0].mxu0 %v415
        %v1536 = vpop.f32.mrb[0].mxu0
        %v1537 = vadd.f32 0.0, %v1536
        %v1538 = vpop.f32.mrb[0].mxu0
        %v1539 = vpop.f32.mrb[0].mxu0
        %v1540 = vadd.f32 0.0, %v1539
        %v1541 = vpop.f32.mrb[0].mxu0
        %1542 = vmatprep.mubr.bf16.mxu0 0
        %1543 = vmatmul.mubr.bf16.gmra.mrb[0].mxu0 %v416
        %v1544 = vpop.f32.mrb[0].mxu0
        %v1545 = vadd.f32 0.0, %v1544
        %v1546 = vpop.f32.mrb[0].mxu0
        %v1547 = vpop.f32.mrb[0].mxu0
        %v1548 = vadd.f32 0.0, %v1547
        %v1549 = vpop.f32.mrb[0].mxu0
        %1550 = vdwg.mxu0
        %v1567 = vunpack.c.l.b16 %v365
        %v1568 = vunpack.c.l.b16 %v366
        %v1569 = vunpack.c.l.b16 %v367
        %v1570 = vunpack.c.l.b16 %v368
        %v1571 = vunpack.c.l.b16 %v369
        %v1572 = vunpack.c.l.b16 %v370
        %v1573 = vunpack.c.l.b16 %v371
        %v1574 = vunpack.c.l.b16 %v372
        %v1575 = vunpack.c.l.b16 %v373
        %v1576 = vunpack.c.l.b16 %v374
        %v1577 = vunpack.c.l.b16 %v375
        %v1578 = vunpack.c.l.b16 %v376
        %v1579 = vunpack.c.l.b16 %v377
        %v1580 = vunpack.c.l.b16 %v378
        %v1581 = vunpack.c.l.b16 %v379
        %v1582 = vunpack.c.l.b16 %v380
        %v1583 = vpack.c.b16 %v1568, %v1567
        %v1584 = vpack.c.b16 %v1570, %v1569
        %v1585 = vpack.c.b16 %v1572, %v1571
        %v1586 = vpack.c.b16 %v1574, %v1573
        %v1587 = vpack.c.b16 %v1576, %v1575
        %v1588 = vpack.c.b16 %v1578, %v1577
        %v1589 = vpack.c.b16 %v1580, %v1579
        %v1590 = vpack.c.b16 %v1582, %v1581
        %1599 = vmatprep.subr.bf16.mxu0 0
        %1600 = vmatpush1.bf16.msra.mxu0 %v1583
        %1601 = vmatprep.subr.bf16.mxu0 0
        %1602 = vmatpush1.bf16.msra.mxu0 %v1584
        %1603 = vmatprep.subr.bf16.mxu0 0
        %1604 = vmatpush1.bf16.msra.mxu0 %v1585
        %1605 = vmatprep.subr.bf16.mxu0 0
        %1606 = vmatpush1.bf16.msra.mxu0 %v1586
        %1607 = vmatprep.subr.bf16.mxu0 0
        %1608 = vmatpush1.bf16.msra.mxu0 %v1587
        %1609 = vmatprep.subr.bf16.mxu0 0
        %1610 = vmatpush1.bf16.msra.mxu0 %v1588
        %1611 = vmatprep.subr.bf16.mxu0 0
        %1612 = vmatpush1.bf16.msra.mxu0 %v1589
        %1613 = vmatprep.subr.bf16.mxu0 0
        %1614 = vmatpush1.bf16.msra.mxu0 %v1590
        %1615 = vmatprep.subr.bf16.mxu0 0
        %1616 = vmatpush1.bf16.msra.mxu0 0
        %1617 = vmatprep.subr.bf16.mxu0 0
        %1618 = vmatpush1.bf16.msra.mxu0 0
        %1619 = vmatprep.subr.bf16.mxu0 0
        %1620 = vmatpush1.bf16.msra.mxu0 0
        %1621 = vmatprep.subr.bf16.mxu0 0
        %1622 = vmatpush1.bf16.msra.mxu0 0
        %1623 = vmatprep.subr.bf16.mxu0 0
        %1624 = vmatpush1.bf16.msra.mxu0 0
        %1625 = vmatprep.subr.bf16.mxu0 0
        %1626 = vmatpush1.bf16.msra.mxu0 0
        %1627 = vmatprep.subr.bf16.mxu0 0
        %1628 = vmatpush1.bf16.msra.mxu0 0
        %1629 = vmatprep.subr.bf16.mxu0 0
        %1630 = vmatpush1.bf16.msra.mxu0 0
        %1631 = vmatprep.mubr.bf16.mxu0 0
        %1632 = vmatmul.mubr.bf16.gmra.mrb[0].mxu0 %v413
        %v1633 = vpop.f32.mrb[0].mxu0
        %v1634 = vadd.f32 0.0, %v1633
        %v1635 = vpop.f32.mrb[0].mxu0
        %v1636 = vpop.f32.mrb[0].mxu0
        %v1637 = vadd.f32 0.0, %v1636
        %v1638 = vpop.f32.mrb[0].mxu0
        %1639 = vmatprep.mubr.bf16.mxu0 0
        %1640 = vmatmul.mubr.bf16.gmra.mrb[0].mxu0 %v414
        %v1641 = vpop.f32.mrb[0].mxu0
        %v1642 = vadd.f32 0.0, %v1641
        %v1643 = vpop.f32.mrb[0].mxu0
        %v1644 = vpop.f32.mrb[0].mxu0
        %v1645 = vadd.f32 0.0, %v1644
        %v1646 = vpop.f32.mrb[0].mxu0
        %1647 = vmatprep.mubr.bf16.mxu0 0
        %1648 = vmatmul.mubr.bf16.gmra.mrb[0].mxu0 %v415
        %v1649 = vpop.f32.mrb[0].mxu0
        %v1650 = vadd.f32 0.0, %v1649
        %v1651 = vpop.f32.mrb[0].mxu0
        %v1652 = vpop.f32.mrb[0].mxu0
        %v1653 = vadd.f32 0.0, %v1652
        %v1654 = vpop.f32.mrb[0].mxu0
        %1655 = vmatprep.mubr.bf16.mxu0 0
        %1656 = vmatmul.mubr.bf16.gmra.mrb[0].mxu0 %v416
        %v1657 = vpop.f32.mrb[0].mxu0
        %v1658 = vadd.f32 0.0, %v1657
        %v1659 = vpop.f32.mrb[0].mxu0
        %v1660 = vpop.f32.mrb[0].mxu0
        %v1661 = vadd.f32 0.0, %v1660
        %v1662 = vpop.f32.mrb[0].mxu0
        %1663 = vdwg.mxu0
        %v1680 = vunpack.c.l.b16 %v381
        %v1681 = vunpack.c.l.b16 %v382
        %v1682 = vunpack.c.l.b16 %v383
        %v1683 = vunpack.c.l.b16 %v384
        %v1684 = vunpack.c.l.b16 %v385
        %v1685 = vunpack.c.l.b16 %v386
        %v1686 = vunpack.c.l.b16 %v387
        %v1687 = vunpack.c.l.b16 %v388
        %v1688 = vunpack.c.l.b16 %v389
        %v1689 = vunpack.c.l.b16 %v390
        %v1690 = vunpack.c.l.b16 %v391
        %v1691 = vunpack.c.l.b16 %v392
        %v1692 = vunpack.c.l.b16 %v393
        %v1693 = vunpack.c.l.b16 %v394
        %v1694 = vunpack.c.l.b16 %v395
        %v1695 = vunpack.c.l.b16 %v396
        %v1696 = vpack.c.b16 %v1681, %v1680
        %v1697 = vpack.c.b16 %v1683, %v1682
        %v1698 = vpack.c.b16 %v1685, %v1684
        %v1699 = vpack.c.b16 %v1687, %v1686
        %v1700 = vpack.c.b16 %v1689, %v1688
        %v1701 = vpack.c.b16 %v1691, %v1690
        %v1702 = vpack.c.b16 %v1693, %v1692
        %v1703 = vpack.c.b16 %v1695, %v1694
        %1712 = vmatprep.subr.bf16.mxu0 0
        %1713 = vmatpush1.bf16.msra.mxu0 %v1696
        %1714 = vmatprep.subr.bf16.mxu0 0
        %1715 = vmatpush1.bf16.msra.mxu0 %v1697
        %1716 = vmatprep.subr.bf16.mxu0 0
        %1717 = vmatpush1.bf16.msra.mxu0 %v1698
        %1718 = vmatprep.subr.bf16.mxu0 0
        %1719 = vmatpush1.bf16.msra.mxu0 %v1699
        %1720 = vmatprep.subr.bf16.mxu0 0
        %1721 = vmatpush1.bf16.msra.mxu0 %v1700
        %1722 = vmatprep.subr.bf16.mxu0 0
        %1723 = vmatpush1.bf16.msra.mxu0 %v1701
        %1724 = vmatprep.subr.bf16.mxu0 0
        %1725 = vmatpush1.bf16.msra.mxu0 %v1702
        %1726 = vmatprep.subr.bf16.mxu0 0
        %1727 = vmatpush1.bf16.msra.mxu0 %v1703
        %1728 = vmatprep.subr.bf16.mxu0 0
        %1729 = vmatpush1.bf16.msra.mxu0 0
        %1730 = vmatprep.subr.bf16.mxu0 0
        %1731 = vmatpush1.bf16.msra.mxu0 0
        %1732 = vmatprep.subr.bf16.mxu0 0
        %1733 = vmatpush1.bf16.msra.mxu0 0
        %1734 = vmatprep.subr.bf16.mxu0 0
        %1735 = vmatpush1.bf16.msra.mxu0 0
        %1736 = vmatprep.subr.bf16.mxu0 0
        %1737 = vmatpush1.bf16.msra.mxu0 0
        %1738 = vmatprep.subr.bf16.mxu0 0
        %1739 = vmatpush1.bf16.msra.mxu0 0
        %1740 = vmatprep.subr.bf16.mxu0 0
        %1741 = vmatpush1.bf16.msra.mxu0 0
        %1742 = vmatprep.subr.bf16.mxu0 0
        %1743 = vmatpush1.bf16.msra.mxu0 0
        %1744 = vmatprep.mubr.bf16.mxu0 0
        %1745 = vmatmul.mubr.bf16.gmra.mrb[0].mxu0 %v413
        %v1746 = vpop.f32.mrb[0].mxu0
        %v1747 = vadd.f32 0.0, %v1746
        %v1748 = vpop.f32.mrb[0].mxu0
        %v1749 = vpop.f32.mrb[0].mxu0
        %v1750 = vadd.f32 0.0, %v1749
        %v1751 = vpop.f32.mrb[0].mxu0
        %1752 = vmatprep.mubr.bf16.mxu0 0
        %1753 = vmatmul.mubr.bf16.gmra.mrb[0].mxu0 %v414
        %v1754 = vpop.f32.mrb[0].mxu0
        %v1755 = vadd.f32 0.0, %v1754
        %v1756 = vpop.f32.mrb[0].mxu0
        %v1757 = vpop.f32.mrb[0].mxu0
        %v1758 = vadd.f32 0.0, %v1757
        %v1759 = vpop.f32.mrb[0].mxu0
        %1760 = vmatprep.mubr.bf16.mxu0 0
        %1761 = vmatmul.mubr.bf16.gmra.mrb[0].mxu0 %v415
        %v1762 = vpop.f32.mrb[0].mxu0
        %v1763 = vadd.f32 0.0, %v1762
        %v1764 = vpop.f32.mrb[0].mxu0
        %v1765 = vpop.f32.mrb[0].mxu0
        %v1766 = vadd.f32 0.0, %v1765
        %v1767 = vpop.f32.mrb[0].mxu0
        %1768 = vmatprep.mubr.bf16.mxu0 0
        %1769 = vmatmul.mubr.bf16.gmra.mrb[0].mxu0 %v416
        %v1770 = vpop.f32.mrb[0].mxu0
        %v1771 = vadd.f32 0.0, %v1770
        %v1772 = vpop.f32.mrb[0].mxu0
        %v1773 = vpop.f32.mrb[0].mxu0
        %v1774 = vadd.f32 0.0, %v1773
        %v1775 = vpop.f32.mrb[0].mxu0
        %1776 = vdwg.mxu0
        %v1777 = vpack.c.bf16 %v507, %v504
        %v1778 = vpack.c.bf16 %v515, %v512
        %v1779 = vpack.c.bf16 %v523, %v520
        %v1780 = vpack.c.bf16 %v531, %v528
        %v1781 = vpack.c.bf16 %v620, %v617
        %v1782 = vpack.c.bf16 %v628, %v625
        %v1783 = vpack.c.bf16 %v636, %v633
        %v1784 = vpack.c.bf16 %v644, %v641
        %v1785 = vpack.c.bf16 %v733, %v730
        %v1786 = vpack.c.bf16 %v741, %v738
        %v1787 = vpack.c.bf16 %v749, %v746
        %v1788 = vpack.c.bf16 %v757, %v754
        %v1789 = vpack.c.bf16 %v846, %v843
        %v1790 = vpack.c.bf16 %v854, %v851
        %v1791 = vpack.c.bf16 %v862, %v859
        %v1792 = vpack.c.bf16 %v870, %v867
        %v1793 = vpack.c.bf16 %v959, %v956
        %v1794 = vpack.c.bf16 %v967, %v964
        %v1795 = vpack.c.bf16 %v975, %v972
        %v1796 = vpack.c.bf16 %v983, %v980
        %v1797 = vpack.c.bf16 %v1072, %v1069
        %v1798 = vpack.c.bf16 %v1080, %v1077
        %v1799 = vpack.c.bf16 %v1088, %v1085
        %v1800 = vpack.c.bf16 %v1096, %v1093
        %v1801 = vpack.c.bf16 %v1185, %v1182
        %v1802 = vpack.c.bf16 %v1193, %v1190
        %v1803 = vpack.c.bf16 %v1201, %v1198
        %v1804 = vpack.c.bf16 %v1209, %v1206
        %v1805 = vpack.c.bf16 %v1298, %v1295
        %v1806 = vpack.c.bf16 %v1306, %v1303
        %v1807 = vpack.c.bf16 %v1314, %v1311
        %v1808 = vpack.c.bf16 %v1322, %v1319
        %v1809 = vpack.c.bf16 %v1411, %v1408
        %v1810 = vpack.c.bf16 %v1419, %v1416
        %v1811 = vpack.c.bf16 %v1427, %v1424
        %v1812 = vpack.c.bf16 %v1435, %v1432
        %v1813 = vpack.c.bf16 %v1524, %v1521
        %v1814 = vpack.c.bf16 %v1532, %v1529
        %v1815 = vpack.c.bf16 %v1540, %v1537
        %v1816 = vpack.c.bf16 %v1548, %v1545
        %v1817 = vpack.c.bf16 %v1637, %v1634
        %v1818 = vpack.c.bf16 %v1645, %v1642
        %v1819 = vpack.c.bf16 %v1653, %v1650
        %v1820 = vpack.c.bf16 %v1661, %v1658
        %v1821 = vpack.c.bf16 %v1750, %v1747
        %v1822 = vpack.c.bf16 %v1758, %v1755
        %v1823 = vpack.c.bf16 %v1766, %v1763
        %v1824 = vpack.c.bf16 %v1774, %v1771
        %vm1825 = vcmask 261120
        %v1827 = vsel %vm1825, %v1777, 0
        %v1830 = vsel %vm1825, %v1778, 0
        %v1833 = vsel %vm1825, %v1779, 0
        %v1836 = vsel %vm1825, %v1780, 0
        %v1839 = vsel %vm1825, %v1793, 0
        %v1842 = vsel %vm1825, %v1794, 0
        %v1845 = vsel %vm1825, %v1795, 0
        %v1848 = vsel %vm1825, %v1796, 0
        %1850 = vmatprep.subr.bf16.mxu0 0
        %1851 = vmatpush1.bf16.xpose.msra.mxu0 %v1839
        %1852 = vmatprep.subr.bf16.mxu0 0
        %1853 = vmatpush1.bf16.xpose.msra.mxu0 %v1842
        %1854 = vmatprep.subr.bf16.mxu0 0
        %1855 = vmatpush1.bf16.xpose.msra.mxu0 %v1845
        %1856 = vmatprep.subr.bf16.mxu0 0
        %1857 = vmatpush1.bf16.xpose.msra.mxu0 %v1848
        %1858 = vmatprep.subr.bf16.mxu0 0
        %1859 = vmatpush1.bf16.xpose.msra.mxu0 0
        %1860 = vmatprep.subr.bf16.mxu0 0
        %1861 = vmatpush1.bf16.xpose.msra.mxu0 0
        %1862 = vmatprep.subr.bf16.mxu0 0
        %1863 = vmatpush1.bf16.xpose.msra.mxu0 0
        %1864 = vmatprep.subr.bf16.mxu0 0
        %1865 = vmatpush1.bf16.xpose.msra.mxu0 0
        %1866 = vmatprep.subr.bf16.mxu0 0
        %1867 = vmatpush1.bf16.xpose.msra.mxu0 0
        %1868 = vmatprep.subr.bf16.mxu0 0
        %1869 = vmatpush1.bf16.xpose.msra.mxu0 0
        %1870 = vmatprep.subr.bf16.mxu0 0
        %1871 = vmatpush1.bf16.xpose.msra.mxu0 0
        %1872 = vmatprep.subr.bf16.mxu0 0
        %1873 = vmatpush1.bf16.xpose.msra.mxu0 0
        %1874 = vmatprep.subr.bf16.mxu0 0
        %1875 = vmatpush1.bf16.xpose.msra.mxu0 0
        %1876 = vmatprep.subr.bf16.mxu0 0
        %1877 = vmatpush1.bf16.xpose.msra.mxu0 0
        %1878 = vmatprep.subr.bf16.mxu0 0
        %1879 = vmatpush1.bf16.xpose.msra.mxu0 0
        %1880 = vmatprep.subr.bf16.mxu0 0
        %1881 = vmatpush1.bf16.xpose.msra.mxu0 0
        %1882 = vmatprep.mubr.bf16.mxu0 0
        %1883 = vmatmul.mubr.bf16.gmra.mrb[0].mxu0 %v1827
        %v1884 = vpop.f32.mrb[0].mxu0
        %v1885 = vadd.f32 0.0, %v1884
        %v1886 = vpop.f32.mrb[0].mxu0
        %v1887 = vpop.f32.mrb[0].mxu0
        %v1888 = vadd.f32 0.0, %v1887
        %v1889 = vpop.f32.mrb[0].mxu0
        %1890 = vmatprep.mubr.bf16.mxu0 0
        %1891 = vmatmul.mubr.bf16.gmra.mrb[0].mxu0 %v1830
        %v1892 = vpop.f32.mrb[0].mxu0
        %v1893 = vadd.f32 0.0, %v1892
        %v1894 = vpop.f32.mrb[0].mxu0
        %v1895 = vpop.f32.mrb[0].mxu0
        %v1896 = vadd.f32 0.0, %v1895
        %v1897 = vpop.f32.mrb[0].mxu0
        %1898 = vmatprep.mubr.bf16.mxu0 0
        %1899 = vmatmul.mubr.bf16.gmra.mrb[0].mxu0 %v1833
        %v1900 = vpop.f32.mrb[0].mxu0
        %v1901 = vadd.f32 0.0, %v1900
        %v1902 = vpop.f32.mrb[0].mxu0
        %v1903 = vpop.f32.mrb[0].mxu0
        %v1904 = vadd.f32 0.0, %v1903
        %v1905 = vpop.f32.mrb[0].mxu0
        %1906 = vmatprep.mubr.bf16.mxu0 0
        %1907 = vmatmul.mubr.bf16.gmra.mrb[0].mxu0 %v1836
        %v1908 = vpop.f32.mrb[0].mxu0
        %v1909 = vadd.f32 0.0, %v1908
        %v1910 = vpop.f32.mrb[0].mxu0
        %v1911 = vpop.f32.mrb[0].mxu0
        %v1912 = vadd.f32 0.0, %v1911
        %v1913 = vpop.f32.mrb[0].mxu0
        %1914 = vdwg.mxu0
        %v1916 = vsel %vm1825, %v1781, 0
        %v1919 = vsel %vm1825, %v1782, 0
        %v1922 = vsel %vm1825, %v1783, 0
        %v1925 = vsel %vm1825, %v1784, 0
        %v1928 = vsel %vm1825, %v1797, 0
        %v1931 = vsel %vm1825, %v1798, 0
        %v1934 = vsel %vm1825, %v1799, 0
        %v1937 = vsel %vm1825, %v1800, 0
        %1939 = vmatprep.subr.bf16.mxu0 0
        %1940 = vmatpush1.bf16.xpose.msra.mxu0 %v1928
        %1941 = vmatprep.subr.bf16.mxu0 0
        %1942 = vmatpush1.bf16.xpose.msra.mxu0 %v1931
        %1943 = vmatprep.subr.bf16.mxu0 0
        %1944 = vmatpush1.bf16.xpose.msra.mxu0 %v1934
        %1945 = vmatprep.subr.bf16.mxu0 0
        %1946 = vmatpush1.bf16.xpose.msra.mxu0 %v1937
        %1947 = vmatprep.subr.bf16.mxu0 0
        %1948 = vmatpush1.bf16.xpose.msra.mxu0 0
        %1949 = vmatprep.subr.bf16.mxu0 0
        %1950 = vmatpush1.bf16.xpose.msra.mxu0 0
        %1951 = vmatprep.subr.bf16.mxu0 0
        %1952 = vmatpush1.bf16.xpose.msra.mxu0 0
        %1953 = vmatprep.subr.bf16.mxu0 0
        %1954 = vmatpush1.bf16.xpose.msra.mxu0 0
        %1955 = vmatprep.subr.bf16.mxu0 0
        %1956 = vmatpush1.bf16.xpose.msra.mxu0 0
        %1957 = vmatprep.subr.bf16.mxu0 0
        %1958 = vmatpush1.bf16.xpose.msra.mxu0 0
        %1959 = vmatprep.subr.bf16.mxu0 0
        %1960 = vmatpush1.bf16.xpose.msra.mxu0 0
        %1961 = vmatprep.subr.bf16.mxu0 0
        %1962 = vmatpush1.bf16.xpose.msra.mxu0 0
        %1963 = vmatprep.subr.bf16.mxu0 0
        %1964 = vmatpush1.bf16.xpose.msra.mxu0 0
        %1965 = vmatprep.subr.bf16.mxu0 0
        %1966 = vmatpush1.bf16.xpose.msra.mxu0 0
        %1967 = vmatprep.subr.bf16.mxu0 0
        %1968 = vmatpush1.bf16.xpose.msra.mxu0 0
        %1969 = vmatprep.subr.bf16.mxu0 0
        %1970 = vmatpush1.bf16.xpose.msra.mxu0 0
        %1971 = vmatprep.mubr.bf16.mxu0 0
        %1972 = vmatmul.mubr.bf16.gmra.mrb[0].mxu0 %v1916
        %v1973 = vpop.f32.mrb[0].mxu0
        %v1974 = vadd.f32 0.0, %v1973
        %v1975 = vpop.f32.mrb[0].mxu0
        %v1976 = vpop.f32.mrb[0].mxu0
        %v1977 = vadd.f32 0.0, %v1976
        %v1978 = vpop.f32.mrb[0].mxu0
        %1979 = vmatprep.mubr.bf16.mxu0 0
        %1980 = vmatmul.mubr.bf16.gmra.mrb[0].mxu0 %v1919
        %v1981 = vpop.f32.mrb[0].mxu0
        %v1982 = vadd.f32 0.0, %v1981
        %v1983 = vpop.f32.mrb[0].mxu0
        %v1984 = vpop.f32.mrb[0].mxu0
        %v1985 = vadd.f32 0.0, %v1984
        %v1986 = vpop.f32.mrb[0].mxu0
        %1987 = vmatprep.mubr.bf16.mxu0 0
        %1988 = vmatmul.mubr.bf16.gmra.mrb[0].mxu0 %v1922
        %v1989 = vpop.f32.mrb[0].mxu0
        %v1990 = vadd.f32 0.0, %v1989
        %v1991 = vpop.f32.mrb[0].mxu0
        %v1992 = vpop.f32.mrb[0].mxu0
        %v1993 = vadd.f32 0.0, %v1992
        %v1994 = vpop.f32.mrb[0].mxu0
        %1995 = vmatprep.mubr.bf16.mxu0 0
        %1996 = vmatmul.mubr.bf16.gmra.mrb[0].mxu0 %v1925
        %v1997 = vpop.f32.mrb[0].mxu0
        %v1998 = vadd.f32 0.0, %v1997
        %v1999 = vpop.f32.mrb[0].mxu0
        %v2000 = vpop.f32.mrb[0].mxu0
        %v2001 = vadd.f32 0.0, %v2000
        %v2002 = vpop.f32.mrb[0].mxu0
        %2003 = vdwg.mxu0
        %v2005 = vsel %vm1825, %v1785, 0
        %v2008 = vsel %vm1825, %v1786, 0
        %v2011 = vsel %vm1825, %v1787, 0
        %v2014 = vsel %vm1825, %v1788, 0
        %v2017 = vsel %vm1825, %v1801, 0
        %v2020 = vsel %vm1825, %v1802, 0
        %v2023 = vsel %vm1825, %v1803, 0
        %v2026 = vsel %vm1825, %v1804, 0
        %2028 = vmatprep.subr.bf16.mxu0 0
        %2029 = vmatpush1.bf16.xpose.msra.mxu0 %v2017
        %2030 = vmatprep.subr.bf16.mxu0 0
        %2031 = vmatpush1.bf16.xpose.msra.mxu0 %v2020
        %2032 = vmatprep.subr.bf16.mxu0 0
        %2033 = vmatpush1.bf16.xpose.msra.mxu0 %v2023
        %2034 = vmatprep.subr.bf16.mxu0 0
        %2035 = vmatpush1.bf16.xpose.msra.mxu0 %v2026
        %2036 = vmatprep.subr.bf16.mxu0 0
        %2037 = vmatpush1.bf16.xpose.msra.mxu0 0
        %2038 = vmatprep.subr.bf16.mxu0 0
        %2039 = vmatpush1.bf16.xpose.msra.mxu0 0
        %2040 = vmatprep.subr.bf16.mxu0 0
        %2041 = vmatpush1.bf16.xpose.msra.mxu0 0
        %2042 = vmatprep.subr.bf16.mxu0 0
        %2043 = vmatpush1.bf16.xpose.msra.mxu0 0
        %2044 = vmatprep.subr.bf16.mxu0 0
        %2045 = vmatpush1.bf16.xpose.msra.mxu0 0
        %2046 = vmatprep.subr.bf16.mxu0 0
        %2047 = vmatpush1.bf16.xpose.msra.mxu0 0
        %2048 = vmatprep.subr.bf16.mxu0 0
        %2049 = vmatpush1.bf16.xpose.msra.mxu0 0
        %2050 = vmatprep.subr.bf16.mxu0 0
        %2051 = vmatpush1.bf16.xpose.msra.mxu0 0
        %2052 = vmatprep.subr.bf16.mxu0 0
        %2053 = vmatpush1.bf16.xpose.msra.mxu0 0
        %2054 = vmatprep.subr.bf16.mxu0 0
        %2055 = vmatpush1.bf16.xpose.msra.mxu0 0
        %2056 = vmatprep.subr.bf16.mxu0 0
        %2057 = vmatpush1.bf16.xpose.msra.mxu0 0
        %2058 = vmatprep.subr.bf16.mxu0 0
        %2059 = vmatpush1.bf16.xpose.msra.mxu0 0
        %2060 = vmatprep.mubr.bf16.mxu0 0
        %2061 = vmatmul.mubr.bf16.gmra.mrb[0].mxu0 %v2005
        %v2062 = vpop.f32.mrb[0].mxu0
        %v2063 = vadd.f32 0.0, %v2062
        %v2064 = vpop.f32.mrb[0].mxu0
        %v2065 = vpop.f32.mrb[0].mxu0
        %v2066 = vadd.f32 0.0, %v2065
        %v2067 = vpop.f32.mrb[0].mxu0
        %2068 = vmatprep.mubr.bf16.mxu0 0
        %2069 = vmatmul.mubr.bf16.gmra.mrb[0].mxu0 %v2008
        %v2070 = vpop.f32.mrb[0].mxu0
        %v2071 = vadd.f32 0.0, %v2070
        %v2072 = vpop.f32.mrb[0].mxu0
        %v2073 = vpop.f32.mrb[0].mxu0
        %v2074 = vadd.f32 0.0, %v2073
        %v2075 = vpop.f32.mrb[0].mxu0
        %2076 = vmatprep.mubr.bf16.mxu0 0
        %2077 = vmatmul.mubr.bf16.gmra.mrb[0].mxu0 %v2011
        %v2078 = vpop.f32.mrb[0].mxu0
        %v2079 = vadd.f32 0.0, %v2078
        %v2080 = vpop.f32.mrb[0].mxu0
        %v2081 = vpop.f32.mrb[0].mxu0
        %v2082 = vadd.f32 0.0, %v2081
        %v2083 = vpop.f32.mrb[0].mxu0
        %2084 = vmatprep.mubr.bf16.mxu0 0
        %2085 = vmatmul.mubr.bf16.gmra.mrb[0].mxu0 %v2014
        %v2086 = vpop.f32.mrb[0].mxu0
        %v2087 = vadd.f32 0.0, %v2086
        %v2088 = vpop.f32.mrb[0].mxu0
        %v2089 = vpop.f32.mrb[0].mxu0
        %v2090 = vadd.f32 0.0, %v2089
        %v2091 = vpop.f32.mrb[0].mxu0
        %2092 = vdwg.mxu0
        %v2094 = vsel %vm1825, %v1789, 0
        %v2097 = vsel %vm1825, %v1790, 0
        %v2100 = vsel %vm1825, %v1791, 0
        %v2103 = vsel %vm1825, %v1792, 0
        %v2106 = vsel %vm1825, %v1805, 0
        %v2109 = vsel %vm1825, %v1806, 0
        %v2112 = vsel %vm1825, %v1807, 0
        %v2115 = vsel %vm1825, %v1808, 0
        %2117 = vmatprep.subr.bf16.mxu0 0
        %2118 = vmatpush1.bf16.xpose.msra.mxu0 %v2106
        %2119 = vmatprep.subr.bf16.mxu0 0
        %2120 = vmatpush1.bf16.xpose.msra.mxu0 %v2109
        %2121 = vmatprep.subr.bf16.mxu0 0
        %2122 = vmatpush1.bf16.xpose.msra.mxu0 %v2112
        %2123 = vmatprep.subr.bf16.mxu0 0
        %2124 = vmatpush1.bf16.xpose.msra.mxu0 %v2115
        %2125 = vmatprep.subr.bf16.mxu0 0
        %2126 = vmatpush1.bf16.xpose.msra.mxu0 0
        %2127 = vmatprep.subr.bf16.mxu0 0
        %2128 = vmatpush1.bf16.xpose.msra.mxu0 0
        %2129 = vmatprep.subr.bf16.mxu0 0
        %2130 = vmatpush1.bf16.xpose.msra.mxu0 0
        %2131 = vmatprep.subr.bf16.mxu0 0
        %2132 = vmatpush1.bf16.xpose.msra.mxu0 0
        %2133 = vmatprep.subr.bf16.mxu0 0
        %2134 = vmatpush1.bf16.xpose.msra.mxu0 0
        %2135 = vmatprep.subr.bf16.mxu0 0
        %2136 = vmatpush1.bf16.xpose.msra.mxu0 0
        %2137 = vmatprep.subr.bf16.mxu0 0
        %2138 = vmatpush1.bf16.xpose.msra.mxu0 0
        %2139 = vmatprep.subr.bf16.mxu0 0
        %2140 = vmatpush1.bf16.xpose.msra.mxu0 0
        %2141 = vmatprep.subr.bf16.mxu0 0
        %2142 = vmatpush1.bf16.xpose.msra.mxu0 0
        %2143 = vmatprep.subr.bf16.mxu0 0
        %2144 = vmatpush1.bf16.xpose.msra.mxu0 0
        %2145 = vmatprep.subr.bf16.mxu0 0
        %2146 = vmatpush1.bf16.xpose.msra.mxu0 0
        %2147 = vmatprep.subr.bf16.mxu0 0
        %2148 = vmatpush1.bf16.xpose.msra.mxu0 0
        %2149 = vmatprep.mubr.bf16.mxu0 0
        %2150 = vmatmul.mubr.bf16.gmra.mrb[0].mxu0 %v2094
        %v2151 = vpop.f32.mrb[0].mxu0
        %v2152 = vadd.f32 0.0, %v2151
        %v2153 = vpop.f32.mrb[0].mxu0
        %v2154 = vpop.f32.mrb[0].mxu0
        %v2155 = vadd.f32 0.0, %v2154
        %v2156 = vpop.f32.mrb[0].mxu0
        %2157 = vmatprep.mubr.bf16.mxu0 0
        %2158 = vmatmul.mubr.bf16.gmra.mrb[0].mxu0 %v2097
        %v2159 = vpop.f32.mrb[0].mxu0
        %v2160 = vadd.f32 0.0, %v2159
        %v2161 = vpop.f32.mrb[0].mxu0
        %v2162 = vpop.f32.mrb[0].mxu0
        %v2163 = vadd.f32 0.0, %v2162
        %v2164 = vpop.f32.mrb[0].mxu0
        %2165 = vmatprep.mubr.bf16.mxu0 0
        %2166 = vmatmul.mubr.bf16.gmra.mrb[0].mxu0 %v2100
        %v2167 = vpop.f32.mrb[0].mxu0
        %v2168 = vadd.f32 0.0, %v2167
        %v2169 = vpop.f32.mrb[0].mxu0
        %v2170 = vpop.f32.mrb[0].mxu0
        %v2171 = vadd.f32 0.0, %v2170
        %v2172 = vpop.f32.mrb[0].mxu0
        %2173 = vmatprep.mubr.bf16.mxu0 0
        %2174 = vmatmul.mubr.bf16.gmra.mrb[0].mxu0 %v2103
        %v2175 = vpop.f32.mrb[0].mxu0
        %v2176 = vadd.f32 0.0, %v2175
        %v2177 = vpop.f32.mrb[0].mxu0
        %v2178 = vpop.f32.mrb[0].mxu0
        %v2179 = vadd.f32 0.0, %v2178
        %v2180 = vpop.f32.mrb[0].mxu0
        %2181 = vdwg.mxu0
        %v2182 = vmul.f32 %v1885, 0.088388346
        %v2183 = vmul.f32 %v1888, 0.088388346
        %v2184 = vmul.f32 %v1893, 0.088388346
        %v2185 = vmul.f32 %v1896, 0.088388346
        %v2186 = vmul.f32 %v1901, 0.088388346
        %v2187 = vmul.f32 %v1904, 0.088388346
        %v2188 = vmul.f32 %v1909, 0.088388346
        %v2189 = vmul.f32 %v1912, 0.088388346
        %v2190 = vmul.f32 %v1974, 0.088388346
        %v2191 = vmul.f32 %v1977, 0.088388346
        %v2192 = vmul.f32 %v1982, 0.088388346
        %v2193 = vmul.f32 %v1985, 0.088388346
        %v2194 = vmul.f32 %v1990, 0.088388346
        %v2195 = vmul.f32 %v1993, 0.088388346
        %v2196 = vmul.f32 %v1998, 0.088388346
        %v2197 = vmul.f32 %v2001, 0.088388346
        %v2198 = vmul.f32 %v2063, 0.088388346
        %v2199 = vmul.f32 %v2066, 0.088388346
        %v2200 = vmul.f32 %v2071, 0.088388346
        %v2201 = vmul.f32 %v2074, 0.088388346
        %v2202 = vmul.f32 %v2079, 0.088388346
        %v2203 = vmul.f32 %v2082, 0.088388346
        %v2204 = vmul.f32 %v2087, 0.088388346
        %v2205 = vmul.f32 %v2090, 0.088388346
        %v2206 = vmul.f32 %v2152, 0.088388346
        %v2207 = vmul.f32 %v2155, 0.088388346
        %v2208 = vmul.f32 %v2160, 0.088388346
        %v2209 = vmul.f32 %v2163, 0.088388346
        %v2210 = vmul.f32 %v2168, 0.088388346
        %v2211 = vmul.f32 %v2171, 0.088388346
        %v2212 = vmul.f32 %v2176, 0.088388346
        %v2213 = vmul.f32 %v2179, 0.088388346
        %v2214 = vlaneseq
        %v2215 = vshrl.u32 %v2214, 7
        %v2216 = vadd.s32 %v2215, 8
        %v2217 = vadd.s32 %v2215, 16
        %v2218 = vadd.s32 %v2215, 24
        %v2219 = vadd.s32 %v2215, 32
        %v2220 = vadd.s32 %v2215, 40
        %v2221 = vadd.s32 %v2215, 48
        %v2222 = vadd.s32 %v2215, 56
        %v2223 = vlaneseq
        %v2224 = vand.u32 %v2223, 127
        %vm2225 = vcmp.ge.s32.totalorder %v2215, %v2224
        %vm2226 = vcmp.ge.s32.totalorder %v2216, %v2224
        %vm2227 = vcmp.ge.s32.totalorder %v2217, %v2224
        %vm2228 = vcmp.ge.s32.totalorder %v2218, %v2224
        %vm2229 = vcmp.ge.s32.totalorder %v2219, %v2224
        %vm2230 = vcmp.ge.s32.totalorder %v2220, %v2224
        %vm2231 = vcmp.ge.s32.totalorder %v2221, %v2224
        %vm2232 = vcmp.ge.s32.totalorder %v2222, %v2224
        %v2233 = vsel %vm2225, 1, 0
        %v2234 = vsel %vm2226, 1, 0
        %v2235 = vsel %vm2227, 1, 0
        %v2236 = vsel %vm2228, 1, 0
        %v2237 = vsel %vm2229, 1, 0
        %v2238 = vsel %vm2230, 1, 0
        %v2239 = vsel %vm2231, 1, 0
        %v2240 = vsel %vm2232, 1, 0
        %vm2241 = vcmp.eq.s32.totalorder %v2233, 1
        %vm2242 = vcmp.eq.s32.totalorder %v2234, 1
        %vm2243 = vcmp.eq.s32.totalorder %v2235, 1
        %vm2244 = vcmp.eq.s32.totalorder %v2236, 1
        %vm2245 = vcmp.eq.s32.totalorder %v2237, 1
        %vm2246 = vcmp.eq.s32.totalorder %v2238, 1
        %vm2247 = vcmp.eq.s32.totalorder %v2239, 1
        %vm2248 = vcmp.eq.s32.totalorder %v2240, 1
        %v2249 = vsel %vm2241, %v2182, -1e+30
        %v2250 = vsel %vm2242, %v2183, -1e+30
        %v2251 = vsel %vm2243, %v2184, -1e+30
        %v2252 = vsel %vm2244, %v2185, -1e+30
        %v2253 = vsel %vm2245, %v2186, -1e+30
        %v2254 = vsel %vm2246, %v2187, -1e+30
        %v2255 = vsel %vm2247, %v2188, -1e+30
        %v2256 = vsel %vm2248, %v2189, -1e+30
        %v2257 = vsel %vm2241, %v2190, -1e+30
        %v2258 = vsel %vm2242, %v2191, -1e+30
        %v2259 = vsel %vm2243, %v2192, -1e+30
        %v2260 = vsel %vm2244, %v2193, -1e+30
        %v2261 = vsel %vm2245, %v2194, -1e+30
        %v2262 = vsel %vm2246, %v2195, -1e+30
        %v2263 = vsel %vm2247, %v2196, -1e+30
        %v2264 = vsel %vm2248, %v2197, -1e+30
        %v2265 = vsel %vm2241, %v2198, -1e+30
        %v2266 = vsel %vm2242, %v2199, -1e+30
        %v2267 = vsel %vm2243, %v2200, -1e+30
        %v2268 = vsel %vm2244, %v2201, -1e+30
        %v2269 = vsel %vm2245, %v2202, -1e+30
        %v2270 = vsel %vm2246, %v2203, -1e+30
        %v2271 = vsel %vm2247, %v2204, -1e+30
        %v2272 = vsel %vm2248, %v2205, -1e+30
        %v2273 = vsel %vm2241, %v2206, -1e+30
        %v2274 = vsel %vm2242, %v2207, -1e+30
        %v2275 = vsel %vm2243, %v2208, -1e+30
        %v2276 = vsel %vm2244, %v2209, -1e+30
        %v2277 = vsel %vm2245, %v2210, -1e+30
        %v2278 = vsel %vm2246, %v2211, -1e+30
        %v2279 = vsel %vm2247, %v2212, -1e+30
        %v2280 = vsel %vm2248, %v2213, -1e+30
        %vm2281 = vcmask 523264
        %v2282 = vsel %vm2281, %v2249, -inf
        %2283 = vmax.xlane.f32.xlu0 %v2282
        %v2284 = vpop.xlane.xlu0 %2283
        %v2285 = vsel %vm2281, %v2250, -inf
        %2286 = vmax.xlane.f32.xlu0 %v2285
        %v2287 = vpop.xlane.xlu0 %2286
        %v2288 = vsel %vm2281, %v2251, -inf
        %2289 = vmax.xlane.f32.xlu0 %v2288
        %v2290 = vpop.xlane.xlu0 %2289
        %v2291 = vsel %vm2281, %v2252, -inf
        %2292 = vmax.xlane.f32.xlu0 %v2291
        %v2293 = vpop.xlane.xlu0 %2292
        %v2294 = vsel %vm2281, %v2253, -inf
        %2295 = vmax.xlane.f32.xlu0 %v2294
        %v2296 = vpop.xlane.xlu0 %2295
        %v2297 = vsel %vm2281, %v2254, -inf
        %2298 = vmax.xlane.f32.xlu0 %v2297
        %v2299 = vpop.xlane.xlu0 %2298
        %v2300 = vsel %vm2281, %v2255, -inf
        %2301 = vmax.xlane.f32.xlu0 %v2300
        %v2302 = vpop.xlane.xlu0 %2301
        %v2303 = vsel %vm2281, %v2256, -inf
        %2304 = vmax.xlane.f32.xlu0 %v2303
        %v2305 = vpop.xlane.xlu0 %2304
        %v2306 = vsel %vm2281, %v2257, -inf
        %2307 = vmax.xlane.f32.xlu0 %v2306
        %v2308 = vpop.xlane.xlu0 %2307
        %v2309 = vsel %vm2281, %v2258, -inf
        %2310 = vmax.xlane.f32.xlu0 %v2309
        %v2311 = vpop.xlane.xlu0 %2310
        %v2312 = vsel %vm2281, %v2259, -inf
        %2313 = vmax.xlane.f32.xlu0 %v2312
        %v2314 = vpop.xlane.xlu0 %2313
        %v2315 = vsel %vm2281, %v2260, -inf
        %2316 = vmax.xlane.f32.xlu0 %v2315
        %v2317 = vpop.xlane.xlu0 %2316
        %v2318 = vsel %vm2281, %v2261, -inf
        %2319 = vmax.xlane.f32.xlu0 %v2318
        %v2320 = vpop.xlane.xlu0 %2319
        %v2321 = vsel %vm2281, %v2262, -inf
        %2322 = vmax.xlane.f32.xlu0 %v2321
        %v2323 = vpop.xlane.xlu0 %2322
        %v2324 = vsel %vm2281, %v2263, -inf
        %2325 = vmax.xlane.f32.xlu0 %v2324
        %v2326 = vpop.xlane.xlu0 %2325
        %v2327 = vsel %vm2281, %v2264, -inf
        %2328 = vmax.xlane.f32.xlu0 %v2327
        %v2329 = vpop.xlane.xlu0 %2328
        %v2330 = vsel %vm2281, %v2265, -inf
        %2331 = vmax.xlane.f32.xlu0 %v2330
        %v2332 = vpop.xlane.xlu0 %2331
        %v2333 = vsel %vm2281, %v2266, -inf
        %2334 = vmax.xlane.f32.xlu0 %v2333
        %v2335 = vpop.xlane.xlu0 %2334
        %v2336 = vsel %vm2281, %v2267, -inf
        %2337 = vmax.xlane.f32.xlu0 %v2336
        %v2338 = vpop.xlane.xlu0 %2337
        %v2339 = vsel %vm2281, %v2268, -inf
        %2340 = vmax.xlane.f32.xlu0 %v2339
        %v2341 = vpop.xlane.xlu0 %2340
        %v2342 = vsel %vm2281, %v2269, -inf
        %2343 = vmax.xlane.f32.xlu0 %v2342
        %v2344 = vpop.xlane.xlu0 %2343
        %v2345 = vsel %vm2281, %v2270, -inf
        %2346 = vmax.xlane.f32.xlu0 %v2345
        %v2347 = vpop.xlane.xlu0 %2346
        %v2348 = vsel %vm2281, %v2271, -inf
        %2349 = vmax.xlane.f32.xlu0 %v2348
        %v2350 = vpop.xlane.xlu0 %2349
        %v2351 = vsel %vm2281, %v2272, -inf
        %2352 = vmax.xlane.f32.xlu0 %v2351
        %v2353 = vpop.xlane.xlu0 %2352
        %v2354 = vsel %vm2281, %v2273, -inf
        %2355 = vmax.xlane.f32.xlu0 %v2354
        %v2356 = vpop.xlane.xlu0 %2355
        %v2357 = vsel %vm2281, %v2274, -inf
        %2358 = vmax.xlane.f32.xlu0 %v2357
        %v2359 = vpop.xlane.xlu0 %2358
        %v2360 = vsel %vm2281, %v2275, -inf
        %2361 = vmax.xlane.f32.xlu0 %v2360
        %v2362 = vpop.xlane.xlu0 %2361
        %v2363 = vsel %vm2281, %v2276, -inf
        %2364 = vmax.xlane.f32.xlu0 %v2363
        %v2365 = vpop.xlane.xlu0 %2364
        %v2366 = vsel %vm2281, %v2277, -inf
        %2367 = vmax.xlane.f32.xlu0 %v2366
        %v2368 = vpop.xlane.xlu0 %2367
        %v2369 = vsel %vm2281, %v2278, -inf
        %2370 = vmax.xlane.f32.xlu0 %v2369
        %v2371 = vpop.xlane.xlu0 %2370
        %v2372 = vsel %vm2281, %v2279, -inf
        %2373 = vmax.xlane.f32.xlu0 %v2372
        %v2374 = vpop.xlane.xlu0 %2373
        %v2375 = vsel %vm2281, %v2280, -inf
        %2376 = vmax.xlane.f32.xlu0 %v2375
        %v2377 = vpop.xlane.xlu0 %2376
        %v2378 = vsub.f32 %v2249, %v2284
        %v2379 = vsub.f32 %v2250, %v2287
        %v2380 = vsub.f32 %v2251, %v2290
        %v2381 = vsub.f32 %v2252, %v2293
        %v2382 = vsub.f32 %v2253, %v2296
        %v2383 = vsub.f32 %v2254, %v2299
        %v2384 = vsub.f32 %v2255, %v2302
        %v2385 = vsub.f32 %v2256, %v2305
        %v2386 = vsub.f32 %v2257, %v2308
        %v2387 = vsub.f32 %v2258, %v2311
        %v2388 = vsub.f32 %v2259, %v2314
        %v2389 = vsub.f32 %v2260, %v2317
        %v2390 = vsub.f32 %v2261, %v2320
        %v2391 = vsub.f32 %v2262, %v2323
        %v2392 = vsub.f32 %v2263, %v2326
        %v2393 = vsub.f32 %v2264, %v2329
        %v2394 = vsub.f32 %v2265, %v2332
        %v2395 = vsub.f32 %v2266, %v2335
        %v2396 = vsub.f32 %v2267, %v2338
        %v2397 = vsub.f32 %v2268, %v2341
        %v2398 = vsub.f32 %v2269, %v2344
        %v2399 = vsub.f32 %v2270, %v2347
        %v2400 = vsub.f32 %v2271, %v2350
        %v2401 = vsub.f32 %v2272, %v2353
        %v2402 = vsub.f32 %v2273, %v2356
        %v2403 = vsub.f32 %v2274, %v2359
        %v2404 = vsub.f32 %v2275, %v2362
        %v2405 = vsub.f32 %v2276, %v2365
        %v2406 = vsub.f32 %v2277, %v2368
        %v2407 = vsub.f32 %v2278, %v2371
        %v2408 = vsub.f32 %v2279, %v2374
        %v2409 = vsub.f32 %v2280, %v2377
        %v2410 = vmul.f32 %v2378, 1.442695
        %v2411 = vpow.pop %v2410
        %v2412 = vmul.f32 %v2379, 1.442695
        %v2413 = vpow.pop %v2412
        %v2414 = vmul.f32 %v2380, 1.442695
        %v2415 = vpow.pop %v2414
        %v2416 = vmul.f32 %v2381, 1.442695
        %v2417 = vpow.pop %v2416
        %v2418 = vmul.f32 %v2382, 1.442695
        %v2419 = vpow.pop %v2418
        %v2420 = vmul.f32 %v2383, 1.442695
        %v2421 = vpow.pop %v2420
        %v2422 = vmul.f32 %v2384, 1.442695
        %v2423 = vpow.pop %v2422
        %v2424 = vmul.f32 %v2385, 1.442695
        %v2425 = vpow.pop %v2424
        %v2426 = vmul.f32 %v2386, 1.442695
        %v2427 = vpow.pop %v2426
        %v2428 = vmul.f32 %v2387, 1.442695
        %v2429 = vpow.pop %v2428
        %v2430 = vmul.f32 %v2388, 1.442695
        %v2431 = vpow.pop %v2430
        %v2432 = vmul.f32 %v2389, 1.442695
        %v2433 = vpow.pop %v2432
        %v2434 = vmul.f32 %v2390, 1.442695
        %v2435 = vpow.pop %v2434
        %v2436 = vmul.f32 %v2391, 1.442695
        %v2437 = vpow.pop %v2436
        %v2438 = vmul.f32 %v2392, 1.442695
        %v2439 = vpow.pop %v2438
        %v2440 = vmul.f32 %v2393, 1.442695
        %v2441 = vpow.pop %v2440
        %v2442 = vmul.f32 %v2394, 1.442695
        %v2443 = vpow.pop %v2442
        %v2444 = vmul.f32 %v2395, 1.442695
        %v2445 = vpow.pop %v2444
        %v2446 = vmul.f32 %v2396, 1.442695
        %v2447 = vpow.pop %v2446
        %v2448 = vmul.f32 %v2397, 1.442695
        %v2449 = vpow.pop %v2448
        %v2450 = vmul.f32 %v2398, 1.442695
        %v2451 = vpow.pop %v2450
        %v2452 = vmul.f32 %v2399, 1.442695
        %v2453 = vpow.pop %v2452
        %v2454 = vmul.f32 %v2400, 1.442695
        %v2455 = vpow.pop %v2454
        %v2456 = vmul.f32 %v2401, 1.442695
        %v2457 = vpow.pop %v2456
        %v2458 = vmul.f32 %v2402, 1.442695
        %v2459 = vpow.pop %v2458
        %v2460 = vmul.f32 %v2403, 1.442695
        %v2461 = vpow.pop %v2460
        %v2462 = vmul.f32 %v2404, 1.442695
        %v2463 = vpow.pop %v2462
        %v2464 = vmul.f32 %v2405, 1.442695
        %v2465 = vpow.pop %v2464
        %v2466 = vmul.f32 %v2406, 1.442695
        %v2467 = vpow.pop %v2466
        %v2468 = vmul.f32 %v2407, 1.442695
        %v2469 = vpow.pop %v2468
        %v2470 = vmul.f32 %v2408, 1.442695
        %v2471 = vpow.pop %v2470
        %v2472 = vmul.f32 %v2409, 1.442695
        %v2473 = vpow.pop %v2472
        %v2474 = vsel %vm2281, %v2411, 0.0
        %2475 = vadd.xlane.f32.xlu0 %v2474
        %v2476 = vpop.xlane.xlu0 %2475
        %v2477 = vsel %vm2281, %v2413, 0.0
        %2478 = vadd.xlane.f32.xlu0 %v2477
        %v2479 = vpop.xlane.xlu0 %2478
        %v2480 = vsel %vm2281, %v2415, 0.0
        %2481 = vadd.xlane.f32.xlu0 %v2480
        %v2482 = vpop.xlane.xlu0 %2481
        %v2483 = vsel %vm2281, %v2417, 0.0
        %2484 = vadd.xlane.f32.xlu0 %v2483
        %v2485 = vpop.xlane.xlu0 %2484
        %v2486 = vsel %vm2281, %v2419, 0.0
        %2487 = vadd.xlane.f32.xlu0 %v2486
        %v2488 = vpop.xlane.xlu0 %2487
        %v2489 = vsel %vm2281, %v2421, 0.0
        %2490 = vadd.xlane.f32.xlu0 %v2489
        %v2491 = vpop.xlane.xlu0 %2490
        %v2492 = vsel %vm2281, %v2423, 0.0
        %2493 = vadd.xlane.f32.xlu0 %v2492
        %v2494 = vpop.xlane.xlu0 %2493
        %v2495 = vsel %vm2281, %v2425, 0.0
        %2496 = vadd.xlane.f32.xlu0 %v2495
        %v2497 = vpop.xlane.xlu0 %2496
        %v2498 = vsel %vm2281, %v2427, 0.0
        %2499 = vadd.xlane.f32.xlu0 %v2498
        %v2500 = vpop.xlane.xlu0 %2499
        %v2501 = vsel %vm2281, %v2429, 0.0
        %2502 = vadd.xlane.f32.xlu0 %v2501
        %v2503 = vpop.xlane.xlu0 %2502
        %v2504 = vsel %vm2281, %v2431, 0.0
        %2505 = vadd.xlane.f32.xlu0 %v2504
        %v2506 = vpop.xlane.xlu0 %2505
        %v2507 = vsel %vm2281, %v2433, 0.0
        %2508 = vadd.xlane.f32.xlu0 %v2507
        %v2509 = vpop.xlane.xlu0 %2508
        %v2510 = vsel %vm2281, %v2435, 0.0
        %2511 = vadd.xlane.f32.xlu0 %v2510
        %v2512 = vpop.xlane.xlu0 %2511
        %v2513 = vsel %vm2281, %v2437, 0.0
        %2514 = vadd.xlane.f32.xlu0 %v2513
        %v2515 = vpop.xlane.xlu0 %2514
        %v2516 = vsel %vm2281, %v2439, 0.0
        %2517 = vadd.xlane.f32.xlu0 %v2516
        %v2518 = vpop.xlane.xlu0 %2517
        %v2519 = vsel %vm2281, %v2441, 0.0
        %2520 = vadd.xlane.f32.xlu0 %v2519
        %v2521 = vpop.xlane.xlu0 %2520
        %v2522 = vsel %vm2281, %v2443, 0.0
        %2523 = vadd.xlane.f32.xlu0 %v2522
        %v2524 = vpop.xlane.xlu0 %2523
        %v2525 = vsel %vm2281, %v2445, 0.0
        %2526 = vadd.xlane.f32.xlu0 %v2525
        %v2527 = vpop.xlane.xlu0 %2526
        %v2528 = vsel %vm2281, %v2447, 0.0
        %2529 = vadd.xlane.f32.xlu0 %v2528
        %v2530 = vpop.xlane.xlu0 %2529
        %v2531 = vsel %vm2281, %v2449, 0.0
        %2532 = vadd.xlane.f32.xlu0 %v2531
        %v2533 = vpop.xlane.xlu0 %2532
        %v2534 = vsel %vm2281, %v2451, 0.0
        %2535 = vadd.xlane.f32.xlu0 %v2534
        %v2536 = vpop.xlane.xlu0 %2535
        %v2537 = vsel %vm2281, %v2453, 0.0
        %2538 = vadd.xlane.f32.xlu0 %v2537
        %v2539 = vpop.xlane.xlu0 %2538
        %v2540 = vsel %vm2281, %v2455, 0.0
        %2541 = vadd.xlane.f32.xlu0 %v2540
        %v2542 = vpop.xlane.xlu0 %2541
        %v2543 = vsel %vm2281, %v2457, 0.0
        %2544 = vadd.xlane.f32.xlu0 %v2543
        %v2545 = vpop.xlane.xlu0 %2544
        %v2546 = vsel %vm2281, %v2459, 0.0
        %2547 = vadd.xlane.f32.xlu0 %v2546
        %v2548 = vpop.xlane.xlu0 %2547
        %v2549 = vsel %vm2281, %v2461, 0.0
        %2550 = vadd.xlane.f32.xlu0 %v2549
        %v2551 = vpop.xlane.xlu0 %2550
        %v2552 = vsel %vm2281, %v2463, 0.0
        %2553 = vadd.xlane.f32.xlu0 %v2552
        %v2554 = vpop.xlane.xlu0 %2553
        %v2555 = vsel %vm2281, %v2465, 0.0
        %2556 = vadd.xlane.f32.xlu0 %v2555
        %v2557 = vpop.xlane.xlu0 %2556
        %v2558 = vsel %vm2281, %v2467, 0.0
        %2559 = vadd.xlane.f32.xlu0 %v2558
        %v2560 = vpop.xlane.xlu0 %2559
        %v2561 = vsel %vm2281, %v2469, 0.0
        %2562 = vadd.xlane.f32.xlu0 %v2561
        %v2563 = vpop.xlane.xlu0 %2562
        %v2564 = vsel %vm2281, %v2471, 0.0
        %2565 = vadd.xlane.f32.xlu0 %v2564
        %v2566 = vpop.xlane.xlu0 %2565
        %v2567 = vsel %vm2281, %v2473, 0.0
        %2568 = vadd.xlane.f32.xlu0 %v2567
        %v2569 = vpop.xlane.xlu0 %2568
        %v2570 = vrcp.pop %v2476
        %v2571 = vrcp.pop %v2479
        %v2572 = vrcp.pop %v2482
        %v2573 = vrcp.pop %v2485
        %v2574 = vrcp.pop %v2488
        %v2575 = vrcp.pop %v2491
        %v2576 = vrcp.pop %v2494
        %v2577 = vrcp.pop %v2497
        %v2578 = vrcp.pop %v2500
        %v2579 = vrcp.pop %v2503
        %v2580 = vrcp.pop %v2506
        %v2581 = vrcp.pop %v2509
        %v2582 = vrcp.pop %v2512
        %v2583 = vrcp.pop %v2515
        %v2584 = vrcp.pop %v2518
        %v2585 = vrcp.pop %v2521
        %v2586 = vrcp.pop %v2524
        %v2587 = vrcp.pop %v2527
        %v2588 = vrcp.pop %v2530
        %v2589 = vrcp.pop %v2533
        %v2590 = vrcp.pop %v2536
        %v2591 = vrcp.pop %v2539
        %v2592 = vrcp.pop %v2542
        %v2593 = vrcp.pop %v2545
        %v2594 = vrcp.pop %v2548
        %v2595 = vrcp.pop %v2551
        %v2596 = vrcp.pop %v2554
        %v2597 = vrcp.pop %v2557
        %v2598 = vrcp.pop %v2560
        %v2599 = vrcp.pop %v2563
        %v2600 = vrcp.pop %v2566
        %v2601 = vrcp.pop %v2569
        %v2602 = vmul.f32 %v2411, %v2570
        %v2603 = vmul.f32 %v2413, %v2571
        %v2604 = vmul.f32 %v2415, %v2572
        %v2605 = vmul.f32 %v2417, %v2573
        %v2606 = vmul.f32 %v2419, %v2574
        %v2607 = vmul.f32 %v2421, %v2575
        %v2608 = vmul.f32 %v2423, %v2576
        %v2609 = vmul.f32 %v2425, %v2577
        %v2610 = vmul.f32 %v2427, %v2578
        %v2611 = vmul.f32 %v2429, %v2579
        %v2612 = vmul.f32 %v2431, %v2580
        %v2613 = vmul.f32 %v2433, %v2581
        %v2614 = vmul.f32 %v2435, %v2582
        %v2615 = vmul.f32 %v2437, %v2583
        %v2616 = vmul.f32 %v2439, %v2584
        %v2617 = vmul.f32 %v2441, %v2585
        %v2618 = vmul.f32 %v2443, %v2586
        %v2619 = vmul.f32 %v2445, %v2587
        %v2620 = vmul.f32 %v2447, %v2588
        %v2621 = vmul.f32 %v2449, %v2589
        %v2622 = vmul.f32 %v2451, %v2590
        %v2623 = vmul.f32 %v2453, %v2591
        %v2624 = vmul.f32 %v2455, %v2592
        %v2625 = vmul.f32 %v2457, %v2593
        %v2626 = vmul.f32 %v2459, %v2594
        %v2627 = vmul.f32 %v2461, %v2595
        %v2628 = vmul.f32 %v2463, %v2596
        %v2629 = vmul.f32 %v2465, %v2597
        %v2630 = vmul.f32 %v2467, %v2598
        %v2631 = vmul.f32 %v2469, %v2599
        %v2632 = vmul.f32 %v2471, %v2600
        %v2633 = vmul.f32 %v2473, %v2601
        %v2634 = vpack.c.bf16 %v2603, %v2602
        %v2635 = vpack.c.bf16 %v2605, %v2604
        %v2636 = vpack.c.bf16 %v2607, %v2606
        %v2637 = vpack.c.bf16 %v2609, %v2608
        %v2638 = vpack.c.bf16 %v2611, %v2610
        %v2639 = vpack.c.bf16 %v2613, %v2612
        %v2640 = vpack.c.bf16 %v2615, %v2614
        %v2641 = vpack.c.bf16 %v2617, %v2616
        %v2642 = vpack.c.bf16 %v2619, %v2618
        %v2643 = vpack.c.bf16 %v2621, %v2620
        %v2644 = vpack.c.bf16 %v2623, %v2622
        %v2645 = vpack.c.bf16 %v2625, %v2624
        %v2646 = vpack.c.bf16 %v2627, %v2626
        %v2647 = vpack.c.bf16 %v2629, %v2628
        %v2648 = vpack.c.bf16 %v2631, %v2630
        %v2649 = vpack.c.bf16 %v2633, %v2632
        %v2651 = vsel %vm2281, %v2634, 0
        %v2654 = vsel %vm2281, %v2635, 0
        %v2657 = vsel %vm2281, %v2636, 0
        %v2660 = vsel %vm2281, %v2637, 0
        %2662 = vmatprep.subr.bf16.mxu0 0
        %2663 = vmatpush1.bf16.msra.mxu0 %v1809
        %2664 = vmatprep.subr.bf16.mxu0 0
        %2665 = vmatpush1.bf16.msra.mxu0 %v1810
        %2666 = vmatprep.subr.bf16.mxu0 0
        %2667 = vmatpush1.bf16.msra.mxu0 %v1811
        %2668 = vmatprep.subr.bf16.mxu0 0
        %2669 = vmatpush1.bf16.msra.mxu0 %v1812
        %2670 = vmatprep.subr.bf16.mxu0 0
        %2671 = vmatpush1.bf16.msra.mxu0 0
        %2672 = vmatprep.subr.bf16.mxu0 0
        %2673 = vmatpush1.bf16.msra.mxu0 0
        %2674 = vmatprep.subr.bf16.mxu0 0
        %2675 = vmatpush1.bf16.msra.mxu0 0
        %2676 = vmatprep.subr.bf16.mxu0 0
        %2677 = vmatpush1.bf16.msra.mxu0 0
        %2678 = vmatprep.subr.bf16.mxu0 0
        %2679 = vmatpush1.bf16.msra.mxu0 0
        %2680 = vmatprep.subr.bf16.mxu0 0
        %2681 = vmatpush1.bf16.msra.mxu0 0
        %2682 = vmatprep.subr.bf16.mxu0 0
        %2683 = vmatpush1.bf16.msra.mxu0 0
        %2684 = vmatprep.subr.bf16.mxu0 0
        %2685 = vmatpush1.bf16.msra.mxu0 0
        %2686 = vmatprep.subr.bf16.mxu0 0
        %2687 = vmatpush1.bf16.msra.mxu0 0
        %2688 = vmatprep.subr.bf16.mxu0 0
        %2689 = vmatpush1.bf16.msra.mxu0 0
        %2690 = vmatprep.subr.bf16.mxu0 0
        %2691 = vmatpush1.bf16.msra.mxu0 0
        %2692 = vmatprep.subr.bf16.mxu0 0
        %2693 = vmatpush1.bf16.msra.mxu0 0
        %2694 = vmatprep.mubr.bf16.mxu0 0
        %2695 = vmatmul.mubr.bf16.gmra.mrb[0].mxu0 %v2651
        %v2696 = vpop.f32.mrb[0].mxu0
        %v2697 = vadd.f32 0.0, %v2696
        %v2698 = vpop.f32.mrb[0].mxu0
        %v2699 = vpop.f32.mrb[0].mxu0
        %v2700 = vadd.f32 0.0, %v2699
        %v2701 = vpop.f32.mrb[0].mxu0
        %2702 = vmatprep.mubr.bf16.mxu0 0
        %2703 = vmatmul.mubr.bf16.gmra.mrb[0].mxu0 %v2654
        %v2704 = vpop.f32.mrb[0].mxu0
        %v2705 = vadd.f32 0.0, %v2704
        %v2706 = vpop.f32.mrb[0].mxu0
        %v2707 = vpop.f32.mrb[0].mxu0
        %v2708 = vadd.f32 0.0, %v2707
        %v2709 = vpop.f32.mrb[0].mxu0
        %2710 = vmatprep.mubr.bf16.mxu0 0
        %2711 = vmatmul.mubr.bf16.gmra.mrb[0].mxu0 %v2657
        %v2712 = vpop.f32.mrb[0].mxu0
        %v2713 = vadd.f32 0.0, %v2712
        %v2714 = vpop.f32.mrb[0].mxu0
        %v2715 = vpop.f32.mrb[0].mxu0
        %v2716 = vadd.f32 0.0, %v2715
        %v2717 = vpop.f32.mrb[0].mxu0
        %2718 = vmatprep.mubr.bf16.mxu0 0
        %2719 = vmatmul.mubr.bf16.gmra.mrb[0].mxu0 %v2660
        %v2720 = vpop.f32.mrb[0].mxu0
        %v2721 = vadd.f32 0.0, %v2720
        %v2722 = vpop.f32.mrb[0].mxu0
        %v2723 = vpop.f32.mrb[0].mxu0
        %v2724 = vadd.f32 0.0, %v2723
        %v2725 = vpop.f32.mrb[0].mxu0
        %2726 = vdwg.mxu0
        %v2728 = vsel %vm2281, %v2638, 0
        %v2731 = vsel %vm2281, %v2639, 0
        %v2734 = vsel %vm2281, %v2640, 0
        %v2737 = vsel %vm2281, %v2641, 0
        %2739 = vmatprep.subr.bf16.mxu0 0
        %2740 = vmatpush1.bf16.msra.mxu0 %v1813
        %2741 = vmatprep.subr.bf16.mxu0 0
        %2742 = vmatpush1.bf16.msra.mxu0 %v1814
        %2743 = vmatprep.subr.bf16.mxu0 0
        %2744 = vmatpush1.bf16.msra.mxu0 %v1815
        %2745 = vmatprep.subr.bf16.mxu0 0
        %2746 = vmatpush1.bf16.msra.mxu0 %v1816
        %2747 = vmatprep.subr.bf16.mxu0 0
        %2748 = vmatpush1.bf16.msra.mxu0 0
        %2749 = vmatprep.subr.bf16.mxu0 0
        %2750 = vmatpush1.bf16.msra.mxu0 0
        %2751 = vmatprep.subr.bf16.mxu0 0
        %2752 = vmatpush1.bf16.msra.mxu0 0
        %2753 = vmatprep.subr.bf16.mxu0 0
        %2754 = vmatpush1.bf16.msra.mxu0 0
        %2755 = vmatprep.subr.bf16.mxu0 0
        %2756 = vmatpush1.bf16.msra.mxu0 0
        %2757 = vmatprep.subr.bf16.mxu0 0
        %2758 = vmatpush1.bf16.msra.mxu0 0
        %2759 = vmatprep.subr.bf16.mxu0 0
        %2760 = vmatpush1.bf16.msra.mxu0 0
        %2761 = vmatprep.subr.bf16.mxu0 0
        %2762 = vmatpush1.bf16.msra.mxu0 0
        %2763 = vmatprep.subr.bf16.mxu0 0
        %2764 = vmatpush1.bf16.msra.mxu0 0
        %2765 = vmatprep.subr.bf16.mxu0 0
        %2766 = vmatpush1.bf16.msra.mxu0 0
        %2767 = vmatprep.subr.bf16.mxu0 0
        %2768 = vmatpush1.bf16.msra.mxu0 0
        %2769 = vmatprep.subr.bf16.mxu0 0
        %2770 = vmatpush1.bf16.msra.mxu0 0
        %2771 = vmatprep.mubr.bf16.mxu0 0
        %2772 = vmatmul.mubr.bf16.gmra.mrb[0].mxu0 %v2728
        %v2773 = vpop.f32.mrb[0].mxu0
        %v2774 = vadd.f32 0.0, %v2773
        %v2775 = vpop.f32.mrb[0].mxu0
        %v2776 = vpop.f32.mrb[0].mxu0
        %v2777 = vadd.f32 0.0, %v2776
        %v2778 = vpop.f32.mrb[0].mxu0
        %2779 = vmatprep.mubr.bf16.mxu0 0
        %2780 = vmatmul.mubr.bf16.gmra.mrb[0].mxu0 %v2731
        %v2781 = vpop.f32.mrb[0].mxu0
        %v2782 = vadd.f32 0.0, %v2781
        %v2783 = vpop.f32.mrb[0].mxu0
        %v2784 = vpop.f32.mrb[0].mxu0
        %v2785 = vadd.f32 0.0, %v2784
        %v2786 = vpop.f32.mrb[0].mxu0
        %2787 = vmatprep.mubr.bf16.mxu0 0
        %2788 = vmatmul.mubr.bf16.gmra.mrb[0].mxu0 %v2734
        %v2789 = vpop.f32.mrb[0].mxu0
        %v2790 = vadd.f32 0.0, %v2789
        %v2791 = vpop.f32.mrb[0].mxu0
        %v2792 = vpop.f32.mrb[0].mxu0
        %v2793 = vadd.f32 0.0, %v2792
        %v2794 = vpop.f32.mrb[0].mxu0
        %2795 = vmatprep.mubr.bf16.mxu0 0
        %2796 = vmatmul.mubr.bf16.gmra.mrb[0].mxu0 %v2737
        %v2797 = vpop.f32.mrb[0].mxu0
        %v2798 = vadd.f32 0.0, %v2797
        %v2799 = vpop.f32.mrb[0].mxu0
        %v2800 = vpop.f32.mrb[0].mxu0
        %v2801 = vadd.f32 0.0, %v2800
        %v2802 = vpop.f32.mrb[0].mxu0
        %2803 = vdwg.mxu0
        %v2805 = vsel %vm2281, %v2642, 0
        %v2808 = vsel %vm2281, %v2643, 0
        %v2811 = vsel %vm2281, %v2644, 0
        %v2814 = vsel %vm2281, %v2645, 0
        %2816 = vmatprep.subr.bf16.mxu0 0
        %2817 = vmatpush1.bf16.msra.mxu0 %v1817
        %2818 = vmatprep.subr.bf16.mxu0 0
        %2819 = vmatpush1.bf16.msra.mxu0 %v1818
        %2820 = vmatprep.subr.bf16.mxu0 0
        %2821 = vmatpush1.bf16.msra.mxu0 %v1819
        %2822 = vmatprep.subr.bf16.mxu0 0
        %2823 = vmatpush1.bf16.msra.mxu0 %v1820
        %2824 = vmatprep.subr.bf16.mxu0 0
        %2825 = vmatpush1.bf16.msra.mxu0 0
        %2826 = vmatprep.subr.bf16.mxu0 0
        %2827 = vmatpush1.bf16.msra.mxu0 0
        %2828 = vmatprep.subr.bf16.mxu0 0
        %2829 = vmatpush1.bf16.msra.mxu0 0
        %2830 = vmatprep.subr.bf16.mxu0 0
        %2831 = vmatpush1.bf16.msra.mxu0 0
        %2832 = vmatprep.subr.bf16.mxu0 0
        %2833 = vmatpush1.bf16.msra.mxu0 0
        %2834 = vmatprep.subr.bf16.mxu0 0
        %2835 = vmatpush1.bf16.msra.mxu0 0
        %2836 = vmatprep.subr.bf16.mxu0 0
        %2837 = vmatpush1.bf16.msra.mxu0 0
        %2838 = vmatprep.subr.bf16.mxu0 0
        %2839 = vmatpush1.bf16.msra.mxu0 0
        %2840 = vmatprep.subr.bf16.mxu0 0
        %2841 = vmatpush1.bf16.msra.mxu0 0
        %2842 = vmatprep.subr.bf16.mxu0 0
        %2843 = vmatpush1.bf16.msra.mxu0 0
        %2844 = vmatprep.subr.bf16.mxu0 0
        %2845 = vmatpush1.bf16.msra.mxu0 0
        %2846 = vmatprep.subr.bf16.mxu0 0
        %2847 = vmatpush1.bf16.msra.mxu0 0
        %2848 = vmatprep.mubr.bf16.mxu0 0
        %2849 = vmatmul.mubr.bf16.gmra.mrb[0].mxu0 %v2805
        %v2850 = vpop.f32.mrb[0].mxu0
        %v2851 = vadd.f32 0.0, %v2850
        %v2852 = vpop.f32.mrb[0].mxu0
        %v2853 = vpop.f32.mrb[0].mxu0
        %v2854 = vadd.f32 0.0, %v2853
        %v2855 = vpop.f32.mrb[0].mxu0
        %2856 = vmatprep.mubr.bf16.mxu0 0
        %2857 = vmatmul.mubr.bf16.gmra.mrb[0].mxu0 %v2808
        %v2858 = vpop.f32.mrb[0].mxu0
        %v2859 = vadd.f32 0.0, %v2858
        %v2860 = vpop.f32.mrb[0].mxu0
        %v2861 = vpop.f32.mrb[0].mxu0
        %v2862 = vadd.f32 0.0, %v2861
        %v2863 = vpop.f32.mrb[0].mxu0
        %2864 = vmatprep.mubr.bf16.mxu0 0
        %2865 = vmatmul.mubr.bf16.gmra.mrb[0].mxu0 %v2811
        %v2866 = vpop.f32.mrb[0].mxu0
        %v2867 = vadd.f32 0.0, %v2866
        %v2868 = vpop.f32.mrb[0].mxu0
        %v2869 = vpop.f32.mrb[0].mxu0
        %v2870 = vadd.f32 0.0, %v2869
        %v2871 = vpop.f32.mrb[0].mxu0
        %2872 = vmatprep.mubr.bf16.mxu0 0
        %2873 = vmatmul.mubr.bf16.gmra.mrb[0].mxu0 %v2814
        %v2874 = vpop.f32.mrb[0].mxu0
        %v2875 = vadd.f32 0.0, %v2874
        %v2876 = vpop.f32.mrb[0].mxu0
        %v2877 = vpop.f32.mrb[0].mxu0
        %v2878 = vadd.f32 0.0, %v2877
        %v2879 = vpop.f32.mrb[0].mxu0
        %2880 = vdwg.mxu0
        %v2882 = vsel %vm2281, %v2646, 0
        %v2885 = vsel %vm2281, %v2647, 0
        %v2888 = vsel %vm2281, %v2648, 0
        %v2891 = vsel %vm2281, %v2649, 0
        %2893 = vmatprep.subr.bf16.mxu0 0
        %2894 = vmatpush1.bf16.msra.mxu0 %v1821
        %2895 = vmatprep.subr.bf16.mxu0 0
        %2896 = vmatpush1.bf16.msra.mxu0 %v1822
        %2897 = vmatprep.subr.bf16.mxu0 0
        %2898 = vmatpush1.bf16.msra.mxu0 %v1823
        %2899 = vmatprep.subr.bf16.mxu0 0
        %2900 = vmatpush1.bf16.msra.mxu0 %v1824
        %2901 = vmatprep.subr.bf16.mxu0 0
        %2902 = vmatpush1.bf16.msra.mxu0 0
        %2903 = vmatprep.subr.bf16.mxu0 0
        %2904 = vmatpush1.bf16.msra.mxu0 0
        %2905 = vmatprep.subr.bf16.mxu0 0
        %2906 = vmatpush1.bf16.msra.mxu0 0
        %2907 = vmatprep.subr.bf16.mxu0 0
        %2908 = vmatpush1.bf16.msra.mxu0 0
        %2909 = vmatprep.subr.bf16.mxu0 0
        %2910 = vmatpush1.bf16.msra.mxu0 0
        %2911 = vmatprep.subr.bf16.mxu0 0
        %2912 = vmatpush1.bf16.msra.mxu0 0
        %2913 = vmatprep.subr.bf16.mxu0 0
        %2914 = vmatpush1.bf16.msra.mxu0 0
        %2915 = vmatprep.subr.bf16.mxu0 0
        %2916 = vmatpush1.bf16.msra.mxu0 0
        %2917 = vmatprep.subr.bf16.mxu0 0
        %2918 = vmatpush1.bf16.msra.mxu0 0
        %2919 = vmatprep.subr.bf16.mxu0 0
        %2920 = vmatpush1.bf16.msra.mxu0 0
        %2921 = vmatprep.subr.bf16.mxu0 0
        %2922 = vmatpush1.bf16.msra.mxu0 0
        %2923 = vmatprep.subr.bf16.mxu0 0
        %2924 = vmatpush1.bf16.msra.mxu0 0
        %2925 = vmatprep.mubr.bf16.mxu0 0
        %2926 = vmatmul.mubr.bf16.gmra.mrb[0].mxu0 %v2882
        %v2927 = vpop.f32.mrb[0].mxu0
        %v2928 = vadd.f32 0.0, %v2927
        %v2929 = vpop.f32.mrb[0].mxu0
        %v2930 = vpop.f32.mrb[0].mxu0
        %v2931 = vadd.f32 0.0, %v2930
        %v2932 = vpop.f32.mrb[0].mxu0
        %2933 = vmatprep.mubr.bf16.mxu0 0
        %2934 = vmatmul.mubr.bf16.gmra.mrb[0].mxu0 %v2885
        %v2935 = vpop.f32.mrb[0].mxu0
        %v2936 = vadd.f32 0.0, %v2935
        %v2937 = vpop.f32.mrb[0].mxu0
        %v2938 = vpop.f32.mrb[0].mxu0
        %v2939 = vadd.f32 0.0, %v2938
        %v2940 = vpop.f32.mrb[0].mxu0
        %2941 = vmatprep.mubr.bf16.mxu0 0
        %2942 = vmatmul.mubr.bf16.gmra.mrb[0].mxu0 %v2888
        %v2943 = vpop.f32.mrb[0].mxu0
        %v2944 = vadd.f32 0.0, %v2943
        %v2945 = vpop.f32.mrb[0].mxu0
        %v2946 = vpop.f32.mrb[0].mxu0
        %v2947 = vadd.f32 0.0, %v2946
        %v2948 = vpop.f32.mrb[0].mxu0
        %2949 = vmatprep.mubr.bf16.mxu0 0
        %2950 = vmatmul.mubr.bf16.gmra.mrb[0].mxu0 %v2891
        %v2951 = vpop.f32.mrb[0].mxu0
        %v2952 = vadd.f32 0.0, %v2951
        %v2953 = vpop.f32.mrb[0].mxu0
        %v2954 = vpop.f32.mrb[0].mxu0
        %v2955 = vadd.f32 0.0, %v2954
        %v2956 = vpop.f32.mrb[0].mxu0
        %2957 = vdwg.mxu0
        %v2958 = vpack.c.bf16 %v2700, %v2697
        %v2959 = vpack.c.bf16 %v2708, %v2705
        %v2960 = vpack.c.bf16 %v2716, %v2713
        %v2961 = vpack.c.bf16 %v2724, %v2721
        %v2962 = vpack.c.bf16 %v2777, %v2774
        %v2963 = vpack.c.bf16 %v2785, %v2782
        %v2964 = vpack.c.bf16 %v2793, %v2790
        %v2965 = vpack.c.bf16 %v2801, %v2798
        %v2966 = vpack.c.bf16 %v2854, %v2851
        %v2967 = vpack.c.bf16 %v2862, %v2859
        %v2968 = vpack.c.bf16 %v2870, %v2867
        %v2969 = vpack.c.bf16 %v2878, %v2875
        %v2970 = vpack.c.bf16 %v2931, %v2928
        %v2971 = vpack.c.bf16 %v2939, %v2936
        %v2972 = vpack.c.bf16 %v2947, %v2944
        %v2973 = vpack.c.bf16 %v2955, %v2952
        %v2974 = vld [vmem:[%s3] sm:$0x1]
        %v2976 = vlaneseq
        %v2977 = vshrl.u32 %v2976, 7
        %v2978 = vsub.s32 0, %v2977
        %v2979 = vrot.slane %v2974, %v2978
        %v2981 = vld [vmem:[%s2] sm:$0xf]
        %v2982 = vld [vmem:[%s2 + $0x4] sm:$0xf]
        %v2983 = vld [vmem:[%s2 + $0x8] sm:$0xf]
        %v2984 = vld [vmem:[%s2 + $0xc] sm:$0xf]
        %v2989 = vunpack.c.l.b16 %v2981
        %v2990 = vunpack.c.l.b16 %v2982
        %v2991 = vunpack.c.l.b16 %v2983
        %v2992 = vunpack.c.l.b16 %v2984
        %v2993 = vpack.c.b16 %v2990, %v2989
        %v2994 = vpack.c.b16 %v2992, %v2991
        %v2998 = vsel %vm1825, %v2958, 0
        %v3001 = vsel %vm1825, %v2959, 0
        %v3004 = vsel %vm1825, %v2960, 0
        %v3007 = vsel %vm1825, %v2961, 0
        %3009 = vmatprep.subr.bf16.mxu0 0
        %3010 = vmatpush1.bf16.msra.mxu0 %v2993
        %3011 = vmatprep.subr.bf16.mxu0 0
        %3012 = vmatpush1.bf16.msra.mxu0 %v2994
        %3013 = vmatprep.subr.bf16.mxu0 0
        %3014 = vmatpush1.bf16.msra.mxu0 0
        %3015 = vmatprep.subr.bf16.mxu0 0
        %3016 = vmatpush1.bf16.msra.mxu0 0
        %3017 = vmatprep.subr.bf16.mxu0 0
        %3018 = vmatpush1.bf16.msra.mxu0 0
        %3019 = vmatprep.subr.bf16.mxu0 0
        %3020 = vmatpush1.bf16.msra.mxu0 0
        %3021 = vmatprep.subr.bf16.mxu0 0
        %3022 = vmatpush1.bf16.msra.mxu0 0
        %3023 = vmatprep.subr.bf16.mxu0 0
        %3024 = vmatpush1.bf16.msra.mxu0 0
        %3025 = vmatprep.subr.bf16.mxu0 0
        %3026 = vmatpush1.bf16.msra.mxu0 0
        %3027 = vmatprep.subr.bf16.mxu0 0
        %3028 = vmatpush1.bf16.msra.mxu0 0
        %3029 = vmatprep.subr.bf16.mxu0 0
        %3030 = vmatpush1.bf16.msra.mxu0 0
        %3031 = vmatprep.subr.bf16.mxu0 0
        %3032 = vmatpush1.bf16.msra.mxu0 0
        %3033 = vmatprep.subr.bf16.mxu0 0
        %3034 = vmatpush1.bf16.msra.mxu0 0
        %3035 = vmatprep.subr.bf16.mxu0 0
        %3036 = vmatpush1.bf16.msra.mxu0 0
        %3037 = vmatprep.subr.bf16.mxu0 0
        %3038 = vmatpush1.bf16.msra.mxu0 0
        %3039 = vmatprep.subr.bf16.mxu0 0
        %3040 = vmatpush1.bf16.msra.mxu0 0
        %3041 = vmatprep.mubr.bf16.mxu0 0
        %3042 = vmatmul.mubr.bf16.gmra.mrb[0].mxu0 %v2998
        %v3043 = vpop.f32.mrb[0].mxu0
        %v3044 = vadd.f32 0.0, %v3043
        %v3045 = vpop.f32.mrb[0].mxu0
        %v3046 = vpop.f32.mrb[0].mxu0
        %v3047 = vadd.f32 0.0, %v3046
        %v3048 = vpop.f32.mrb[0].mxu0
        %3049 = vmatprep.mubr.bf16.mxu0 0
        %3050 = vmatmul.mubr.bf16.gmra.mrb[0].mxu0 %v3001
        %v3051 = vpop.f32.mrb[0].mxu0
        %v3052 = vadd.f32 0.0, %v3051
        %v3053 = vpop.f32.mrb[0].mxu0
        %v3054 = vpop.f32.mrb[0].mxu0
        %v3055 = vadd.f32 0.0, %v3054
        %v3056 = vpop.f32.mrb[0].mxu0
        %3057 = vmatprep.mubr.bf16.mxu0 0
        %3058 = vmatmul.mubr.bf16.gmra.mrb[0].mxu0 %v3004
        %v3059 = vpop.f32.mrb[0].mxu0
        %v3060 = vadd.f32 0.0, %v3059
        %v3061 = vpop.f32.mrb[0].mxu0
        %v3062 = vpop.f32.mrb[0].mxu0
        %v3063 = vadd.f32 0.0, %v3062
        %v3064 = vpop.f32.mrb[0].mxu0
        %3065 = vmatprep.mubr.bf16.mxu0 0
        %3066 = vmatmul.mubr.bf16.gmra.mrb[0].mxu0 %v3007
        %v3067 = vpop.f32.mrb[0].mxu0
        %v3068 = vadd.f32 0.0, %v3067
        %v3069 = vpop.f32.mrb[0].mxu0
        %v3070 = vpop.f32.mrb[0].mxu0
        %v3071 = vadd.f32 0.0, %v3070
        %v3072 = vpop.f32.mrb[0].mxu0
        %3073 = vdwg.mxu0
        %v3074 = vadd.f32 %v2979, %v3044
        %v3075 = vadd.f32 %v2979, %v3047
        %v3076 = vadd.f32 %v2979, %v3052
        %v3077 = vadd.f32 %v2979, %v3055
        %v3078 = vadd.f32 %v2979, %v3060
        %v3079 = vadd.f32 %v2979, %v3063
        %v3080 = vadd.f32 %v2979, %v3068
        %v3081 = vadd.f32 %v2979, %v3071
        %s3082 = scalar_lea.vmem %s2, 16
        %v3083 = vld [vmem:[%s3082] sm:$0xf]
        %v3084 = vld [vmem:[%s3082 + $0x4] sm:$0xf]
        %v3085 = vld [vmem:[%s3082 + $0x8] sm:$0xf]
        %v3086 = vld [vmem:[%s3082 + $0xc] sm:$0xf]
        %v3091 = vunpack.c.l.b16 %v3083
        %v3092 = vunpack.c.l.b16 %v3084
        %v3093 = vunpack.c.l.b16 %v3085
        %v3094 = vunpack.c.l.b16 %v3086
        %v3095 = vpack.c.b16 %v3092, %v3091
        %v3096 = vpack.c.b16 %v3094, %v3093
        %v3100 = vsel %vm1825, %v2962, 0
        %v3103 = vsel %vm1825, %v2963, 0
        %v3106 = vsel %vm1825, %v2964, 0
        %v3109 = vsel %vm1825, %v2965, 0
        %3111 = vmatprep.subr.bf16.mxu0 0
        %3112 = vmatpush1.bf16.msra.mxu0 %v3095
        %3113 = vmatprep.subr.bf16.mxu0 0
        %3114 = vmatpush1.bf16.msra.mxu0 %v3096
        %3115 = vmatprep.subr.bf16.mxu0 0
        %3116 = vmatpush1.bf16.msra.mxu0 0
        %3117 = vmatprep.subr.bf16.mxu0 0
        %3118 = vmatpush1.bf16.msra.mxu0 0
        %3119 = vmatprep.subr.bf16.mxu0 0
        %3120 = vmatpush1.bf16.msra.mxu0 0
        %3121 = vmatprep.subr.bf16.mxu0 0
        %3122 = vmatpush1.bf16.msra.mxu0 0
        %3123 = vmatprep.subr.bf16.mxu0 0
        %3124 = vmatpush1.bf16.msra.mxu0 0
        %3125 = vmatprep.subr.bf16.mxu0 0
        %3126 = vmatpush1.bf16.msra.mxu0 0
        %3127 = vmatprep.subr.bf16.mxu0 0
        %3128 = vmatpush1.bf16.msra.mxu0 0
        %3129 = vmatprep.subr.bf16.mxu0 0
        %3130 = vmatpush1.bf16.msra.mxu0 0
        %3131 = vmatprep.subr.bf16.mxu0 0
        %3132 = vmatpush1.bf16.msra.mxu0 0
        %3133 = vmatprep.subr.bf16.mxu0 0
        %3134 = vmatpush1.bf16.msra.mxu0 0
        %3135 = vmatprep.subr.bf16.mxu0 0
        %3136 = vmatpush1.bf16.msra.mxu0 0
        %3137 = vmatprep.subr.bf16.mxu0 0
        %3138 = vmatpush1.bf16.msra.mxu0 0
        %3139 = vmatprep.subr.bf16.mxu0 0
        %3140 = vmatpush1.bf16.msra.mxu0 0
        %3141 = vmatprep.subr.bf16.mxu0 0
        %3142 = vmatpush1.bf16.msra.mxu0 0
        %3143 = vmatprep.mubr.bf16.mxu0 0
        %3144 = vmatmul.mubr.bf16.gmra.mrb[0].mxu0 %v3100
        %v3145 = vpop.f32.mrb[0].mxu0
        %v3146 = vadd.f32 0.0, %v3145
        %v3147 = vpop.f32.mrb[0].mxu0
        %v3148 = vpop.f32.mrb[0].mxu0
        %v3149 = vadd.f32 0.0, %v3148
        %v3150 = vpop.f32.mrb[0].mxu0
        %3151 = vmatprep.mubr.bf16.mxu0 0
        %3152 = vmatmul.mubr.bf16.gmra.mrb[0].mxu0 %v3103
        %v3153 = vpop.f32.mrb[0].mxu0
        %v3154 = vadd.f32 0.0, %v3153
        %v3155 = vpop.f32.mrb[0].mxu0
        %v3156 = vpop.f32.mrb[0].mxu0
        %v3157 = vadd.f32 0.0, %v3156
        %v3158 = vpop.f32.mrb[0].mxu0
        %3159 = vmatprep.mubr.bf16.mxu0 0
        %3160 = vmatmul.mubr.bf16.gmra.mrb[0].mxu0 %v3106
        %v3161 = vpop.f32.mrb[0].mxu0
        %v3162 = vadd.f32 0.0, %v3161
        %v3163 = vpop.f32.mrb[0].mxu0
        %v3164 = vpop.f32.mrb[0].mxu0
        %v3165 = vadd.f32 0.0, %v3164
        %v3166 = vpop.f32.mrb[0].mxu0
        %3167 = vmatprep.mubr.bf16.mxu0 0
        %3168 = vmatmul.mubr.bf16.gmra.mrb[0].mxu0 %v3109
        %v3169 = vpop.f32.mrb[0].mxu0
        %v3170 = vadd.f32 0.0, %v3169
        %v3171 = vpop.f32.mrb[0].mxu0
        %v3172 = vpop.f32.mrb[0].mxu0
        %v3173 = vadd.f32 0.0, %v3172
        %v3174 = vpop.f32.mrb[0].mxu0
        %3175 = vdwg.mxu0
        %v3176 = vadd.f32 %v3074, %v3146
        %v3177 = vadd.f32 %v3075, %v3149
        %v3178 = vadd.f32 %v3076, %v3154
        %v3179 = vadd.f32 %v3077, %v3157
        %v3180 = vadd.f32 %v3078, %v3162
        %v3181 = vadd.f32 %v3079, %v3165
        %v3182 = vadd.f32 %v3080, %v3170
        %v3183 = vadd.f32 %v3081, %v3173
        %s3184 = scalar_lea.vmem %s2, 32
        %v3185 = vld [vmem:[%s3184] sm:$0xf]
        %v3186 = vld [vmem:[%s3184 + $0x4] sm:$0xf]
        %v3187 = vld [vmem:[%s3184 + $0x8] sm:$0xf]
        %v3188 = vld [vmem:[%s3184 + $0xc] sm:$0xf]
        %v3193 = vunpack.c.l.b16 %v3185
        %v3194 = vunpack.c.l.b16 %v3186
        %v3195 = vunpack.c.l.b16 %v3187
        %v3196 = vunpack.c.l.b16 %v3188
        %v3197 = vpack.c.b16 %v3194, %v3193
        %v3198 = vpack.c.b16 %v3196, %v3195
        %v3202 = vsel %vm1825, %v2966, 0
        %v3205 = vsel %vm1825, %v2967, 0
        %v3208 = vsel %vm1825, %v2968, 0
        %v3211 = vsel %vm1825, %v2969, 0
        %3213 = vmatprep.subr.bf16.mxu0 0
        %3214 = vmatpush1.bf16.msra.mxu0 %v3197
        %3215 = vmatprep.subr.bf16.mxu0 0
        %3216 = vmatpush1.bf16.msra.mxu0 %v3198
        %3217 = vmatprep.subr.bf16.mxu0 0
        %3218 = vmatpush1.bf16.msra.mxu0 0
        %3219 = vmatprep.subr.bf16.mxu0 0
        %3220 = vmatpush1.bf16.msra.mxu0 0
        %3221 = vmatprep.subr.bf16.mxu0 0
        %3222 = vmatpush1.bf16.msra.mxu0 0
        %3223 = vmatprep.subr.bf16.mxu0 0
        %3224 = vmatpush1.bf16.msra.mxu0 0
        %3225 = vmatprep.subr.bf16.mxu0 0
        %3226 = vmatpush1.bf16.msra.mxu0 0
        %3227 = vmatprep.subr.bf16.mxu0 0
        %3228 = vmatpush1.bf16.msra.mxu0 0
        %3229 = vmatprep.subr.bf16.mxu0 0
        %3230 = vmatpush1.bf16.msra.mxu0 0
        %3231 = vmatprep.subr.bf16.mxu0 0
        %3232 = vmatpush1.bf16.msra.mxu0 0
        %3233 = vmatprep.subr.bf16.mxu0 0
        %3234 = vmatpush1.bf16.msra.mxu0 0
        %3235 = vmatprep.subr.bf16.mxu0 0
        %3236 = vmatpush1.bf16.msra.mxu0 0
        %3237 = vmatprep.subr.bf16.mxu0 0
        %3238 = vmatpush1.bf16.msra.mxu0 0
        %3239 = vmatprep.subr.bf16.mxu0 0
        %3240 = vmatpush1.bf16.msra.mxu0 0
        %3241 = vmatprep.subr.bf16.mxu0 0
        %3242 = vmatpush1.bf16.msra.mxu0 0
        %3243 = vmatprep.subr.bf16.mxu0 0
        %3244 = vmatpush1.bf16.msra.mxu0 0
        %3245 = vmatprep.mubr.bf16.mxu0 0
        %3246 = vmatmul.mubr.bf16.gmra.mrb[0].mxu0 %v3202
        %v3247 = vpop.f32.mrb[0].mxu0
        %v3248 = vadd.f32 0.0, %v3247
        %v3249 = vpop.f32.mrb[0].mxu0
        %v3250 = vpop.f32.mrb[0].mxu0
        %v3251 = vadd.f32 0.0, %v3250
        %v3252 = vpop.f32.mrb[0].mxu0
        %3253 = vmatprep.mubr.bf16.mxu0 0
        %3254 = vmatmul.mubr.bf16.gmra.mrb[0].mxu0 %v3205
        %v3255 = vpop.f32.mrb[0].mxu0
        %v3256 = vadd.f32 0.0, %v3255
        %v3257 = vpop.f32.mrb[0].mxu0
        %v3258 = vpop.f32.mrb[0].mxu0
        %v3259 = vadd.f32 0.0, %v3258
        %v3260 = vpop.f32.mrb[0].mxu0
        %3261 = vmatprep.mubr.bf16.mxu0 0
        %3262 = vmatmul.mubr.bf16.gmra.mrb[0].mxu0 %v3208
        %v3263 = vpop.f32.mrb[0].mxu0
        %v3264 = vadd.f32 0.0, %v3263
        %v3265 = vpop.f32.mrb[0].mxu0
        %v3266 = vpop.f32.mrb[0].mxu0
        %v3267 = vadd.f32 0.0, %v3266
        %v3268 = vpop.f32.mrb[0].mxu0
        %3269 = vmatprep.mubr.bf16.mxu0 0
        %3270 = vmatmul.mubr.bf16.gmra.mrb[0].mxu0 %v3211
        %v3271 = vpop.f32.mrb[0].mxu0
        %v3272 = vadd.f32 0.0, %v3271
        %v3273 = vpop.f32.mrb[0].mxu0
        %v3274 = vpop.f32.mrb[0].mxu0
        %v3275 = vadd.f32 0.0, %v3274
        %v3276 = vpop.f32.mrb[0].mxu0
        %3277 = vdwg.mxu0
        %v3278 = vadd.f32 %v3176, %v3248
        %v3279 = vadd.f32 %v3177, %v3251
        %v3280 = vadd.f32 %v3178, %v3256
        %v3281 = vadd.f32 %v3179, %v3259
        %v3282 = vadd.f32 %v3180, %v3264
        %v3283 = vadd.f32 %v3181, %v3267
        %v3284 = vadd.f32 %v3182, %v3272
        %v3285 = vadd.f32 %v3183, %v3275
        %s3286 = scalar_lea.vmem %s2, 48
        %v3287 = vld [vmem:[%s3286] sm:$0xf]
        %v3288 = vld [vmem:[%s3286 + $0x4] sm:$0xf]
        %v3289 = vld [vmem:[%s3286 + $0x8] sm:$0xf]
        %v3290 = vld [vmem:[%s3286 + $0xc] sm:$0xf]
        %v3295 = vunpack.c.l.b16 %v3287
        %v3296 = vunpack.c.l.b16 %v3288
        %v3297 = vunpack.c.l.b16 %v3289
        %v3298 = vunpack.c.l.b16 %v3290
        %v3299 = vpack.c.b16 %v3296, %v3295
        %v3300 = vpack.c.b16 %v3298, %v3297
        %v3304 = vsel %vm1825, %v2970, 0
        %v3307 = vsel %vm1825, %v2971, 0
        %v3310 = vsel %vm1825, %v2972, 0
        %v3313 = vsel %vm1825, %v2973, 0
        %3315 = vmatprep.subr.bf16.mxu0 0
        %3316 = vmatpush1.bf16.msra.mxu0 %v3299
        %3317 = vmatprep.subr.bf16.mxu0 0
        %3318 = vmatpush1.bf16.msra.mxu0 %v3300
        %3319 = vmatprep.subr.bf16.mxu0 0
        %3320 = vmatpush1.bf16.msra.mxu0 0
        %3321 = vmatprep.subr.bf16.mxu0 0
        %3322 = vmatpush1.bf16.msra.mxu0 0
        %3323 = vmatprep.subr.bf16.mxu0 0
        %3324 = vmatpush1.bf16.msra.mxu0 0
        %3325 = vmatprep.subr.bf16.mxu0 0
        %3326 = vmatpush1.bf16.msra.mxu0 0
        %3327 = vmatprep.subr.bf16.mxu0 0
        %3328 = vmatpush1.bf16.msra.mxu0 0
        %3329 = vmatprep.subr.bf16.mxu0 0
        %3330 = vmatpush1.bf16.msra.mxu0 0
        %3331 = vmatprep.subr.bf16.mxu0 0
        %3332 = vmatpush1.bf16.msra.mxu0 0
        %3333 = vmatprep.subr.bf16.mxu0 0
        %3334 = vmatpush1.bf16.msra.mxu0 0
        %3335 = vmatprep.subr.bf16.mxu0 0
        %3336 = vmatpush1.bf16.msra.mxu0 0
        %3337 = vmatprep.subr.bf16.mxu0 0
        %3338 = vmatpush1.bf16.msra.mxu0 0
        %3339 = vmatprep.subr.bf16.mxu0 0
        %3340 = vmatpush1.bf16.msra.mxu0 0
        %3341 = vmatprep.subr.bf16.mxu0 0
        %3342 = vmatpush1.bf16.msra.mxu0 0
        %3343 = vmatprep.subr.bf16.mxu0 0
        %3344 = vmatpush1.bf16.msra.mxu0 0
        %3345 = vmatprep.subr.bf16.mxu0 0
        %3346 = vmatpush1.bf16.msra.mxu0 0
        %3347 = vmatprep.mubr.bf16.mxu0 0
        %3348 = vmatmul.mubr.bf16.gmra.mrb[0].mxu0 %v3304
        %v3349 = vpop.f32.mrb[0].mxu0
        %v3350 = vadd.f32 0.0, %v3349
        %v3351 = vpop.f32.mrb[0].mxu0
        %v3352 = vpop.f32.mrb[0].mxu0
        %v3353 = vadd.f32 0.0, %v3352
        %v3354 = vpop.f32.mrb[0].mxu0
        %3355 = vmatprep.mubr.bf16.mxu0 0
        %3356 = vmatmul.mubr.bf16.gmra.mrb[0].mxu0 %v3307
        %v3357 = vpop.f32.mrb[0].mxu0
        %v3358 = vadd.f32 0.0, %v3357
        %v3359 = vpop.f32.mrb[0].mxu0
        %v3360 = vpop.f32.mrb[0].mxu0
        %v3361 = vadd.f32 0.0, %v3360
        %v3362 = vpop.f32.mrb[0].mxu0
        %3363 = vmatprep.mubr.bf16.mxu0 0
        %3364 = vmatmul.mubr.bf16.gmra.mrb[0].mxu0 %v3310
        %v3365 = vpop.f32.mrb[0].mxu0
        %v3366 = vadd.f32 0.0, %v3365
        %v3367 = vpop.f32.mrb[0].mxu0
        %v3368 = vpop.f32.mrb[0].mxu0
        %v3369 = vadd.f32 0.0, %v3368
        %v3370 = vpop.f32.mrb[0].mxu0
        %3371 = vmatprep.mubr.bf16.mxu0 0
        %3372 = vmatmul.mubr.bf16.gmra.mrb[0].mxu0 %v3313
        %v3373 = vpop.f32.mrb[0].mxu0
        %v3374 = vadd.f32 0.0, %v3373
        %v3375 = vpop.f32.mrb[0].mxu0
        %v3376 = vpop.f32.mrb[0].mxu0
        %v3377 = vadd.f32 0.0, %v3376
        %v3378 = vpop.f32.mrb[0].mxu0
        %3379 = vdwg.mxu0
        %v3380 = vadd.f32 %v3278, %v3350
        %v3381 = vadd.f32 %v3279, %v3353
        %v3382 = vadd.f32 %v3280, %v3358
        %v3383 = vadd.f32 %v3281, %v3361
        %v3384 = vadd.f32 %v3282, %v3366
        %v3385 = vadd.f32 %v3283, %v3369
        %v3386 = vadd.f32 %v3284, %v3374
        %v3387 = vadd.f32 %v3285, %v3377
        %3388 = vst [vmem:[%s190] sm:$0xff] %v3380
        %3389 = vst [vmem:[%s190 + $0x8] sm:$0xff] %v3381
        %3390 = vst [vmem:[%s190 + $0x10] sm:$0xff] %v3382
        %3391 = vst [vmem:[%s190 + $0x18] sm:$0xff] %v3383
        %3392 = vst [vmem:[%s190 + $0x20] sm:$0xff] %v3384
        %3393 = vst [vmem:[%s190 + $0x28] sm:$0xff] %v3385
        %3394 = vst [vmem:[%s190 + $0x30] sm:$0xff] %v3386
        %3395 = vst [vmem:[%s190 + $0x38] sm:$0xff] %v3387
        %s3396 = sand.u32 %s115, 1
        %s3397 = scalar_lea.sflag [#allocation3], %s3396
        %s3398 = sand.u32 %s115, 1
        %s3399 = smul.addr %s3398, 64
        %s3400 = scalar_lea.vmem [#allocation2], %s3399
        // Predicated region
        $region37: #{tpu_custom_call.1} parent=35 // pred_check
          %p3401 = pneg %p125
        $region38: #{tpu_custom_call.1} parent=35 // pred_check_branch
          %3403 = sbr.rel (%p3401) target = $region40
        $region39: #{tpu_custom_call.1} parent=35 // pred_region
          %s3405 = ssub.s32 1024, 1024
          %3406 = vsyncadd %s3397, %s3405
          %s3407 = smul.addr %s18, 8
          %s3408 = smul.addr %s3407, 128
          %s3409 = scalar_lea.hbm %s4, %s3408
          %s3410 = sshll.u32 %s3400, 4
          %s3411 = int_to_ptr.vmem [resolvable:$true] %s3410
          %3416 = dma.vmem_to_hbm [thread:$0]  %s3411, 1024, %s3409, %s3397, 128, 128, 8
        $region40: #{tpu_custom_call.1} parent=35 // pred_fallthru
          _
      $region36: #{tpu_custom_call.1} parent=5 // pred_fallthru
        _
      %p3417 = scmp.le.s32.totalorder 2, %s13
      // Predicated region
      $region41: #{tpu_custom_call.1} parent=5 // pred_check
        %p3418 = pneg %p3417
      $region42: #{tpu_custom_call.1} parent=5 // pred_check_branch
        %3420 = sbr.rel (%p3418) target = $region44
      $region43: #{tpu_custom_call.1} parent=5 // pred_region
        %s3421 = ssub.s32 %s13, 2
        // Predicated region
        $region45: #{tpu_custom_call.1} parent=43 // pred_check
          %p3422 = pneg %p131
        $region46: #{tpu_custom_call.1} parent=43 // pred_check_branch
          %3424 = sbr.rel (%p3422) target = $region48
        $region47: #{tpu_custom_call.1} parent=43 // pred_region
          %s3425 = sand.u32 %s116, 1
          %s3426 = scalar_lea.sflag [#allocation3], %s3425
          %s3427 = sand.u32 %s116, 1
          %s3428 = smul.addr %s3427, 64
          %s3429 = scalar_lea.vmem [#allocation2], %s3428
          %3430 = dma.done %s3426, 1024
        $region48: #{tpu_custom_call.1} parent=43 // pred_fallthru
          _
      $region44: #{tpu_custom_call.1} parent=5 // pred_fallthru
        _
    $region6: #{tpu_custom_call.1} parent=1 // loop_footer
      %s17 = sadd.s32 1, %s13
    $region7: #{tpu_custom_call.1} parent=1 // loop_footer_branch
      %12 = sbr.rel target = $region3
    $region8: #{tpu_custom_call.1} parent=1 // loop_exit
      _
    %3431 = vsyncpa [#allocation3], 1
    %s3432 = scalar_lea.sflag [#allocation3], 1
    %3433 = vsyncpa %s3432, 1

</llo_original>
